<compile_context>
chip_gen: v6e
topology: v6e:2x2x1
jax: 0.10.0
libtpu: 0.0.40
codegen_flags: <defaults>
</compile_context>

<pallas_src>
import math

import jax
import jax.numpy as jnp
from jax import lax
from jax.experimental import pallas as pl
from jax.experimental.pallas import tpu as pltpu


def _linear_kernel(x_ref, w_ref, b_ref, o_ref):
    # Grid axis 0 iterates over K tiles (reduction axis). The output block
    # index is constant across this axis, so o_ref stays resident in VMEM
    # and serves directly as the f32 accumulator.
    k = pl.program_id(0)

    @pl.when(k == 0)
    def _():
        # Initialize the accumulator with the bias (epilogue-free finish).
        o_ref[...] = jnp.broadcast_to(b_ref[...], o_ref.shape)

    # x tile: (B, tk); w tile: (N, tk) in native PyTorch layout.
    # Contract on the K (lane) axis of both -> (B, N) partial product.
    o_ref[...] += lax.dot_general(
        x_ref[...],
        w_ref[...],
        dimension_numbers=(((1,), (1,)), ((), ())),
        preferred_element_type=jnp.float32,
    )


def frontend_forward(x, weight, bias, *, tk=9216):
    """Pallas implementation of Frontend.forward.

    x      : (B, C, H, W)            float32  (NCHW, like PyTorch)
    weight : (num_classes, 18432)    float32  (native PyTorch Linear layout)
    bias   : (num_classes,)          float32
    returns: (B, num_classes)        float32
    """
    B = x.shape[0]
    x_flat = x.reshape(B, -1)                    # nn.Flatten (C-order, same as torch)
    K = x_flat.shape[1]
    N = weight.shape[0]
    assert weight.shape[1] == K, (weight.shape, K)

    # Prefer a coarse K tiling (few grid steps). Fall back to fully-resident
    # K if tk does not divide K.
    if K % tk != 0:
        tk = K
    grid = (K // tk,)

    b2d = bias.reshape(1, N)                     # (1, N), resident across grid

    return pl.pallas_call(
        _linear_kernel,
        out_shape=jax.ShapeDtypeStruct((B, N), jnp.float32),
        grid_spec=pltpu.PrefetchScalarGridSpec(
            num_scalar_prefetch=0,
            grid=grid,
            in_specs=[
                pl.BlockSpec((B, tk), lambda k: (0, k)),   # x tile over K
                pl.BlockSpec((N, tk), lambda k: (0, k)),   # weight tile over K (no transpose)
                pl.BlockSpec((1, N), lambda k: (0, 0)),    # bias (resident)
            ],
            out_specs=pl.BlockSpec((B, N), lambda k: (0, 0)),  # resident accumulator
        ),
        compiler_params=pltpu.CompilerParams(
            dimension_semantics=("arbitrary",),   # K is a reduction axis
        ),
    )(x_flat, weight, b2d)


if __name__ == "__main__":
    num_classes = 100
    # in_features = 18432 = 512 * 6 * 6  (implied by the Linear layer)
    B, C, H, W = 2, 512, 6, 6
    in_features = C * H * W
    assert in_features == 18432

    key = jax.random.PRNGKey(0)
    kx, kw, kb = jax.random.split(key, 3)

    # Deterministic "PyTorch-like" init: U(-1/sqrt(fan_in), 1/sqrt(fan_in))
    bound = 1.0 / math.sqrt(in_features)
    x = jax.random.normal(kx, (B, C, H, W), dtype=jnp.float32)
    weight = jax.random.uniform(
        kw, (num_classes, in_features), minval=-bound, maxval=bound,
        dtype=jnp.float32,
    )
    bias = jax.random.uniform(
        kb, (num_classes,), minval=-bound, maxval=bound, dtype=jnp.float32
    )

    y = frontend_forward(x, weight, bias)
    y = jax.block_until_ready(y)

    # Reference check against plain JAX (same math as torch's F.linear).
    y_ref = x.reshape(B, -1) @ weight.T + bias
    assert y.shape == (B, num_classes)
    assert jnp.allclose(y, y_ref, atol=1e-4, rtol=1e-4)

    print("KERNEL_OK")
</pallas_src>

<mosaic_0001>
module attributes {stable_mosaic.version = 11 : i64} {
  func.func @_linear_kernel(%arg0: i32, %arg1: memref<2x9216xf32, #tpu.memory_space<vmem>>, %arg2: memref<100x9216xf32, #tpu.memory_space<vmem>>, %arg3: memref<1x100xf32, #tpu.memory_space<vmem>>, %arg4: memref<2x100xf32, #tpu.memory_space<vmem>>) attributes {dimension_semantics = [#tpu.dimension_semantics<arbitrary>], iteration_bounds = array<i64: 2>, scalar_prefetch = 0 : i64, scratch_operands = 0 : i64, tpu.core_type = #tpu.core_type<tc>, window_params = [{transform_indices = @transform_0, window_bounds = array<i64: 2, 9216>}, {transform_indices = @transform_1, window_bounds = array<i64: 100, 9216>}, {pipeline_mode = #tpu.pipeline_mode<synchronous>, transform_indices = @transform_2, window_bounds = array<i64: 1, 100>}, {pipeline_mode = #tpu.pipeline_mode<synchronous>, transform_indices = @transform_3, window_bounds = array<i64: 2, 100>}]} {
    %c0_i32 = arith.constant 0 : i32
    %0 = arith.cmpi eq, %arg0, %c0_i32 : i32
    %1 = arith.extui %0 : i1 to i32
    %c0_i32_0 = arith.constant 0 : i32
    %2 = arith.cmpi ne, %1, %c0_i32_0 : i32
    scf.if %2 {
      %c0_8 = arith.constant 0 : index
      %c0_9 = arith.constant 0 : index
      %9 = vector.load %arg3[%c0_8, %c0_9] : memref<1x100xf32, #tpu.memory_space<vmem>>, vector<1x100xf32>
      %10 = vector.shape_cast %9 : vector<1x100xf32> to vector<1x100xf32>
      %11 = vector.broadcast %10 : vector<1x100xf32> to vector<2x100xf32>
      %c0_10 = arith.constant 0 : index
      %c0_11 = arith.constant 0 : index
      %12 = vector.load %arg4[%c0_10, %c0_11] : memref<2x100xf32, #tpu.memory_space<vmem>>, vector<2x100xf32>
      tpu.vector_store %arg4[%c0_10, %c0_11], %11 {strides = array<i32>} : memref<2x100xf32, #tpu.memory_space<vmem>>, vector<2x100xf32>,
    } else {
    }
    %c0 = arith.constant 0 : index
    %c0_1 = arith.constant 0 : index
    %3 = vector.load %arg4[%c0, %c0_1] : memref<2x100xf32, #tpu.memory_space<vmem>>, vector<2x100xf32>
    %c0_2 = arith.constant 0 : index
    %c0_3 = arith.constant 0 : index
    %4 = vector.load %arg1[%c0_2, %c0_3] : memref<2x9216xf32, #tpu.memory_space<vmem>>, vector<2x9216xf32>
    %c0_4 = arith.constant 0 : index
    %c0_5 = arith.constant 0 : index
    %5 = vector.load %arg2[%c0_4, %c0_5] : memref<100x9216xf32, #tpu.memory_space<vmem>>, vector<100x9216xf32>
    %cst = arith.constant dense<0.000000e+00> : vector<2x100xf32>
    %6 = tpu.matmul %4, %5, %cst {dimension_numbers = #tpu.dot_dimension_numbers<[1], [1], [0], [0], [0, 0, 1, 0], [], []>} : vector<2x9216xf32>, vector<100x9216xf32>, vector<2x100xf32> -> vector<2x100xf32>
    %7 = arith.addf %3, %6 : vector<2x100xf32>
    %c0_6 = arith.constant 0 : index
    %c0_7 = arith.constant 0 : index
    %8 = vector.load %arg4[%c0_6, %c0_7] : memref<2x100xf32, #tpu.memory_space<vmem>>, vector<2x100xf32>
    tpu.vector_store %arg4[%c0_6, %c0_7], %7 {strides = array<i32>} : memref<2x100xf32, #tpu.memory_space<vmem>>, vector<2x100xf32>,
    return
  }
  func.func @transform_0(%arg0: i32) -> (i32, i32) {
    %c0_i32 = arith.constant 0 : i32
    %c0_i32_0 = arith.constant 0 : i32
    return %c0_i32, %arg0 : i32, i32
  }
  func.func @transform_1(%arg0: i32) -> (i32, i32) {
    %c0_i32 = arith.constant 0 : i32
    %c0_i32_0 = arith.constant 0 : i32
    return %c0_i32, %arg0 : i32, i32
  }
  func.func @transform_2(%arg0: i32) -> (i32, i32) {
    %c0_i32 = arith.constant 0 : i32
    %c0_i32_0 = arith.constant 0 : i32
    %c0_i32_1 = arith.constant 0 : i32
    return %c0_i32, %c0_i32_0 : i32, i32
  }
  func.func @transform_3(%arg0: i32) -> (i32, i32) {
    %c0_i32 = arith.constant 0 : i32
    %c0_i32_0 = arith.constant 0 : i32
    %c0_i32_1 = arith.constant 0 : i32
    return %c0_i32, %c0_i32_0 : i32, i32
  }
}

</mosaic_0001>

<llo_original>
// kernel: tpu_custom_call.1
$region0: #{tpu_custom_call.1}
  #allocation0 [shape = 'u32[]', space=smem, size = 0x4, offset = 0x4, fixed_abs, tag = 'smem constant byte address 0x4 - core index']
  #allocation1 [shape = 'u32[144,128]{1,0:T(1,128)}', space=vmem, size = 0x12000, scoped, tag = 'internal scratch']
  %s0 = inlined_call_operand.hbm [shape: f32[2,18432], index: 0, kind: input, shape index: {}]
  %s1 = inlined_call_operand.hbm [shape: f32[100,18432], index: 1, kind: input, shape index: {}]
  %s2 = inlined_call_operand.hbm [shape: f32[1,100], index: 2, kind: input, shape index: {}]
  %s3 = inlined_call_operand.hbm [shape: f32[2,100], index: 3, kind: output, shape index: {}]
  %s4 = sld [smem:[#allocation0]]
  $region61: #{tpu_custom_call.1} parent=0
    _
  %s6 = ssub.s32 1, %s4
  %s7 = scalar_select 0, %s6, %s4
  $region1: #{tpu_custom_call.1} parent=0
    #allocation2 [shape = 'u8[147456]{0}', space=vmem, size = 0x24000, scoped, tag = 'input window, operand 0']
    #allocation3 [shape = 's32[2]{0}', space=sflag, size = 0x8, scoped, tag = 'scoped memory for tpu_custom_call.1']
    #allocation4 [shape = 's32[2]{0}', space=sflag, size = 0x8, scoped, tag = 'scoped memory for tpu_custom_call.1']
    #allocation5 [shape = 'u8[7667712]{0}', space=vmem, size = 0x750000, scoped, tag = 'input window, operand 1']
    #allocation6 [shape = 's32[2]{0}', space=sflag, size = 0x8, scoped, tag = 'scoped memory for tpu_custom_call.1']
    #allocation7 [shape = 'u8[512]{0}', space=vmem, size = 0x400, scoped, tag = 'input window, operand 2, single buffered']
    #allocation8 [shape = 'u8[1024]{0}', space=vmem, size = 0x400, scoped, tag = 'output window, operand 0, single buffered']
    %8 = vsyncpa [#allocation3], 0
    %s9 = scalar_lea.sflag [#allocation3], 1
    %10 = vsyncpa %s9, 0
    %11 = vsyncpa [#allocation6], 0
    %s12 = scalar_lea.sflag [#allocation6], 1
    %13 = vsyncpa %s12, 0
    %14 = vsyncpa [#allocation4], 0
    loop: start=0, step=1, limit=4
    $region2: #{tpu_custom_call.1} parent=1 // loop_pre_header
      _
    $region3: #{tpu_custom_call.1} parent=1 // loop_header
      %s16 = sphi 0, %s20
      %p17 = scmp.ge.s32.totalorder %s16, 4
      %s26 = sphi 0, %s28
      %s29 = sphi 0, %s26
      %s30 = sphi 0, %s29
      %s46 = sphi 0, %s30
      %s52 = sphi 0, %s54
      %s55 = sphi 0, %s52
      %s56 = sphi 0, %s55
      %s72 = sphi 0, %s56
      %s76 = sphi 0, %s76
      %s78 = sphi 0, %s76
      %s79 = sphi 0, %s78
      %s93 = sphi 0, %s79
      %s97 = sphi 0, %s97
      %s99 = sphi 0, %s97
      %s100 = sphi 0, %s99
      %s114 = sphi 0, %s100
    $region4: #{tpu_custom_call.1} parent=1 // loop_header_branch
      %19 = sbr.rel (%p17) target = $region8
    $region5: #{tpu_custom_call.1} parent=1 // loop_body
      %s21 = ssub.s32 %s16, 1
      %s22 = ssub.s32 %s16, 2
      %s23 = sadd.s32 %s16, 1
      %s24 = ssub.s32 %s16, %s23
      %p25 = scmp.eq.s32.totalorder %s24, 0
      %s27 = sadd.s32 %s26, 1
      %s28 = scalar_select %p25, %s26, %s27
      %p31 = pneg %p25
      %p32 = scmp.eq.s32.totalorder %s16, 1
      %p33 = por %p31, %p32
      %p34 = scmp.ne.s32.totalorder %s26, %s29
      %p35 = scmp.eq.s32.totalorder %s16, 0
      %p36 = por %p34, %p35
      %p37 = scmp.ne.s32.totalorder %s26, %s29
      %p38 = scmp.eq.s32.totalorder %s21, 1
      %p39 = por %p37, %p38
      %p40 = scmp.ne.s32.totalorder %s29, %s30
      %p41 = scmp.eq.s32.totalorder %s21, 0
      %p42 = por %p40, %p41
      %p43 = scmp.ne.s32.totalorder %s29, %s30
      %p44 = scmp.eq.s32.totalorder %s22, 1
      %p45 = por %p43, %p44
      %p47 = scmp.ne.s32.totalorder %s30, %s46
      %p48 = scmp.eq.s32.totalorder %s22, 0
      %p49 = por %p47, %p48
      %s50 = ssub.s32 %s16, %s23
      %p51 = scmp.eq.s32.totalorder %s50, 0
      %s53 = sadd.s32 %s52, 1
      %s54 = scalar_select %p51, %s52, %s53
      %p57 = pneg %p51
      %p58 = scmp.eq.s32.totalorder %s16, 1
      %p59 = por %p57, %p58
      %p60 = scmp.ne.s32.totalorder %s52, %s55
      %p61 = scmp.eq.s32.totalorder %s16, 0
      %p62 = por %p60, %p61
      %p63 = scmp.ne.s32.totalorder %s52, %s55
      %p64 = scmp.eq.s32.totalorder %s21, 1
      %p65 = por %p63, %p64
      %p66 = scmp.ne.s32.totalorder %s55, %s56
      %p67 = scmp.eq.s32.totalorder %s21, 0
      %p68 = por %p66, %p67
      %p69 = scmp.ne.s32.totalorder %s55, %s56
      %p70 = scmp.eq.s32.totalorder %s22, 1
      %p71 = por %p69, %p70
      %p73 = scmp.ne.s32.totalorder %s56, %s72
      %p74 = scmp.eq.s32.totalorder %s22, 0
      %p75 = por %p73, %p74
      %s77 = sadd.s32 %s76, 1
      %p80 = scmp.eq.s32.totalorder %s16, 1
      %p81 = scmp.ne.s32.totalorder %s76, %s78
      %p82 = scmp.eq.s32.totalorder %s16, 0
      %p83 = por %p81, %p82
      %p84 = scmp.ne.s32.totalorder %s76, %s78
      %p85 = scmp.eq.s32.totalorder %s21, 1
      %p86 = por %p84, %p85
      %p87 = scmp.ne.s32.totalorder %s78, %s79
      %p88 = scmp.eq.s32.totalorder %s21, 0
      %p89 = por %p87, %p88
      %p90 = scmp.ne.s32.totalorder %s78, %s79
      %p91 = scmp.eq.s32.totalorder %s22, 1
      %p92 = por %p90, %p91
      %p94 = scmp.ne.s32.totalorder %s79, %s93
      %p95 = scmp.eq.s32.totalorder %s22, 0
      %p96 = por %p94, %p95
      %s98 = sadd.s32 %s97, 1
      %p101 = scmp.eq.s32.totalorder %s16, 1
      %p102 = scmp.ne.s32.totalorder %s97, %s99
      %p103 = scmp.eq.s32.totalorder %s16, 0
      %p104 = por %p102, %p103
      %p105 = scmp.ne.s32.totalorder %s97, %s99
      %p106 = scmp.eq.s32.totalorder %s21, 1
      %p107 = por %p105, %p106
      %p108 = scmp.ne.s32.totalorder %s99, %s100
      %p109 = scmp.eq.s32.totalorder %s21, 0
      %p110 = por %p108, %p109
      %p111 = scmp.ne.s32.totalorder %s99, %s100
      %p112 = scmp.eq.s32.totalorder %s22, 1
      %p113 = por %p111, %p112
      %p115 = scmp.ne.s32.totalorder %s100, %s114
      %p116 = scmp.eq.s32.totalorder %s22, 0
      %p117 = por %p115, %p116
      %p118 = scmp.le.s32.totalorder 1, %s16
      %p119 = scmp.lt.s32.totalorder %s16, 3
      %p120 = pnand %p118, %p119
      %p121 = pneg %p120
      // Predicated region
      $region9: #{tpu_custom_call.1} parent=5 // pred_check
        _
      $region10: #{tpu_custom_call.1} parent=5 // pred_check_branch
        %123 = sbr.rel (%p120) target = $region12
      $region11: #{tpu_custom_call.1} parent=5 // pred_region
        %s124 = ssub.s32 %s16, 1
        // Predicated region
        $region13: #{tpu_custom_call.1} parent=11 // pred_check
          %p125 = pneg %p89
        $region14: #{tpu_custom_call.1} parent=11 // pred_check_branch
          %127 = sbr.rel (%p125) target = $region16
        $region15: #{tpu_custom_call.1} parent=11 // pred_region
          %s129 = ssub.s32 16, 16
          %130 = vsyncadd [#allocation6], %s129
          %s132 = sshll.u32 [#allocation7], 4
          %s133 = int_to_ptr.vmem [resolvable:$true] %s132
          %135 = dma.hbm_to_vmem [thread:$0]  %s2, 16, %s133, [#allocation6]
        $region16: #{tpu_custom_call.1} parent=11 // pred_fallthru
          _
      $region12: #{tpu_custom_call.1} parent=5 // pred_fallthru
        _
      %p136 = scmp.lt.s32.totalorder %s16, 2
      // Predicated region
      $region17: #{tpu_custom_call.1} parent=5 // pred_check
        %p137 = pneg %p136
      $region18: #{tpu_custom_call.1} parent=5 // pred_check_branch
        %139 = sbr.rel (%p137) target = $region20
      $region19: #{tpu_custom_call.1} parent=5 // pred_region
        // Predicated region
        $region21: #{tpu_custom_call.1} parent=19 // pred_check
          %p140 = pneg %p36
        $region22: #{tpu_custom_call.1} parent=19 // pred_check_branch
          %142 = sbr.rel (%p140) target = $region24
        $region23: #{tpu_custom_call.1} parent=19 // pred_region
          %s143 = sand.u32 %s26, 1
          %s144 = scalar_lea.sflag [#allocation3], %s143
          %s145 = sand.u32 %s26, 1
          %s146 = smul.addr %s145, 144
          %s147 = scalar_lea.vmem [#allocation2], %s146
          %s148 = smul.u32 72, %s16
          %s150 = ssub.s32 2304, 2304
          %151 = vsyncadd %s144, %s150
          %s152 = smul.addr %s148, 32
          %s153 = scalar_lea.hbm %s0, %s152
          %s155 = sshll.u32 %s147, 4
          %s156 = int_to_ptr.vmem [resolvable:$true] %s155
          %158 = dma.hbm_to_vmem [thread:$0]  %s153, 2304, %s156, %s144
        $region24: #{tpu_custom_call.1} parent=19 // pred_fallthru
          _
        // Predicated region
        $region25: #{tpu_custom_call.1} parent=19 // pred_check
          %p159 = pneg %p62
        $region26: #{tpu_custom_call.1} parent=19 // pred_check_branch
          %161 = sbr.rel (%p159) target = $region28
        $region27: #{tpu_custom_call.1} parent=19 // pred_region
          %s162 = sand.u32 %s16, 1
          %s163 = scalar_lea.sflag [#allocation6], %s162
          %s164 = sand.u32 %s52, 1
          %s165 = smul.addr %s164, 7488
          %s166 = scalar_lea.vmem [#allocation5], %s165
          %s167 = smul.u32 72, %s16
          %s169 = ssub.s32 119808, 119808
          %170 = vsyncadd %s163, %s169
          %s171 = smul.addr %s167, 128
          %s172 = scalar_lea.hbm %s1, %s171
          %s173 = sshll.u32 %s166, 4
          %s174 = int_to_ptr.vmem [resolvable:$true] %s173
          %179 = dma.hbm_to_vmem [thread:$0]  %s172, 119808, %s174, %s163, 18432, 9216, 576
        $region28: #{tpu_custom_call.1} parent=19 // pred_fallthru
          _
      $region20: #{tpu_custom_call.1} parent=5 // pred_fallthru
        _
      %p180 = scmp.le.s32.totalorder 1, %s16
      %p181 = scmp.lt.s32.totalorder %s16, 3
      %p182 = pnand %p180, %p181
      %p183 = pneg %p182
      // Predicated region
      $region29: #{tpu_custom_call.1} parent=5 // pred_check
        _
      $region30: #{tpu_custom_call.1} parent=5 // pred_check_branch
        %185 = sbr.rel (%p182) target = $region32
      $region31: #{tpu_custom_call.1} parent=5 // pred_region
        %s186 = ssub.s32 %s16, 1
        %s187 = sand.u32 %s29, 1
        %s188 = scalar_lea.sflag [#allocation3], %s187
        %s189 = sand.u32 %s29, 1
        %s190 = smul.addr %s189, 144
        %s191 = scalar_lea.vmem [#allocation2], %s190
        // Predicated region
        $region33: #{tpu_custom_call.1} parent=31 // pred_check
          %p192 = pneg %p42
        $region34: #{tpu_custom_call.1} parent=31 // pred_check_branch
          %194 = sbr.rel (%p192) target = $region36
        $region35: #{tpu_custom_call.1} parent=31 // pred_region
          %195 = dma.done %s188, 2304
        $region36: #{tpu_custom_call.1} parent=31 // pred_fallthru
          _
        %s196 = sand.u32 %s21, 1
        %s197 = scalar_lea.sflag [#allocation6], %s196
        %s198 = sand.u32 %s55, 1
        %s199 = smul.addr %s198, 7488
        %s200 = scalar_lea.vmem [#allocation5], %s199
        // Predicated region
        $region37: #{tpu_custom_call.1} parent=31 // pred_check
          %p201 = pneg %p68
        $region38: #{tpu_custom_call.1} parent=31 // pred_check_branch
          %203 = sbr.rel (%p201) target = $region40
        $region39: #{tpu_custom_call.1} parent=31 // pred_region
          %204 = dma.done %s197, 119808
        $region40: #{tpu_custom_call.1} parent=31 // pred_fallthru
          _
        // Predicated region
        $region41: #{tpu_custom_call.1} parent=31 // pred_check
          %p205 = pneg %p89
        $region42: #{tpu_custom_call.1} parent=31 // pred_check_branch
          %207 = sbr.rel (%p205) target = $region44
        $region43: #{tpu_custom_call.1} parent=31 // pred_region
          %208 = dma.done [#allocation6], 16
        $region44: #{tpu_custom_call.1} parent=31 // pred_fallthru
          _
        %s209 = sand.u32 %s29, 1
        %s210 = scalar_lea.sflag [#allocation3], %s209
        %s211 = sand.u32 %s29, 1
        %s212 = smul.addr %s211, 144
        %s213 = scalar_lea.vmem [#allocation2], %s212
        %p214 = pneg %p42
        %p215 = pneg %p39
        %s216 = sand.u32 %s21, 1
        %s217 = scalar_lea.sflag [#allocation6], %s216
        %s218 = sand.u32 %s55, 1
        %s219 = smul.addr %s218, 7488
        %s220 = scalar_lea.vmem [#allocation5], %s219
        %p221 = pneg %p68
        %p222 = pneg %p65
        %p223 = pneg %p89
        %p224 = pneg %p86
        %p225 = pneg %p110
        %p226 = pneg %p107
        %s227 = smul.u32 72, %s21
        %s228 = smul.u32 72, %s21
        %p229 = scmp.eq.s32.totalorder %s21, 0
        // Predicated region
        $region45: #{tpu_custom_call.1} parent=31 // pred_check
          %p230 = pneg %p229
        $region46: #{tpu_custom_call.1} parent=31 // pred_check_branch
          %232 = sbr.rel (%p230) target = $region48
        $region47: #{tpu_custom_call.1} parent=31 // pred_region
          %v233 = vld [vmem:[#allocation7] sm:$0x1]
          %v235 = vlaneseq
          %v236 = vshrl.u32 %v235, 7
          %v237 = vsub.s32 0, %v236
          %v238 = vrot.slane %v233, %v237
          %vm240 = vcmask 812032
          %241 = vst.msk [vmem:[#allocation8] sm:$0x3] %vm240, %v238
        $region48: #{tpu_custom_call.1} parent=31 // pred_fallthru
          _
        %v242 = vld [vmem:[#allocation8] sm:$0x3]
        %v243 = vld [vmem:[%s191] sm:$0xff]
        %v244 = vld [vmem:[%s191 + $0x8] sm:$0xff]
        %v245 = vld [vmem:[%s191 + $0x10] sm:$0xff]
        %v246 = vld [vmem:[%s191 + $0x18] sm:$0xff]
        %v247 = vld [vmem:[%s191 + $0x20] sm:$0xff]
        %v248 = vld [vmem:[%s191 + $0x28] sm:$0xff]
        %v249 = vld [vmem:[%s191 + $0x30] sm:$0xff]
        %v250 = vld [vmem:[%s191 + $0x38] sm:$0xff]
        %v251 = vld [vmem:[%s191 + $0x40] sm:$0xff]
        %v252 = vld [vmem:[%s191 + $0x48] sm:$0xff]
        %v253 = vld [vmem:[%s191 + $0x50] sm:$0xff]
        %v254 = vld [vmem:[%s191 + $0x58] sm:$0xff]
        %v255 = vld [vmem:[%s191 + $0x60] sm:$0xff]
        %v256 = vld [vmem:[%s191 + $0x68] sm:$0xff]
        %v257 = vld [vmem:[%s191 + $0x70] sm:$0xff]
        %v258 = vld [vmem:[%s191 + $0x78] sm:$0xff]
        %v259 = vld [vmem:[%s191 + $0x80] sm:$0xff]
        %v260 = vld [vmem:[%s191 + $0x88] sm:$0xff]
        %v261 = vld [vmem:[%s200] sm:$0xff]
        %v262 = vld [vmem:[%s200 + $0x8] sm:$0xff]
        %v263 = vld [vmem:[%s200 + $0x10] sm:$0xff]
        %v264 = vld [vmem:[%s200 + $0x18] sm:$0xff]
        %v265 = vld [vmem:[%s200 + $0x20] sm:$0xff]
        %v266 = vld [vmem:[%s200 + $0x28] sm:$0xff]
        %v267 = vld [vmem:[%s200 + $0x30] sm:$0xff]
        %v268 = vld [vmem:[%s200 + $0x38] sm:$0xff]
        %v269 = vld [vmem:[%s200 + $0x40] sm:$0xff]
        %v270 = vld [vmem:[%s200 + $0x48] sm:$0xff]
        %v271 = vld [vmem:[%s200 + $0x50] sm:$0xff]
        %v272 = vld [vmem:[%s200 + $0x58] sm:$0xff]
        %v273 = vld [vmem:[%s200 + $0x60] sm:$0xff]
        %v274 = vld [vmem:[%s200 + $0x68] sm:$0xff]
        %v275 = vld [vmem:[%s200 + $0x70] sm:$0xff]
        %v276 = vld [vmem:[%s200 + $0x78] sm:$0xff]
        %v277 = vld [vmem:[%s200 + $0x80] sm:$0xff]
        %v278 = vld [vmem:[%s200 + $0x88] sm:$0xff]
        %v279 = vld [vmem:[%s200 + $0x90] sm:$0xff]
        %v280 = vld [vmem:[%s200 + $0x98] sm:$0xff]
        %v281 = vld [vmem:[%s200 + $0xa0] sm:$0xff]
        %v282 = vld [vmem:[%s200 + $0xa8] sm:$0xff]
        %v283 = vld [vmem:[%s200 + $0xb0] sm:$0xff]
        %v284 = vld [vmem:[%s200 + $0xb8] sm:$0xff]
        %v285 = vld [vmem:[%s200 + $0xc0] sm:$0xff]
        %v286 = vld [vmem:[%s200 + $0xc8] sm:$0xff]
        %v287 = vld [vmem:[%s200 + $0xd0] sm:$0xff]
        %v288 = vld [vmem:[%s200 + $0xd8] sm:$0xff]
        %v289 = vld [vmem:[%s200 + $0xe0] sm:$0xff]
        %v290 = vld [vmem:[%s200 + $0xe8] sm:$0xff]
        %v291 = vld [vmem:[%s200 + $0xf0] sm:$0xff]
        %v292 = vld [vmem:[%s200 + $0xf8] sm:$0xff]
        %v293 = vld [vmem:[%s200 + $0x100] sm:$0xff]
        %v294 = vld [vmem:[%s200 + $0x108] sm:$0xff]
        %v295 = vld [vmem:[%s200 + $0x110] sm:$0xff]
        %v296 = vld [vmem:[%s200 + $0x118] sm:$0xff]
        %v297 = vld [vmem:[%s200 + $0x120] sm:$0xff]
        %v298 = vld [vmem:[%s200 + $0x128] sm:$0xff]
        %v299 = vld [vmem:[%s200 + $0x130] sm:$0xff]
        %v300 = vld [vmem:[%s200 + $0x138] sm:$0xff]
        %v301 = vld [vmem:[%s200 + $0x140] sm:$0xff]
        %v302 = vld [vmem:[%s200 + $0x148] sm:$0xff]
        %v303 = vld [vmem:[%s200 + $0x150] sm:$0xff]
        %v304 = vld [vmem:[%s200 + $0x158] sm:$0xff]
        %v305 = vld [vmem:[%s200 + $0x160] sm:$0xff]
        %v306 = vld [vmem:[%s200 + $0x168] sm:$0xff]
        %v307 = vld [vmem:[%s200 + $0x170] sm:$0xff]
        %v308 = vld [vmem:[%s200 + $0x178] sm:$0xff]
        %v309 = vld [vmem:[%s200 + $0x180] sm:$0xff]
        %v310 = vld [vmem:[%s200 + $0x188] sm:$0xff]
        %v311 = vld [vmem:[%s200 + $0x190] sm:$0xff]
        %v312 = vld [vmem:[%s200 + $0x198] sm:$0xff]
        %v313 = vld [vmem:[%s200 + $0x1a0] sm:$0xff]
        %v314 = vld [vmem:[%s200 + $0x1a8] sm:$0xff]
        %v315 = vld [vmem:[%s200 + $0x1b0] sm:$0xff]
        %v316 = vld [vmem:[%s200 + $0x1b8] sm:$0xff]
        %v317 = vld [vmem:[%s200 + $0x1c0] sm:$0xff]
        %v318 = vld [vmem:[%s200 + $0x1c8] sm:$0xff]
        %v319 = vld [vmem:[%s200 + $0x1d0] sm:$0xff]
        %v320 = vld [vmem:[%s200 + $0x1d8] sm:$0xff]
        %v321 = vld [vmem:[%s200 + $0x1e0] sm:$0xff]
        %v322 = vld [vmem:[%s200 + $0x1e8] sm:$0xff]
        %v323 = vld [vmem:[%s200 + $0x1f0] sm:$0xff]
        %v324 = vld [vmem:[%s200 + $0x1f8] sm:$0xff]
        %v325 = vld [vmem:[%s200 + $0x200] sm:$0xff]
        %v326 = vld [vmem:[%s200 + $0x208] sm:$0xff]
        %v327 = vld [vmem:[%s200 + $0x210] sm:$0xff]
        %v328 = vld [vmem:[%s200 + $0x218] sm:$0xff]
        %v329 = vld [vmem:[%s200 + $0x220] sm:$0xff]
        %v330 = vld [vmem:[%s200 + $0x228] sm:$0xff]
        %v331 = vld [vmem:[%s200 + $0x230] sm:$0xff]
        %v332 = vld [vmem:[%s200 + $0x238] sm:$0xff]
        %v333 = vld [vmem:[%s200 + $0x240] sm:$0xff]
        %v334 = vld [vmem:[%s200 + $0x248] sm:$0xff]
        %v335 = vld [vmem:[%s200 + $0x250] sm:$0xff]
        %v336 = vld [vmem:[%s200 + $0x258] sm:$0xff]
        %v337 = vld [vmem:[%s200 + $0x260] sm:$0xff]
        %v338 = vld [vmem:[%s200 + $0x268] sm:$0xff]
        %v339 = vld [vmem:[%s200 + $0x270] sm:$0xff]
        %v340 = vld [vmem:[%s200 + $0x278] sm:$0xff]
        %v341 = vld [vmem:[%s200 + $0x280] sm:$0xff]
        %v342 = vld [vmem:[%s200 + $0x288] sm:$0xff]
        %v343 = vld [vmem:[%s200 + $0x290] sm:$0xff]
        %v344 = vld [vmem:[%s200 + $0x298] sm:$0xff]
        %v345 = vld [vmem:[%s200 + $0x2a0] sm:$0xff]
        %v346 = vld [vmem:[%s200 + $0x2a8] sm:$0xff]
        %v347 = vld [vmem:[%s200 + $0x2b0] sm:$0xff]
        %v348 = vld [vmem:[%s200 + $0x2b8] sm:$0xff]
        %v349 = vld [vmem:[%s200 + $0x2c0] sm:$0xff]
        %v350 = vld [vmem:[%s200 + $0x2c8] sm:$0xff]
        %v351 = vld [vmem:[%s200 + $0x2d0] sm:$0xff]
        %v352 = vld [vmem:[%s200 + $0x2d8] sm:$0xff]
        %v353 = vld [vmem:[%s200 + $0x2e0] sm:$0xff]
        %v354 = vld [vmem:[%s200 + $0x2e8] sm:$0xff]
        %v355 = vld [vmem:[%s200 + $0x2f0] sm:$0xff]
        %v356 = vld [vmem:[%s200 + $0x2f8] sm:$0xff]
        %v357 = vld [vmem:[%s200 + $0x300] sm:$0xff]
        %v358 = vld [vmem:[%s200 + $0x308] sm:$0xff]
        %v359 = vld [vmem:[%s200 + $0x310] sm:$0xff]
        %v360 = vld [vmem:[%s200 + $0x318] sm:$0xff]
        %v361 = vld [vmem:[%s200 + $0x320] sm:$0xff]
        %v362 = vld [vmem:[%s200 + $0x328] sm:$0xff]
        %v363 = vld [vmem:[%s200 + $0x330] sm:$0xff]
        %v364 = vld [vmem:[%s200 + $0x338] sm:$0xff]
        %v365 = vld [vmem:[%s200 + $0x340] sm:$0xff]
        %v366 = vld [vmem:[%s200 + $0x348] sm:$0xff]
        %v367 = vld [vmem:[%s200 + $0x350] sm:$0xff]
        %v368 = vld [vmem:[%s200 + $0x358] sm:$0xff]
        %v369 = vld [vmem:[%s200 + $0x360] sm:$0xff]
        %v370 = vld [vmem:[%s200 + $0x368] sm:$0xff]
        %v371 = vld [vmem:[%s200 + $0x370] sm:$0xff]
        %v372 = vld [vmem:[%s200 + $0x378] sm:$0xff]
        %v373 = vld [vmem:[%s200 + $0x380] sm:$0xff]
        %v374 = vld [vmem:[%s200 + $0x388] sm:$0xff]
        %v375 = vld [vmem:[%s200 + $0x390] sm:$0xff]
        %v376 = vld [vmem:[%s200 + $0x398] sm:$0xff]
        %v377 = vld [vmem:[%s200 + $0x3a0] sm:$0xff]
        %v378 = vld [vmem:[%s200 + $0x3a8] sm:$0xff]
        %v379 = vld [vmem:[%s200 + $0x3b0] sm:$0xff]
        %v380 = vld [vmem:[%s200 + $0x3b8] sm:$0xff]
        %v381 = vld [vmem:[%s200 + $0x3c0] sm:$0xff]
        %v382 = vld [vmem:[%s200 + $0x3c8] sm:$0xff]
        %v383 = vld [vmem:[%s200 + $0x3d0] sm:$0xff]
        %v384 = vld [vmem:[%s200 + $0x3d8] sm:$0xff]
        %v385 = vld [vmem:[%s200 + $0x3e0] sm:$0xff]
        %v386 = vld [vmem:[%s200 + $0x3e8] sm:$0xff]
        %v387 = vld [vmem:[%s200 + $0x3f0] sm:$0xff]
        %v388 = vld [vmem:[%s200 + $0x3f8] sm:$0xff]
        %v389 = vld [vmem:[%s200 + $0x400] sm:$0xff]
        %v390 = vld [vmem:[%s200 + $0x408] sm:$0xff]
        %v391 = vld [vmem:[%s200 + $0x410] sm:$0xff]
        %v392 = vld [vmem:[%s200 + $0x418] sm:$0xff]
        %v393 = vld [vmem:[%s200 + $0x420] sm:$0xff]
        %v394 = vld [vmem:[%s200 + $0x428] sm:$0xff]
        %v395 = vld [vmem:[%s200 + $0x430] sm:$0xff]
        %v396 = vld [vmem:[%s200 + $0x438] sm:$0xff]
        %v397 = vld [vmem:[%s200 + $0x440] sm:$0xff]
        %v398 = vld [vmem:[%s200 + $0x448] sm:$0xff]
        %v399 = vld [vmem:[%s200 + $0x450] sm:$0xff]
        %v400 = vld [vmem:[%s200 + $0x458] sm:$0xff]
        %v401 = vld [vmem:[%s200 + $0x460] sm:$0xff]
        %v402 = vld [vmem:[%s200 + $0x468] sm:$0xff]
        %v403 = vld [vmem:[%s200 + $0x470] sm:$0xff]
        %v404 = vld [vmem:[%s200 + $0x478] sm:$0xff]
        %v405 = vld [vmem:[%s200 + $0x480] sm:$0xff]
        %v406 = vld [vmem:[%s200 + $0x488] sm:$0xff]
        %v407 = vld [vmem:[%s200 + $0x490] sm:$0xff]
        %v408 = vld [vmem:[%s200 + $0x498] sm:$0xff]
        %v409 = vld [vmem:[%s200 + $0x4a0] sm:$0xff]
        %v410 = vld [vmem:[%s200 + $0x4a8] sm:$0xff]
        %v411 = vld [vmem:[%s200 + $0x4b0] sm:$0xff]
        %v412 = vld [vmem:[%s200 + $0x4b8] sm:$0xff]
        %v413 = vld [vmem:[%s200 + $0x4c0] sm:$0xff]
        %v414 = vld [vmem:[%s200 + $0x4c8] sm:$0xff]
        %v415 = vld [vmem:[%s200 + $0x4d0] sm:$0xff]
        %v416 = vld [vmem:[%s200 + $0x4d8] sm:$0xff]
        %v417 = vld [vmem:[%s200 + $0x4e0] sm:$0xff]
        %v418 = vld [vmem:[%s200 + $0x4e8] sm:$0xff]
        %v419 = vld [vmem:[%s200 + $0x4f0] sm:$0xff]
        %v420 = vld [vmem:[%s200 + $0x4f8] sm:$0xff]
        %v421 = vld [vmem:[%s200 + $0x500] sm:$0xff]
        %v422 = vld [vmem:[%s200 + $0x508] sm:$0xff]
        %v423 = vld [vmem:[%s200 + $0x510] sm:$0xff]
        %v424 = vld [vmem:[%s200 + $0x518] sm:$0xff]
        %v425 = vld [vmem:[%s200 + $0x520] sm:$0xff]
        %v426 = vld [vmem:[%s200 + $0x528] sm:$0xff]
        %v427 = vld [vmem:[%s200 + $0x530] sm:$0xff]
        %v428 = vld [vmem:[%s200 + $0x538] sm:$0xff]
        %v429 = vld [vmem:[%s200 + $0x540] sm:$0xff]
        %v430 = vld [vmem:[%s200 + $0x548] sm:$0xff]
        %v431 = vld [vmem:[%s200 + $0x550] sm:$0xff]
        %v432 = vld [vmem:[%s200 + $0x558] sm:$0xff]
        %v433 = vld [vmem:[%s200 + $0x560] sm:$0xff]
        %v434 = vld [vmem:[%s200 + $0x568] sm:$0xff]
        %v435 = vld [vmem:[%s200 + $0x570] sm:$0xff]
        %v436 = vld [vmem:[%s200 + $0x578] sm:$0xff]
        %v437 = vld [vmem:[%s200 + $0x580] sm:$0xff]
        %v438 = vld [vmem:[%s200 + $0x588] sm:$0xff]
        %v439 = vld [vmem:[%s200 + $0x590] sm:$0xff]
        %v440 = vld [vmem:[%s200 + $0x598] sm:$0xff]
        %v441 = vld [vmem:[%s200 + $0x5a0] sm:$0xff]
        %v442 = vld [vmem:[%s200 + $0x5a8] sm:$0xff]
        %v443 = vld [vmem:[%s200 + $0x5b0] sm:$0xff]
        %v444 = vld [vmem:[%s200 + $0x5b8] sm:$0xff]
        %v445 = vld [vmem:[%s200 + $0x5c0] sm:$0xff]
        %v446 = vld [vmem:[%s200 + $0x5c8] sm:$0xff]
        %v447 = vld [vmem:[%s200 + $0x5d0] sm:$0xff]
        %v448 = vld [vmem:[%s200 + $0x5d8] sm:$0xff]
        %v449 = vld [vmem:[%s200 + $0x5e0] sm:$0xff]
        %v450 = vld [vmem:[%s200 + $0x5e8] sm:$0xff]
        %v451 = vld [vmem:[%s200 + $0x5f0] sm:$0xff]
        %v452 = vld [vmem:[%s200 + $0x5f8] sm:$0xff]
        %v453 = vld [vmem:[%s200 + $0x600] sm:$0xff]
        %v454 = vld [vmem:[%s200 + $0x608] sm:$0xff]
        %v455 = vld [vmem:[%s200 + $0x610] sm:$0xff]
        %v456 = vld [vmem:[%s200 + $0x618] sm:$0xff]
        %v457 = vld [vmem:[%s200 + $0x620] sm:$0xff]
        %v458 = vld [vmem:[%s200 + $0x628] sm:$0xff]
        %v459 = vld [vmem:[%s200 + $0x630] sm:$0xff]
        %v460 = vld [vmem:[%s200 + $0x638] sm:$0xff]
        %v461 = vld [vmem:[%s200 + $0x640] sm:$0xff]
        %v462 = vld [vmem:[%s200 + $0x648] sm:$0xff]
        %v463 = vld [vmem:[%s200 + $0x650] sm:$0xff]
        %v464 = vld [vmem:[%s200 + $0x658] sm:$0xff]
        %v465 = vld [vmem:[%s200 + $0x660] sm:$0xff]
        %v466 = vld [vmem:[%s200 + $0x668] sm:$0xff]
        %v467 = vld [vmem:[%s200 + $0x670] sm:$0xff]
        %v468 = vld [vmem:[%s200 + $0x678] sm:$0xff]
        %v469 = vld [vmem:[%s200 + $0x680] sm:$0xff]
        %v470 = vld [vmem:[%s200 + $0x688] sm:$0xff]
        %v471 = vld [vmem:[%s200 + $0x690] sm:$0xff]
        %v472 = vld [vmem:[%s200 + $0x698] sm:$0xff]
        %v473 = vld [vmem:[%s200 + $0x6a0] sm:$0xff]
        %v474 = vld [vmem:[%s200 + $0x6a8] sm:$0xff]
        %v475 = vld [vmem:[%s200 + $0x6b0] sm:$0xff]
        %v476 = vld [vmem:[%s200 + $0x6b8] sm:$0xff]
        %v477 = vld [vmem:[%s200 + $0x6c0] sm:$0xff]
        %v478 = vld [vmem:[%s200 + $0x6c8] sm:$0xff]
        %v479 = vld [vmem:[%s200 + $0x6d0] sm:$0xff]
        %v480 = vld [vmem:[%s200 + $0x6d8] sm:$0xff]
        %v481 = vld [vmem:[%s200 + $0x6e0] sm:$0xff]
        %v482 = vld [vmem:[%s200 + $0x6e8] sm:$0xff]
        %v483 = vld [vmem:[%s200 + $0x6f0] sm:$0xff]
        %v484 = vld [vmem:[%s200 + $0x6f8] sm:$0xff]
        %v485 = vld [vmem:[%s200 + $0x700] sm:$0xff]
        %v486 = vld [vmem:[%s200 + $0x708] sm:$0xff]
        %v487 = vld [vmem:[%s200 + $0x710] sm:$0xff]
        %v488 = vld [vmem:[%s200 + $0x718] sm:$0xff]
        %v489 = vld [vmem:[%s200 + $0x720] sm:$0xff]
        %v490 = vld [vmem:[%s200 + $0x728] sm:$0xff]
        %v491 = vld [vmem:[%s200 + $0x730] sm:$0xff]
        %v492 = vld [vmem:[%s200 + $0x738] sm:$0xff]
        %v493 = vld [vmem:[%s200 + $0x740] sm:$0xff]
        %v494 = vld [vmem:[%s200 + $0x748] sm:$0xff]
        %v495 = vld [vmem:[%s200 + $0x750] sm:$0xff]
        %v496 = vld [vmem:[%s200 + $0x758] sm:$0xff]
        %v497 = vld [vmem:[%s200 + $0x760] sm:$0xff]
        %v498 = vld [vmem:[%s200 + $0x768] sm:$0xff]
        %v499 = vld [vmem:[%s200 + $0x770] sm:$0xff]
        %v500 = vld [vmem:[%s200 + $0x778] sm:$0xff]
        %v501 = vld [vmem:[%s200 + $0x780] sm:$0xff]
        %v502 = vld [vmem:[%s200 + $0x788] sm:$0xff]
        %v503 = vld [vmem:[%s200 + $0x790] sm:$0xff]
        %v504 = vld [vmem:[%s200 + $0x798] sm:$0xff]
        %v505 = vld [vmem:[%s200 + $0x7a0] sm:$0xff]
        %v506 = vld [vmem:[%s200 + $0x7a8] sm:$0xff]
        %v507 = vld [vmem:[%s200 + $0x7b0] sm:$0xff]
        %v508 = vld [vmem:[%s200 + $0x7b8] sm:$0xff]
        %v509 = vld [vmem:[%s200 + $0x7c0] sm:$0xff]
        %v510 = vld [vmem:[%s200 + $0x7c8] sm:$0xff]
        %v511 = vld [vmem:[%s200 + $0x7d0] sm:$0xff]
        %v512 = vld [vmem:[%s200 + $0x7d8] sm:$0xff]
        %v513 = vld [vmem:[%s200 + $0x7e0] sm:$0xff]
        %v514 = vld [vmem:[%s200 + $0x7e8] sm:$0xff]
        %v515 = vld [vmem:[%s200 + $0x7f0] sm:$0xff]
        %v516 = vld [vmem:[%s200 + $0x7f8] sm:$0xff]
        %v517 = vld [vmem:[%s200 + $0x800] sm:$0xff]
        %v518 = vld [vmem:[%s200 + $0x808] sm:$0xff]
        %v519 = vld [vmem:[%s200 + $0x810] sm:$0xff]
        %v520 = vld [vmem:[%s200 + $0x818] sm:$0xff]
        %v521 = vld [vmem:[%s200 + $0x820] sm:$0xff]
        %v522 = vld [vmem:[%s200 + $0x828] sm:$0xff]
        %v523 = vld [vmem:[%s200 + $0x830] sm:$0xff]
        %v524 = vld [vmem:[%s200 + $0x838] sm:$0xff]
        %v525 = vld [vmem:[%s200 + $0x840] sm:$0xff]
        %v526 = vld [vmem:[%s200 + $0x848] sm:$0xff]
        %v527 = vld [vmem:[%s200 + $0x850] sm:$0xff]
        %v528 = vld [vmem:[%s200 + $0x858] sm:$0xff]
        %v529 = vld [vmem:[%s200 + $0x860] sm:$0xff]
        %v530 = vld [vmem:[%s200 + $0x868] sm:$0xff]
        %v531 = vld [vmem:[%s200 + $0x870] sm:$0xff]
        %v532 = vld [vmem:[%s200 + $0x878] sm:$0xff]
        %v533 = vld [vmem:[%s200 + $0x880] sm:$0xff]
        %v534 = vld [vmem:[%s200 + $0x888] sm:$0xff]
        %v535 = vld [vmem:[%s200 + $0x890] sm:$0xff]
        %v536 = vld [vmem:[%s200 + $0x898] sm:$0xff]
        %v537 = vld [vmem:[%s200 + $0x8a0] sm:$0xff]
        %v538 = vld [vmem:[%s200 + $0x8a8] sm:$0xff]
        %v539 = vld [vmem:[%s200 + $0x8b0] sm:$0xff]
        %v540 = vld [vmem:[%s200 + $0x8b8] sm:$0xff]
        %v541 = vld [vmem:[%s200 + $0x8c0] sm:$0xff]
        %v542 = vld [vmem:[%s200 + $0x8c8] sm:$0xff]
        %v543 = vld [vmem:[%s200 + $0x8d0] sm:$0xff]
        %v544 = vld [vmem:[%s200 + $0x8d8] sm:$0xff]
        %v545 = vld [vmem:[%s200 + $0x8e0] sm:$0xff]
        %v546 = vld [vmem:[%s200 + $0x8e8] sm:$0xff]
        %v547 = vld [vmem:[%s200 + $0x8f0] sm:$0xff]
        %v548 = vld [vmem:[%s200 + $0x8f8] sm:$0xff]
        %v549 = vld [vmem:[%s200 + $0x900] sm:$0xff]
        %v550 = vld [vmem:[%s200 + $0x908] sm:$0xff]
        %v551 = vld [vmem:[%s200 + $0x910] sm:$0xff]
        %v552 = vld [vmem:[%s200 + $0x918] sm:$0xff]
        %v553 = vld [vmem:[%s200 + $0x920] sm:$0xff]
        %v554 = vld [vmem:[%s200 + $0x928] sm:$0xff]
        %v555 = vld [vmem:[%s200 + $0x930] sm:$0xff]
        %v556 = vld [vmem:[%s200 + $0x938] sm:$0xff]
        %v557 = vld [vmem:[%s200 + $0x940] sm:$0xff]
        %v558 = vld [vmem:[%s200 + $0x948] sm:$0xff]
        %v559 = vld [vmem:[%s200 + $0x950] sm:$0xff]
        %v560 = vld [vmem:[%s200 + $0x958] sm:$0xff]
        %v561 = vld [vmem:[%s200 + $0x960] sm:$0xff]
        %v562 = vld [vmem:[%s200 + $0x968] sm:$0xff]
        %v563 = vld [vmem:[%s200 + $0x970] sm:$0xff]
        %v564 = vld [vmem:[%s200 + $0x978] sm:$0xff]
        %v565 = vld [vmem:[%s200 + $0x980] sm:$0xff]
        %v566 = vld [vmem:[%s200 + $0x988] sm:$0xff]
        %v567 = vld [vmem:[%s200 + $0x990] sm:$0xff]
        %v568 = vld [vmem:[%s200 + $0x998] sm:$0xff]
        %v569 = vld [vmem:[%s200 + $0x9a0] sm:$0xff]
        %v570 = vld [vmem:[%s200 + $0x9a8] sm:$0xff]
        %v571 = vld [vmem:[%s200 + $0x9b0] sm:$0xff]
        %v572 = vld [vmem:[%s200 + $0x9b8] sm:$0xff]
        %v573 = vld [vmem:[%s200 + $0x9c0] sm:$0xff]
        %v574 = vld [vmem:[%s200 + $0x9c8] sm:$0xff]
        %v575 = vld [vmem:[%s200 + $0x9d0] sm:$0xff]
        %v576 = vld [vmem:[%s200 + $0x9d8] sm:$0xff]
        %v577 = vld [vmem:[%s200 + $0x9e0] sm:$0xff]
        %v578 = vld [vmem:[%s200 + $0x9e8] sm:$0xff]
        %v579 = vld [vmem:[%s200 + $0x9f0] sm:$0xff]
        %v580 = vld [vmem:[%s200 + $0x9f8] sm:$0xff]
        %v581 = vld [vmem:[%s200 + $0xa00] sm:$0xff]
        %v582 = vld [vmem:[%s200 + $0xa08] sm:$0xff]
        %v583 = vld [vmem:[%s200 + $0xa10] sm:$0xff]
        %v584 = vld [vmem:[%s200 + $0xa18] sm:$0xff]
        %v585 = vld [vmem:[%s200 + $0xa20] sm:$0xff]
        %v586 = vld [vmem:[%s200 + $0xa28] sm:$0xff]
        %v587 = vld [vmem:[%s200 + $0xa30] sm:$0xff]
        %v588 = vld [vmem:[%s200 + $0xa38] sm:$0xff]
        %v589 = vld [vmem:[%s200 + $0xa40] sm:$0xff]
        %v590 = vld [vmem:[%s200 + $0xa48] sm:$0xff]
        %v591 = vld [vmem:[%s200 + $0xa50] sm:$0xff]
        %v592 = vld [vmem:[%s200 + $0xa58] sm:$0xff]
        %v593 = vld [vmem:[%s200 + $0xa60] sm:$0xff]
        %v594 = vld [vmem:[%s200 + $0xa68] sm:$0xff]
        %v595 = vld [vmem:[%s200 + $0xa70] sm:$0xff]
        %v596 = vld [vmem:[%s200 + $0xa78] sm:$0xff]
        %v597 = vld [vmem:[%s200 + $0xa80] sm:$0xff]
        %v598 = vld [vmem:[%s200 + $0xa88] sm:$0xff]
        %v599 = vld [vmem:[%s200 + $0xa90] sm:$0xff]
        %v600 = vld [vmem:[%s200 + $0xa98] sm:$0xff]
        %v601 = vld [vmem:[%s200 + $0xaa0] sm:$0xff]
        %v602 = vld [vmem:[%s200 + $0xaa8] sm:$0xff]
        %v603 = vld [vmem:[%s200 + $0xab0] sm:$0xff]
        %v604 = vld [vmem:[%s200 + $0xab8] sm:$0xff]
        %v605 = vld [vmem:[%s200 + $0xac0] sm:$0xff]
        %v606 = vld [vmem:[%s200 + $0xac8] sm:$0xff]
        %v607 = vld [vmem:[%s200 + $0xad0] sm:$0xff]
        %v608 = vld [vmem:[%s200 + $0xad8] sm:$0xff]
        %v609 = vld [vmem:[%s200 + $0xae0] sm:$0xff]
        %v610 = vld [vmem:[%s200 + $0xae8] sm:$0xff]
        %v611 = vld [vmem:[%s200 + $0xaf0] sm:$0xff]
        %v612 = vld [vmem:[%s200 + $0xaf8] sm:$0xff]
        %v613 = vld [vmem:[%s200 + $0xb00] sm:$0xff]
        %v614 = vld [vmem:[%s200 + $0xb08] sm:$0xff]
        %v615 = vld [vmem:[%s200 + $0xb10] sm:$0xff]
        %v616 = vld [vmem:[%s200 + $0xb18] sm:$0xff]
        %v617 = vld [vmem:[%s200 + $0xb20] sm:$0xff]
        %v618 = vld [vmem:[%s200 + $0xb28] sm:$0xff]
        %v619 = vld [vmem:[%s200 + $0xb30] sm:$0xff]
        %v620 = vld [vmem:[%s200 + $0xb38] sm:$0xff]
        %v621 = vld [vmem:[%s200 + $0xb40] sm:$0xff]
        %v622 = vld [vmem:[%s200 + $0xb48] sm:$0xff]
        %v623 = vld [vmem:[%s200 + $0xb50] sm:$0xff]
        %v624 = vld [vmem:[%s200 + $0xb58] sm:$0xff]
        %v625 = vld [vmem:[%s200 + $0xb60] sm:$0xff]
        %v626 = vld [vmem:[%s200 + $0xb68] sm:$0xff]
        %v627 = vld [vmem:[%s200 + $0xb70] sm:$0xff]
        %v628 = vld [vmem:[%s200 + $0xb78] sm:$0xff]
        %v629 = vld [vmem:[%s200 + $0xb80] sm:$0xff]
        %v630 = vld [vmem:[%s200 + $0xb88] sm:$0xff]
        %v631 = vld [vmem:[%s200 + $0xb90] sm:$0xff]
        %v632 = vld [vmem:[%s200 + $0xb98] sm:$0xff]
        %v633 = vld [vmem:[%s200 + $0xba0] sm:$0xff]
        %v634 = vld [vmem:[%s200 + $0xba8] sm:$0xff]
        %v635 = vld [vmem:[%s200 + $0xbb0] sm:$0xff]
        %v636 = vld [vmem:[%s200 + $0xbb8] sm:$0xff]
        %v637 = vld [vmem:[%s200 + $0xbc0] sm:$0xff]
        %v638 = vld [vmem:[%s200 + $0xbc8] sm:$0xff]
        %v639 = vld [vmem:[%s200 + $0xbd0] sm:$0xff]
        %v640 = vld [vmem:[%s200 + $0xbd8] sm:$0xff]
        %v641 = vld [vmem:[%s200 + $0xbe0] sm:$0xff]
        %v642 = vld [vmem:[%s200 + $0xbe8] sm:$0xff]
        %v643 = vld [vmem:[%s200 + $0xbf0] sm:$0xff]
        %v644 = vld [vmem:[%s200 + $0xbf8] sm:$0xff]
        %v645 = vld [vmem:[%s200 + $0xc00] sm:$0xff]
        %v646 = vld [vmem:[%s200 + $0xc08] sm:$0xff]
        %v647 = vld [vmem:[%s200 + $0xc10] sm:$0xff]
        %v648 = vld [vmem:[%s200 + $0xc18] sm:$0xff]
        %v649 = vld [vmem:[%s200 + $0xc20] sm:$0xff]
        %v650 = vld [vmem:[%s200 + $0xc28] sm:$0xff]
        %v651 = vld [vmem:[%s200 + $0xc30] sm:$0xff]
        %v652 = vld [vmem:[%s200 + $0xc38] sm:$0xff]
        %v653 = vld [vmem:[%s200 + $0xc40] sm:$0xff]
        %v654 = vld [vmem:[%s200 + $0xc48] sm:$0xff]
        %v655 = vld [vmem:[%s200 + $0xc50] sm:$0xff]
        %v656 = vld [vmem:[%s200 + $0xc58] sm:$0xff]
        %v657 = vld [vmem:[%s200 + $0xc60] sm:$0xff]
        %v658 = vld [vmem:[%s200 + $0xc68] sm:$0xff]
        %v659 = vld [vmem:[%s200 + $0xc70] sm:$0xff]
        %v660 = vld [vmem:[%s200 + $0xc78] sm:$0xff]
        %v661 = vld [vmem:[%s200 + $0xc80] sm:$0xff]
        %v662 = vld [vmem:[%s200 + $0xc88] sm:$0xff]
        %v663 = vld [vmem:[%s200 + $0xc90] sm:$0xff]
        %v664 = vld [vmem:[%s200 + $0xc98] sm:$0xff]
        %v665 = vld [vmem:[%s200 + $0xca0] sm:$0xff]
        %v666 = vld [vmem:[%s200 + $0xca8] sm:$0xff]
        %v667 = vld [vmem:[%s200 + $0xcb0] sm:$0xff]
        %v668 = vld [vmem:[%s200 + $0xcb8] sm:$0xff]
        %v669 = vld [vmem:[%s200 + $0xcc0] sm:$0xff]
        %v670 = vld [vmem:[%s200 + $0xcc8] sm:$0xff]
        %v671 = vld [vmem:[%s200 + $0xcd0] sm:$0xff]
        %v672 = vld [vmem:[%s200 + $0xcd8] sm:$0xff]
        %v673 = vld [vmem:[%s200 + $0xce0] sm:$0xff]
        %v674 = vld [vmem:[%s200 + $0xce8] sm:$0xff]
        %v675 = vld [vmem:[%s200 + $0xcf0] sm:$0xff]
        %v676 = vld [vmem:[%s200 + $0xcf8] sm:$0xff]
        %v677 = vld [vmem:[%s200 + $0xd00] sm:$0xff]
        %v678 = vld [vmem:[%s200 + $0xd08] sm:$0xff]
        %v679 = vld [vmem:[%s200 + $0xd10] sm:$0xff]
        %v680 = vld [vmem:[%s200 + $0xd18] sm:$0xff]
        %v681 = vld [vmem:[%s200 + $0xd20] sm:$0xff]
        %v682 = vld [vmem:[%s200 + $0xd28] sm:$0xff]
        %v683 = vld [vmem:[%s200 + $0xd30] sm:$0xff]
        %v684 = vld [vmem:[%s200 + $0xd38] sm:$0xff]
        %v685 = vld [vmem:[%s200 + $0xd40] sm:$0xff]
        %v686 = vld [vmem:[%s200 + $0xd48] sm:$0xff]
        %v687 = vld [vmem:[%s200 + $0xd50] sm:$0xff]
        %v688 = vld [vmem:[%s200 + $0xd58] sm:$0xff]
        %v689 = vld [vmem:[%s200 + $0xd60] sm:$0xff]
        %v690 = vld [vmem:[%s200 + $0xd68] sm:$0xff]
        %v691 = vld [vmem:[%s200 + $0xd70] sm:$0xff]
        %v692 = vld [vmem:[%s200 + $0xd78] sm:$0xff]
        %v693 = vld [vmem:[%s200 + $0xd80] sm:$0xff]
        %v694 = vld [vmem:[%s200 + $0xd88] sm:$0xff]
        %v695 = vld [vmem:[%s200 + $0xd90] sm:$0xff]
        %v696 = vld [vmem:[%s200 + $0xd98] sm:$0xff]
        %v697 = vld [vmem:[%s200 + $0xda0] sm:$0xff]
        %v698 = vld [vmem:[%s200 + $0xda8] sm:$0xff]
        %v699 = vld [vmem:[%s200 + $0xdb0] sm:$0xff]
        %v700 = vld [vmem:[%s200 + $0xdb8] sm:$0xff]
        %v701 = vld [vmem:[%s200 + $0xdc0] sm:$0xff]
        %v702 = vld [vmem:[%s200 + $0xdc8] sm:$0xff]
        %v703 = vld [vmem:[%s200 + $0xdd0] sm:$0xff]
        %v704 = vld [vmem:[%s200 + $0xdd8] sm:$0xff]
        %v705 = vld [vmem:[%s200 + $0xde0] sm:$0xff]
        %v706 = vld [vmem:[%s200 + $0xde8] sm:$0xff]
        %v707 = vld [vmem:[%s200 + $0xdf0] sm:$0xff]
        %v708 = vld [vmem:[%s200 + $0xdf8] sm:$0xff]
        %v709 = vld [vmem:[%s200 + $0xe00] sm:$0xff]
        %v710 = vld [vmem:[%s200 + $0xe08] sm:$0xff]
        %v711 = vld [vmem:[%s200 + $0xe10] sm:$0xff]
        %v712 = vld [vmem:[%s200 + $0xe18] sm:$0xff]
        %v713 = vld [vmem:[%s200 + $0xe20] sm:$0xff]
        %v714 = vld [vmem:[%s200 + $0xe28] sm:$0xff]
        %v715 = vld [vmem:[%s200 + $0xe30] sm:$0xff]
        %v716 = vld [vmem:[%s200 + $0xe38] sm:$0xff]
        %v717 = vld [vmem:[%s200 + $0xe40] sm:$0xff]
        %v718 = vld [vmem:[%s200 + $0xe48] sm:$0xff]
        %v719 = vld [vmem:[%s200 + $0xe50] sm:$0xff]
        %v720 = vld [vmem:[%s200 + $0xe58] sm:$0xff]
        %v721 = vld [vmem:[%s200 + $0xe60] sm:$0xff]
        %v722 = vld [vmem:[%s200 + $0xe68] sm:$0xff]
        %v723 = vld [vmem:[%s200 + $0xe70] sm:$0xff]
        %v724 = vld [vmem:[%s200 + $0xe78] sm:$0xff]
        %v725 = vld [vmem:[%s200 + $0xe80] sm:$0xff]
        %v726 = vld [vmem:[%s200 + $0xe88] sm:$0xff]
        %v727 = vld [vmem:[%s200 + $0xe90] sm:$0xff]
        %v728 = vld [vmem:[%s200 + $0xe98] sm:$0xff]
        %v729 = vld [vmem:[%s200 + $0xea0] sm:$0xff]
        %v730 = vld [vmem:[%s200 + $0xea8] sm:$0xff]
        %v731 = vld [vmem:[%s200 + $0xeb0] sm:$0xff]
        %v732 = vld [vmem:[%s200 + $0xeb8] sm:$0xff]
        %v733 = vld [vmem:[%s200 + $0xec0] sm:$0xff]
        %v734 = vld [vmem:[%s200 + $0xec8] sm:$0xff]
        %v735 = vld [vmem:[%s200 + $0xed0] sm:$0xff]
        %v736 = vld [vmem:[%s200 + $0xed8] sm:$0xff]
        %v737 = vld [vmem:[%s200 + $0xee0] sm:$0xff]
        %v738 = vld [vmem:[%s200 + $0xee8] sm:$0xff]
        %v739 = vld [vmem:[%s200 + $0xef0] sm:$0xff]
        %v740 = vld [vmem:[%s200 + $0xef8] sm:$0xff]
        %v741 = vld [vmem:[%s200 + $0xf00] sm:$0xff]
        %v742 = vld [vmem:[%s200 + $0xf08] sm:$0xff]
        %v743 = vld [vmem:[%s200 + $0xf10] sm:$0xff]
        %v744 = vld [vmem:[%s200 + $0xf18] sm:$0xff]
        %v745 = vld [vmem:[%s200 + $0xf20] sm:$0xff]
        %v746 = vld [vmem:[%s200 + $0xf28] sm:$0xff]
        %v747 = vld [vmem:[%s200 + $0xf30] sm:$0xff]
        %v748 = vld [vmem:[%s200 + $0xf38] sm:$0xff]
        %v749 = vld [vmem:[%s200 + $0xf40] sm:$0xff]
        %v750 = vld [vmem:[%s200 + $0xf48] sm:$0xff]
        %v751 = vld [vmem:[%s200 + $0xf50] sm:$0xff]
        %v752 = vld [vmem:[%s200 + $0xf58] sm:$0xff]
        %v753 = vld [vmem:[%s200 + $0xf60] sm:$0xff]
        %v754 = vld [vmem:[%s200 + $0xf68] sm:$0xff]
        %v755 = vld [vmem:[%s200 + $0xf70] sm:$0xff]
        %v756 = vld [vmem:[%s200 + $0xf78] sm:$0xff]
        %v757 = vld [vmem:[%s200 + $0xf80] sm:$0xff]
        %v758 = vld [vmem:[%s200 + $0xf88] sm:$0xff]
        %v759 = vld [vmem:[%s200 + $0xf90] sm:$0xff]
        %v760 = vld [vmem:[%s200 + $0xf98] sm:$0xff]
        %v761 = vld [vmem:[%s200 + $0xfa0] sm:$0xff]
        %v762 = vld [vmem:[%s200 + $0xfa8] sm:$0xff]
        %v763 = vld [vmem:[%s200 + $0xfb0] sm:$0xff]
        %v764 = vld [vmem:[%s200 + $0xfb8] sm:$0xff]
        %v765 = vld [vmem:[%s200 + $0xfc0] sm:$0xff]
        %v766 = vld [vmem:[%s200 + $0xfc8] sm:$0xff]
        %v767 = vld [vmem:[%s200 + $0xfd0] sm:$0xff]
        %v768 = vld [vmem:[%s200 + $0xfd8] sm:$0xff]
        %v769 = vld [vmem:[%s200 + $0xfe0] sm:$0xff]
        %v770 = vld [vmem:[%s200 + $0xfe8] sm:$0xff]
        %v771 = vld [vmem:[%s200 + $0xff0] sm:$0xff]
        %v772 = vld [vmem:[%s200 + $0xff8] sm:$0xff]
        %v773 = vld [vmem:[%s200 + $0x1000] sm:$0xff]
        %v774 = vld [vmem:[%s200 + $0x1008] sm:$0xff]
        %v775 = vld [vmem:[%s200 + $0x1010] sm:$0xff]
        %v776 = vld [vmem:[%s200 + $0x1018] sm:$0xff]
        %v777 = vld [vmem:[%s200 + $0x1020] sm:$0xff]
        %v778 = vld [vmem:[%s200 + $0x1028] sm:$0xff]
        %v779 = vld [vmem:[%s200 + $0x1030] sm:$0xff]
        %v780 = vld [vmem:[%s200 + $0x1038] sm:$0xff]
        %v781 = vld [vmem:[%s200 + $0x1040] sm:$0xff]
        %v782 = vld [vmem:[%s200 + $0x1048] sm:$0xff]
        %v783 = vld [vmem:[%s200 + $0x1050] sm:$0xff]
        %v784 = vld [vmem:[%s200 + $0x1058] sm:$0xff]
        %v785 = vld [vmem:[%s200 + $0x1060] sm:$0xff]
        %v786 = vld [vmem:[%s200 + $0x1068] sm:$0xff]
        %v787 = vld [vmem:[%s200 + $0x1070] sm:$0xff]
        %v788 = vld [vmem:[%s200 + $0x1078] sm:$0xff]
        %v789 = vld [vmem:[%s200 + $0x1080] sm:$0xff]
        %v790 = vld [vmem:[%s200 + $0x1088] sm:$0xff]
        %v791 = vld [vmem:[%s200 + $0x1090] sm:$0xff]
        %v792 = vld [vmem:[%s200 + $0x1098] sm:$0xff]
        %v793 = vld [vmem:[%s200 + $0x10a0] sm:$0xff]
        %v794 = vld [vmem:[%s200 + $0x10a8] sm:$0xff]
        %v795 = vld [vmem:[%s200 + $0x10b0] sm:$0xff]
        %v796 = vld [vmem:[%s200 + $0x10b8] sm:$0xff]
        %v797 = vld [vmem:[%s200 + $0x10c0] sm:$0xff]
        %v798 = vld [vmem:[%s200 + $0x10c8] sm:$0xff]
        %v799 = vld [vmem:[%s200 + $0x10d0] sm:$0xff]
        %v800 = vld [vmem:[%s200 + $0x10d8] sm:$0xff]
        %v801 = vld [vmem:[%s200 + $0x10e0] sm:$0xff]
        %v802 = vld [vmem:[%s200 + $0x10e8] sm:$0xff]
        %v803 = vld [vmem:[%s200 + $0x10f0] sm:$0xff]
        %v804 = vld [vmem:[%s200 + $0x10f8] sm:$0xff]
        %v805 = vld [vmem:[%s200 + $0x1100] sm:$0xff]
        %v806 = vld [vmem:[%s200 + $0x1108] sm:$0xff]
        %v807 = vld [vmem:[%s200 + $0x1110] sm:$0xff]
        %v808 = vld [vmem:[%s200 + $0x1118] sm:$0xff]
        %v809 = vld [vmem:[%s200 + $0x1120] sm:$0xff]
        %v810 = vld [vmem:[%s200 + $0x1128] sm:$0xff]
        %v811 = vld [vmem:[%s200 + $0x1130] sm:$0xff]
        %v812 = vld [vmem:[%s200 + $0x1138] sm:$0xff]
        %v813 = vld [vmem:[%s200 + $0x1140] sm:$0xff]
        %v814 = vld [vmem:[%s200 + $0x1148] sm:$0xff]
        %v815 = vld [vmem:[%s200 + $0x1150] sm:$0xff]
        %v816 = vld [vmem:[%s200 + $0x1158] sm:$0xff]
        %v817 = vld [vmem:[%s200 + $0x1160] sm:$0xff]
        %v818 = vld [vmem:[%s200 + $0x1168] sm:$0xff]
        %v819 = vld [vmem:[%s200 + $0x1170] sm:$0xff]
        %v820 = vld [vmem:[%s200 + $0x1178] sm:$0xff]
        %v821 = vld [vmem:[%s200 + $0x1180] sm:$0xff]
        %v822 = vld [vmem:[%s200 + $0x1188] sm:$0xff]
        %v823 = vld [vmem:[%s200 + $0x1190] sm:$0xff]
        %v824 = vld [vmem:[%s200 + $0x1198] sm:$0xff]
        %v825 = vld [vmem:[%s200 + $0x11a0] sm:$0xff]
        %v826 = vld [vmem:[%s200 + $0x11a8] sm:$0xff]
        %v827 = vld [vmem:[%s200 + $0x11b0] sm:$0xff]
        %v828 = vld [vmem:[%s200 + $0x11b8] sm:$0xff]
        %v829 = vld [vmem:[%s200 + $0x11c0] sm:$0xff]
        %v830 = vld [vmem:[%s200 + $0x11c8] sm:$0xff]
        %v831 = vld [vmem:[%s200 + $0x11d0] sm:$0xff]
        %v832 = vld [vmem:[%s200 + $0x11d8] sm:$0xff]
        %v833 = vld [vmem:[%s200 + $0x11e0] sm:$0xff]
        %v834 = vld [vmem:[%s200 + $0x11e8] sm:$0xff]
        %v835 = vld [vmem:[%s200 + $0x11f0] sm:$0xff]
        %v836 = vld [vmem:[%s200 + $0x11f8] sm:$0xff]
        %v837 = vld [vmem:[%s200 + $0x1200] sm:$0xff]
        %v838 = vld [vmem:[%s200 + $0x1208] sm:$0xff]
        %v839 = vld [vmem:[%s200 + $0x1210] sm:$0xff]
        %v840 = vld [vmem:[%s200 + $0x1218] sm:$0xff]
        %v841 = vld [vmem:[%s200 + $0x1220] sm:$0xff]
        %v842 = vld [vmem:[%s200 + $0x1228] sm:$0xff]
        %v843 = vld [vmem:[%s200 + $0x1230] sm:$0xff]
        %v844 = vld [vmem:[%s200 + $0x1238] sm:$0xff]
        %v845 = vld [vmem:[%s200 + $0x1240] sm:$0xff]
        %v846 = vld [vmem:[%s200 + $0x1248] sm:$0xff]
        %v847 = vld [vmem:[%s200 + $0x1250] sm:$0xff]
        %v848 = vld [vmem:[%s200 + $0x1258] sm:$0xff]
        %v849 = vld [vmem:[%s200 + $0x1260] sm:$0xff]
        %v850 = vld [vmem:[%s200 + $0x1268] sm:$0xff]
        %v851 = vld [vmem:[%s200 + $0x1270] sm:$0xff]
        %v852 = vld [vmem:[%s200 + $0x1278] sm:$0xff]
        %v853 = vld [vmem:[%s200 + $0x1280] sm:$0xff]
        %v854 = vld [vmem:[%s200 + $0x1288] sm:$0xff]
        %v855 = vld [vmem:[%s200 + $0x1290] sm:$0xff]
        %v856 = vld [vmem:[%s200 + $0x1298] sm:$0xff]
        %v857 = vld [vmem:[%s200 + $0x12a0] sm:$0xff]
        %v858 = vld [vmem:[%s200 + $0x12a8] sm:$0xff]
        %v859 = vld [vmem:[%s200 + $0x12b0] sm:$0xff]
        %v860 = vld [vmem:[%s200 + $0x12b8] sm:$0xff]
        %v861 = vld [vmem:[%s200 + $0x12c0] sm:$0xff]
        %v862 = vld [vmem:[%s200 + $0x12c8] sm:$0xff]
        %v863 = vld [vmem:[%s200 + $0x12d0] sm:$0xff]
        %v864 = vld [vmem:[%s200 + $0x12d8] sm:$0xff]
        %v865 = vld [vmem:[%s200 + $0x12e0] sm:$0xff]
        %v866 = vld [vmem:[%s200 + $0x12e8] sm:$0xff]
        %v867 = vld [vmem:[%s200 + $0x12f0] sm:$0xff]
        %v868 = vld [vmem:[%s200 + $0x12f8] sm:$0xff]
        %v869 = vld [vmem:[%s200 + $0x1300] sm:$0xff]
        %v870 = vld [vmem:[%s200 + $0x1308] sm:$0xff]
        %v871 = vld [vmem:[%s200 + $0x1310] sm:$0xff]
        %v872 = vld [vmem:[%s200 + $0x1318] sm:$0xff]
        %v873 = vld [vmem:[%s200 + $0x1320] sm:$0xff]
        %v874 = vld [vmem:[%s200 + $0x1328] sm:$0xff]
        %v875 = vld [vmem:[%s200 + $0x1330] sm:$0xff]
        %v876 = vld [vmem:[%s200 + $0x1338] sm:$0xff]
        %v877 = vld [vmem:[%s200 + $0x1340] sm:$0xff]
        %v878 = vld [vmem:[%s200 + $0x1348] sm:$0xff]
        %v879 = vld [vmem:[%s200 + $0x1350] sm:$0xff]
        %v880 = vld [vmem:[%s200 + $0x1358] sm:$0xff]
        %v881 = vld [vmem:[%s200 + $0x1360] sm:$0xff]
        %v882 = vld [vmem:[%s200 + $0x1368] sm:$0xff]
        %v883 = vld [vmem:[%s200 + $0x1370] sm:$0xff]
        %v884 = vld [vmem:[%s200 + $0x1378] sm:$0xff]
        %v885 = vld [vmem:[%s200 + $0x1380] sm:$0xff]
        %v886 = vld [vmem:[%s200 + $0x1388] sm:$0xff]
        %v887 = vld [vmem:[%s200 + $0x1390] sm:$0xff]
        %v888 = vld [vmem:[%s200 + $0x1398] sm:$0xff]
        %v889 = vld [vmem:[%s200 + $0x13a0] sm:$0xff]
        %v890 = vld [vmem:[%s200 + $0x13a8] sm:$0xff]
        %v891 = vld [vmem:[%s200 + $0x13b0] sm:$0xff]
        %v892 = vld [vmem:[%s200 + $0x13b8] sm:$0xff]
        %v893 = vld [vmem:[%s200 + $0x13c0] sm:$0xff]
        %v894 = vld [vmem:[%s200 + $0x13c8] sm:$0xff]
        %v895 = vld [vmem:[%s200 + $0x13d0] sm:$0xff]
        %v896 = vld [vmem:[%s200 + $0x13d8] sm:$0xff]
        %v897 = vld [vmem:[%s200 + $0x13e0] sm:$0xff]
        %v898 = vld [vmem:[%s200 + $0x13e8] sm:$0xff]
        %v899 = vld [vmem:[%s200 + $0x13f0] sm:$0xff]
        %v900 = vld [vmem:[%s200 + $0x13f8] sm:$0xff]
        %v901 = vld [vmem:[%s200 + $0x1400] sm:$0xff]
        %v902 = vld [vmem:[%s200 + $0x1408] sm:$0xff]
        %v903 = vld [vmem:[%s200 + $0x1410] sm:$0xff]
        %v904 = vld [vmem:[%s200 + $0x1418] sm:$0xff]
        %v905 = vld [vmem:[%s200 + $0x1420] sm:$0xff]
        %v906 = vld [vmem:[%s200 + $0x1428] sm:$0xff]
        %v907 = vld [vmem:[%s200 + $0x1430] sm:$0xff]
        %v908 = vld [vmem:[%s200 + $0x1438] sm:$0xff]
        %v909 = vld [vmem:[%s200 + $0x1440] sm:$0xff]
        %v910 = vld [vmem:[%s200 + $0x1448] sm:$0xff]
        %v911 = vld [vmem:[%s200 + $0x1450] sm:$0xff]
        %v912 = vld [vmem:[%s200 + $0x1458] sm:$0xff]
        %v913 = vld [vmem:[%s200 + $0x1460] sm:$0xff]
        %v914 = vld [vmem:[%s200 + $0x1468] sm:$0xff]
        %v915 = vld [vmem:[%s200 + $0x1470] sm:$0xff]
        %v916 = vld [vmem:[%s200 + $0x1478] sm:$0xff]
        %v917 = vld [vmem:[%s200 + $0x1480] sm:$0xff]
        %v918 = vld [vmem:[%s200 + $0x1488] sm:$0xff]
        %v919 = vld [vmem:[%s200 + $0x1490] sm:$0xff]
        %v920 = vld [vmem:[%s200 + $0x1498] sm:$0xff]
        %v921 = vld [vmem:[%s200 + $0x14a0] sm:$0xff]
        %v922 = vld [vmem:[%s200 + $0x14a8] sm:$0xff]
        %v923 = vld [vmem:[%s200 + $0x14b0] sm:$0xff]
        %v924 = vld [vmem:[%s200 + $0x14b8] sm:$0xff]
        %v925 = vld [vmem:[%s200 + $0x14c0] sm:$0xff]
        %v926 = vld [vmem:[%s200 + $0x14c8] sm:$0xff]
        %v927 = vld [vmem:[%s200 + $0x14d0] sm:$0xff]
        %v928 = vld [vmem:[%s200 + $0x14d8] sm:$0xff]
        %v929 = vld [vmem:[%s200 + $0x14e0] sm:$0xff]
        %v930 = vld [vmem:[%s200 + $0x14e8] sm:$0xff]
        %v931 = vld [vmem:[%s200 + $0x14f0] sm:$0xff]
        %v932 = vld [vmem:[%s200 + $0x14f8] sm:$0xff]
        %v933 = vld [vmem:[%s200 + $0x1500] sm:$0xff]
        %v934 = vld [vmem:[%s200 + $0x1508] sm:$0xff]
        %v935 = vld [vmem:[%s200 + $0x1510] sm:$0xff]
        %v936 = vld [vmem:[%s200 + $0x1518] sm:$0xff]
        %v937 = vld [vmem:[%s200 + $0x1520] sm:$0xff]
        %v938 = vld [vmem:[%s200 + $0x1528] sm:$0xff]
        %v939 = vld [vmem:[%s200 + $0x1530] sm:$0xff]
        %v940 = vld [vmem:[%s200 + $0x1538] sm:$0xff]
        %v941 = vld [vmem:[%s200 + $0x1540] sm:$0xff]
        %v942 = vld [vmem:[%s200 + $0x1548] sm:$0xff]
        %v943 = vld [vmem:[%s200 + $0x1550] sm:$0xff]
        %v944 = vld [vmem:[%s200 + $0x1558] sm:$0xff]
        %v945 = vld [vmem:[%s200 + $0x1560] sm:$0xff]
        %v946 = vld [vmem:[%s200 + $0x1568] sm:$0xff]
        %v947 = vld [vmem:[%s200 + $0x1570] sm:$0xff]
        %v948 = vld [vmem:[%s200 + $0x1578] sm:$0xff]
        %v949 = vld [vmem:[%s200 + $0x1580] sm:$0xff]
        %v950 = vld [vmem:[%s200 + $0x1588] sm:$0xff]
        %v951 = vld [vmem:[%s200 + $0x1590] sm:$0xff]
        %v952 = vld [vmem:[%s200 + $0x1598] sm:$0xff]
        %v953 = vld [vmem:[%s200 + $0x15a0] sm:$0xff]
        %v954 = vld [vmem:[%s200 + $0x15a8] sm:$0xff]
        %v955 = vld [vmem:[%s200 + $0x15b0] sm:$0xff]
        %v956 = vld [vmem:[%s200 + $0x15b8] sm:$0xff]
        %v957 = vld [vmem:[%s200 + $0x15c0] sm:$0xff]
        %v958 = vld [vmem:[%s200 + $0x15c8] sm:$0xff]
        %v959 = vld [vmem:[%s200 + $0x15d0] sm:$0xff]
        %v960 = vld [vmem:[%s200 + $0x15d8] sm:$0xff]
        %v961 = vld [vmem:[%s200 + $0x15e0] sm:$0xff]
        %v962 = vld [vmem:[%s200 + $0x15e8] sm:$0xff]
        %v963 = vld [vmem:[%s200 + $0x15f0] sm:$0xff]
        %v964 = vld [vmem:[%s200 + $0x15f8] sm:$0xff]
        %v965 = vld [vmem:[%s200 + $0x1600] sm:$0xff]
        %v966 = vld [vmem:[%s200 + $0x1608] sm:$0xff]
        %v967 = vld [vmem:[%s200 + $0x1610] sm:$0xff]
        %v968 = vld [vmem:[%s200 + $0x1618] sm:$0xff]
        %v969 = vld [vmem:[%s200 + $0x1620] sm:$0xff]
        %v970 = vld [vmem:[%s200 + $0x1628] sm:$0xff]
        %v971 = vld [vmem:[%s200 + $0x1630] sm:$0xff]
        %v972 = vld [vmem:[%s200 + $0x1638] sm:$0xff]
        %v973 = vld [vmem:[%s200 + $0x1640] sm:$0xff]
        %v974 = vld [vmem:[%s200 + $0x1648] sm:$0xff]
        %v975 = vld [vmem:[%s200 + $0x1650] sm:$0xff]
        %v976 = vld [vmem:[%s200 + $0x1658] sm:$0xff]
        %v977 = vld [vmem:[%s200 + $0x1660] sm:$0xff]
        %v978 = vld [vmem:[%s200 + $0x1668] sm:$0xff]
        %v979 = vld [vmem:[%s200 + $0x1670] sm:$0xff]
        %v980 = vld [vmem:[%s200 + $0x1678] sm:$0xff]
        %v981 = vld [vmem:[%s200 + $0x1680] sm:$0xff]
        %v982 = vld [vmem:[%s200 + $0x1688] sm:$0xff]
        %v983 = vld [vmem:[%s200 + $0x1690] sm:$0xff]
        %v984 = vld [vmem:[%s200 + $0x1698] sm:$0xff]
        %v985 = vld [vmem:[%s200 + $0x16a0] sm:$0xff]
        %v986 = vld [vmem:[%s200 + $0x16a8] sm:$0xff]
        %v987 = vld [vmem:[%s200 + $0x16b0] sm:$0xff]
        %v988 = vld [vmem:[%s200 + $0x16b8] sm:$0xff]
        %v989 = vld [vmem:[%s200 + $0x16c0] sm:$0xff]
        %v990 = vld [vmem:[%s200 + $0x16c8] sm:$0xff]
        %v991 = vld [vmem:[%s200 + $0x16d0] sm:$0xff]
        %v992 = vld [vmem:[%s200 + $0x16d8] sm:$0xff]
        %v993 = vld [vmem:[%s200 + $0x16e0] sm:$0xff]
        %v994 = vld [vmem:[%s200 + $0x16e8] sm:$0xff]
        %v995 = vld [vmem:[%s200 + $0x16f0] sm:$0xff]
        %v996 = vld [vmem:[%s200 + $0x16f8] sm:$0xff]
        %v997 = vld [vmem:[%s200 + $0x1700] sm:$0xff]
        %v998 = vld [vmem:[%s200 + $0x1708] sm:$0xff]
        %v999 = vld [vmem:[%s200 + $0x1710] sm:$0xff]
        %v1000 = vld [vmem:[%s200 + $0x1718] sm:$0xff]
        %v1001 = vld [vmem:[%s200 + $0x1720] sm:$0xff]
        %v1002 = vld [vmem:[%s200 + $0x1728] sm:$0xff]
        %v1003 = vld [vmem:[%s200 + $0x1730] sm:$0xff]
        %v1004 = vld [vmem:[%s200 + $0x1738] sm:$0xff]
        %v1005 = vld [vmem:[%s200 + $0x1740] sm:$0xff]
        %v1006 = vld [vmem:[%s200 + $0x1748] sm:$0xff]
        %v1007 = vld [vmem:[%s200 + $0x1750] sm:$0xff]
        %v1008 = vld [vmem:[%s200 + $0x1758] sm:$0xff]
        %v1009 = vld [vmem:[%s200 + $0x1760] sm:$0xff]
        %v1010 = vld [vmem:[%s200 + $0x1768] sm:$0xff]
        %v1011 = vld [vmem:[%s200 + $0x1770] sm:$0xff]
        %v1012 = vld [vmem:[%s200 + $0x1778] sm:$0xff]
        %v1013 = vld [vmem:[%s200 + $0x1780] sm:$0xff]
        %v1014 = vld [vmem:[%s200 + $0x1788] sm:$0xff]
        %v1015 = vld [vmem:[%s200 + $0x1790] sm:$0xff]
        %v1016 = vld [vmem:[%s200 + $0x1798] sm:$0xff]
        %v1017 = vld [vmem:[%s200 + $0x17a0] sm:$0xff]
        %v1018 = vld [vmem:[%s200 + $0x17a8] sm:$0xff]
        %v1019 = vld [vmem:[%s200 + $0x17b0] sm:$0xff]
        %v1020 = vld [vmem:[%s200 + $0x17b8] sm:$0xff]
        %v1021 = vld [vmem:[%s200 + $0x17c0] sm:$0xff]
        %v1022 = vld [vmem:[%s200 + $0x17c8] sm:$0xff]
        %v1023 = vld [vmem:[%s200 + $0x17d0] sm:$0xff]
        %v1024 = vld [vmem:[%s200 + $0x17d8] sm:$0xff]
        %v1025 = vld [vmem:[%s200 + $0x17e0] sm:$0xff]
        %v1026 = vld [vmem:[%s200 + $0x17e8] sm:$0xff]
        %v1027 = vld [vmem:[%s200 + $0x17f0] sm:$0xff]
        %v1028 = vld [vmem:[%s200 + $0x17f8] sm:$0xff]
        %v1029 = vld [vmem:[%s200 + $0x1800] sm:$0xff]
        %v1030 = vld [vmem:[%s200 + $0x1808] sm:$0xff]
        %v1031 = vld [vmem:[%s200 + $0x1810] sm:$0xff]
        %v1032 = vld [vmem:[%s200 + $0x1818] sm:$0xff]
        %v1033 = vld [vmem:[%s200 + $0x1820] sm:$0xff]
        %v1034 = vld [vmem:[%s200 + $0x1828] sm:$0xff]
        %v1035 = vld [vmem:[%s200 + $0x1830] sm:$0xff]
        %v1036 = vld [vmem:[%s200 + $0x1838] sm:$0xff]
        %v1037 = vld [vmem:[%s200 + $0x1840] sm:$0xff]
        %v1038 = vld [vmem:[%s200 + $0x1848] sm:$0xff]
        %v1039 = vld [vmem:[%s200 + $0x1850] sm:$0xff]
        %v1040 = vld [vmem:[%s200 + $0x1858] sm:$0xff]
        %v1041 = vld [vmem:[%s200 + $0x1860] sm:$0xff]
        %v1042 = vld [vmem:[%s200 + $0x1868] sm:$0xff]
        %v1043 = vld [vmem:[%s200 + $0x1870] sm:$0xff]
        %v1044 = vld [vmem:[%s200 + $0x1878] sm:$0xff]
        %v1045 = vld [vmem:[%s200 + $0x1880] sm:$0xff]
        %v1046 = vld [vmem:[%s200 + $0x1888] sm:$0xff]
        %v1047 = vld [vmem:[%s200 + $0x1890] sm:$0xff]
        %v1048 = vld [vmem:[%s200 + $0x1898] sm:$0xff]
        %v1049 = vld [vmem:[%s200 + $0x18a0] sm:$0xff]
        %v1050 = vld [vmem:[%s200 + $0x18a8] sm:$0xff]
        %v1051 = vld [vmem:[%s200 + $0x18b0] sm:$0xff]
        %v1052 = vld [vmem:[%s200 + $0x18b8] sm:$0xff]
        %v1053 = vld [vmem:[%s200 + $0x18c0] sm:$0xff]
        %v1054 = vld [vmem:[%s200 + $0x18c8] sm:$0xff]
        %v1055 = vld [vmem:[%s200 + $0x18d0] sm:$0xff]
        %v1056 = vld [vmem:[%s200 + $0x18d8] sm:$0xff]
        %v1057 = vld [vmem:[%s200 + $0x18e0] sm:$0xff]
        %v1058 = vld [vmem:[%s200 + $0x18e8] sm:$0xff]
        %v1059 = vld [vmem:[%s200 + $0x18f0] sm:$0xff]
        %v1060 = vld [vmem:[%s200 + $0x18f8] sm:$0xff]
        %v1061 = vld [vmem:[%s200 + $0x1900] sm:$0xff]
        %v1062 = vld [vmem:[%s200 + $0x1908] sm:$0xff]
        %v1063 = vld [vmem:[%s200 + $0x1910] sm:$0xff]
        %v1064 = vld [vmem:[%s200 + $0x1918] sm:$0xff]
        %v1065 = vld [vmem:[%s200 + $0x1920] sm:$0xff]
        %v1066 = vld [vmem:[%s200 + $0x1928] sm:$0xff]
        %v1067 = vld [vmem:[%s200 + $0x1930] sm:$0xff]
        %v1068 = vld [vmem:[%s200 + $0x1938] sm:$0xff]
        %v1069 = vld [vmem:[%s200 + $0x1940] sm:$0xff]
        %v1070 = vld [vmem:[%s200 + $0x1948] sm:$0xff]
        %v1071 = vld [vmem:[%s200 + $0x1950] sm:$0xff]
        %v1072 = vld [vmem:[%s200 + $0x1958] sm:$0xff]
        %v1073 = vld [vmem:[%s200 + $0x1960] sm:$0xff]
        %v1074 = vld [vmem:[%s200 + $0x1968] sm:$0xff]
        %v1075 = vld [vmem:[%s200 + $0x1970] sm:$0xff]
        %v1076 = vld [vmem:[%s200 + $0x1978] sm:$0xff]
        %v1077 = vld [vmem:[%s200 + $0x1980] sm:$0xff]
        %v1078 = vld [vmem:[%s200 + $0x1988] sm:$0xff]
        %v1079 = vld [vmem:[%s200 + $0x1990] sm:$0xff]
        %v1080 = vld [vmem:[%s200 + $0x1998] sm:$0xff]
        %v1081 = vld [vmem:[%s200 + $0x19a0] sm:$0xff]
        %v1082 = vld [vmem:[%s200 + $0x19a8] sm:$0xff]
        %v1083 = vld [vmem:[%s200 + $0x19b0] sm:$0xff]
        %v1084 = vld [vmem:[%s200 + $0x19b8] sm:$0xff]
        %v1085 = vld [vmem:[%s200 + $0x19c0] sm:$0xff]
        %v1086 = vld [vmem:[%s200 + $0x19c8] sm:$0xff]
        %v1087 = vld [vmem:[%s200 + $0x19d0] sm:$0xff]
        %v1088 = vld [vmem:[%s200 + $0x19d8] sm:$0xff]
        %v1089 = vld [vmem:[%s200 + $0x19e0] sm:$0xff]
        %v1090 = vld [vmem:[%s200 + $0x19e8] sm:$0xff]
        %v1091 = vld [vmem:[%s200 + $0x19f0] sm:$0xff]
        %v1092 = vld [vmem:[%s200 + $0x19f8] sm:$0xff]
        %v1093 = vld [vmem:[%s200 + $0x1a00] sm:$0xff]
        %v1094 = vld [vmem:[%s200 + $0x1a08] sm:$0xff]
        %v1095 = vld [vmem:[%s200 + $0x1a10] sm:$0xff]
        %v1096 = vld [vmem:[%s200 + $0x1a18] sm:$0xff]
        %v1097 = vld [vmem:[%s200 + $0x1a20] sm:$0xff]
        %v1098 = vld [vmem:[%s200 + $0x1a28] sm:$0xff]
        %v1099 = vld [vmem:[%s200 + $0x1a30] sm:$0xff]
        %v1100 = vld [vmem:[%s200 + $0x1a38] sm:$0xff]
        %v1101 = vld [vmem:[%s200 + $0x1a40] sm:$0xff]
        %v1102 = vld [vmem:[%s200 + $0x1a48] sm:$0xff]
        %v1103 = vld [vmem:[%s200 + $0x1a50] sm:$0xff]
        %v1104 = vld [vmem:[%s200 + $0x1a58] sm:$0xff]
        %v1105 = vld [vmem:[%s200 + $0x1a60] sm:$0xff]
        %v1106 = vld [vmem:[%s200 + $0x1a68] sm:$0xff]
        %v1107 = vld [vmem:[%s200 + $0x1a70] sm:$0xff]
        %v1108 = vld [vmem:[%s200 + $0x1a78] sm:$0xff]
        %v1109 = vld [vmem:[%s200 + $0x1a80] sm:$0xff]
        %v1110 = vld [vmem:[%s200 + $0x1a88] sm:$0xff]
        %v1111 = vld [vmem:[%s200 + $0x1a90] sm:$0xff]
        %v1112 = vld [vmem:[%s200 + $0x1a98] sm:$0xff]
        %v1113 = vld [vmem:[%s200 + $0x1aa0] sm:$0xff]
        %v1114 = vld [vmem:[%s200 + $0x1aa8] sm:$0xff]
        %v1115 = vld [vmem:[%s200 + $0x1ab0] sm:$0xff]
        %v1116 = vld [vmem:[%s200 + $0x1ab8] sm:$0xff]
        %v1117 = vld [vmem:[%s200 + $0x1ac0] sm:$0xff]
        %v1118 = vld [vmem:[%s200 + $0x1ac8] sm:$0xff]
        %v1119 = vld [vmem:[%s200 + $0x1ad0] sm:$0xff]
        %v1120 = vld [vmem:[%s200 + $0x1ad8] sm:$0xff]
        %v1121 = vld [vmem:[%s200 + $0x1ae0] sm:$0xff]
        %v1122 = vld [vmem:[%s200 + $0x1ae8] sm:$0xff]
        %v1123 = vld [vmem:[%s200 + $0x1af0] sm:$0xff]
        %v1124 = vld [vmem:[%s200 + $0x1af8] sm:$0xff]
        %v1125 = vld [vmem:[%s200 + $0x1b00] sm:$0xf]
        %v1126 = vld [vmem:[%s200 + $0x1b08] sm:$0xf]
        %v1127 = vld [vmem:[%s200 + $0x1b10] sm:$0xf]
        %v1128 = vld [vmem:[%s200 + $0x1b18] sm:$0xf]
        %v1129 = vld [vmem:[%s200 + $0x1b20] sm:$0xf]
        %v1130 = vld [vmem:[%s200 + $0x1b28] sm:$0xf]
        %v1131 = vld [vmem:[%s200 + $0x1b30] sm:$0xf]
        %v1132 = vld [vmem:[%s200 + $0x1b38] sm:$0xf]
        %v1133 = vld [vmem:[%s200 + $0x1b40] sm:$0xf]
        %v1134 = vld [vmem:[%s200 + $0x1b48] sm:$0xf]
        %v1135 = vld [vmem:[%s200 + $0x1b50] sm:$0xf]
        %v1136 = vld [vmem:[%s200 + $0x1b58] sm:$0xf]
        %v1137 = vld [vmem:[%s200 + $0x1b60] sm:$0xf]
        %v1138 = vld [vmem:[%s200 + $0x1b68] sm:$0xf]
        %v1139 = vld [vmem:[%s200 + $0x1b70] sm:$0xf]
        %v1140 = vld [vmem:[%s200 + $0x1b78] sm:$0xf]
        %v1141 = vld [vmem:[%s200 + $0x1b80] sm:$0xf]
        %v1142 = vld [vmem:[%s200 + $0x1b88] sm:$0xf]
        %v1143 = vld [vmem:[%s200 + $0x1b90] sm:$0xf]
        %v1144 = vld [vmem:[%s200 + $0x1b98] sm:$0xf]
        %v1145 = vld [vmem:[%s200 + $0x1ba0] sm:$0xf]
        %v1146 = vld [vmem:[%s200 + $0x1ba8] sm:$0xf]
        %v1147 = vld [vmem:[%s200 + $0x1bb0] sm:$0xf]
        %v1148 = vld [vmem:[%s200 + $0x1bb8] sm:$0xf]
        %v1149 = vld [vmem:[%s200 + $0x1bc0] sm:$0xf]
        %v1150 = vld [vmem:[%s200 + $0x1bc8] sm:$0xf]
        %v1151 = vld [vmem:[%s200 + $0x1bd0] sm:$0xf]
        %v1152 = vld [vmem:[%s200 + $0x1bd8] sm:$0xf]
        %v1153 = vld [vmem:[%s200 + $0x1be0] sm:$0xf]
        %v1154 = vld [vmem:[%s200 + $0x1be8] sm:$0xf]
        %v1155 = vld [vmem:[%s200 + $0x1bf0] sm:$0xf]
        %v1156 = vld [vmem:[%s200 + $0x1bf8] sm:$0xf]
        %v1157 = vld [vmem:[%s200 + $0x1c00] sm:$0xf]
        %v1158 = vld [vmem:[%s200 + $0x1c08] sm:$0xf]
        %v1159 = vld [vmem:[%s200 + $0x1c10] sm:$0xf]
        %v1160 = vld [vmem:[%s200 + $0x1c18] sm:$0xf]
        %v1161 = vld [vmem:[%s200 + $0x1c20] sm:$0xf]
        %v1162 = vld [vmem:[%s200 + $0x1c28] sm:$0xf]
        %v1163 = vld [vmem:[%s200 + $0x1c30] sm:$0xf]
        %v1164 = vld [vmem:[%s200 + $0x1c38] sm:$0xf]
        %v1165 = vld [vmem:[%s200 + $0x1c40] sm:$0xf]
        %v1166 = vld [vmem:[%s200 + $0x1c48] sm:$0xf]
        %v1167 = vld [vmem:[%s200 + $0x1c50] sm:$0xf]
        %v1168 = vld [vmem:[%s200 + $0x1c58] sm:$0xf]
        %v1169 = vld [vmem:[%s200 + $0x1c60] sm:$0xf]
        %v1170 = vld [vmem:[%s200 + $0x1c68] sm:$0xf]
        %v1171 = vld [vmem:[%s200 + $0x1c70] sm:$0xf]
        %v1172 = vld [vmem:[%s200 + $0x1c78] sm:$0xf]
        %v1173 = vld [vmem:[%s200 + $0x1c80] sm:$0xf]
        %v1174 = vld [vmem:[%s200 + $0x1c88] sm:$0xf]
        %v1175 = vld [vmem:[%s200 + $0x1c90] sm:$0xf]
        %v1176 = vld [vmem:[%s200 + $0x1c98] sm:$0xf]
        %v1177 = vld [vmem:[%s200 + $0x1ca0] sm:$0xf]
        %v1178 = vld [vmem:[%s200 + $0x1ca8] sm:$0xf]
        %v1179 = vld [vmem:[%s200 + $0x1cb0] sm:$0xf]
        %v1180 = vld [vmem:[%s200 + $0x1cb8] sm:$0xf]
        %v1181 = vld [vmem:[%s200 + $0x1cc0] sm:$0xf]
        %v1182 = vld [vmem:[%s200 + $0x1cc8] sm:$0xf]
        %v1183 = vld [vmem:[%s200 + $0x1cd0] sm:$0xf]
        %v1184 = vld [vmem:[%s200 + $0x1cd8] sm:$0xf]
        %v1185 = vld [vmem:[%s200 + $0x1ce0] sm:$0xf]
        %v1186 = vld [vmem:[%s200 + $0x1ce8] sm:$0xf]
        %v1187 = vld [vmem:[%s200 + $0x1cf0] sm:$0xf]
        %v1188 = vld [vmem:[%s200 + $0x1cf8] sm:$0xf]
        %v1189 = vld [vmem:[%s200 + $0x1d00] sm:$0xf]
        %v1190 = vld [vmem:[%s200 + $0x1d08] sm:$0xf]
        %v1191 = vld [vmem:[%s200 + $0x1d10] sm:$0xf]
        %v1192 = vld [vmem:[%s200 + $0x1d18] sm:$0xf]
        %v1193 = vld [vmem:[%s200 + $0x1d20] sm:$0xf]
        %v1194 = vld [vmem:[%s200 + $0x1d28] sm:$0xf]
        %v1195 = vld [vmem:[%s200 + $0x1d30] sm:$0xf]
        %v1196 = vld [vmem:[%s200 + $0x1d38] sm:$0xf]
        %v1215 = vcombine.high %v243, %v243
        %v1217 = vunpack.c.l.s4 1983009808
        %v1218 = vunpack.c.0.s8 %v1217
        %v1219 = vlaneseq
        %v1220 = vshrl.u32 %v1219, 7
        %v1221 = vsub.s32 %v1218, %v1220
        %v1222 = vrot.slane %v243, %v1221
        %v1224 = vunpack.c.l.s4 1983009808
        %v1225 = vunpack.c.0.s8 %v1224
        %v1226 = vlaneseq
        %v1227 = vshrl.u32 %v1226, 7
        %v1228 = vsub.s32 %v1225, %v1227
        %v1229 = vrot.slane %v1215, %v1228
        %v1230 = vcombine.high %v1222, %v1222
        %v1231 = vcombine.high %v1229, %v1229
        %v1232 = vcombine.high %v244, %v244
        %v1234 = vunpack.c.l.s4 1983009808
        %v1235 = vunpack.c.0.s8 %v1234
        %v1236 = vlaneseq
        %v1237 = vshrl.u32 %v1236, 7
        %v1238 = vsub.s32 %v1235, %v1237
        %v1239 = vrot.slane %v244, %v1238
        %v1241 = vunpack.c.l.s4 1983009808
        %v1242 = vunpack.c.0.s8 %v1241
        %v1243 = vlaneseq
        %v1244 = vshrl.u32 %v1243, 7
        %v1245 = vsub.s32 %v1242, %v1244
        %v1246 = vrot.slane %v1232, %v1245
        %v1247 = vcombine.high %v1239, %v1239
        %v1248 = vcombine.high %v1246, %v1246
        %v1249 = vcombine.high %v245, %v245
        %v1251 = vunpack.c.l.s4 1983009808
        %v1252 = vunpack.c.0.s8 %v1251
        %v1253 = vlaneseq
        %v1254 = vshrl.u32 %v1253, 7
        %v1255 = vsub.s32 %v1252, %v1254
        %v1256 = vrot.slane %v245, %v1255
        %v1258 = vunpack.c.l.s4 1983009808
        %v1259 = vunpack.c.0.s8 %v1258
        %v1260 = vlaneseq
        %v1261 = vshrl.u32 %v1260, 7
        %v1262 = vsub.s32 %v1259, %v1261
        %v1263 = vrot.slane %v1249, %v1262
        %v1264 = vcombine.high %v1256, %v1256
        %v1265 = vcombine.high %v1263, %v1263
        %v1266 = vcombine.high %v246, %v246
        %v1268 = vunpack.c.l.s4 1983009808
        %v1269 = vunpack.c.0.s8 %v1268
        %v1270 = vlaneseq
        %v1271 = vshrl.u32 %v1270, 7
        %v1272 = vsub.s32 %v1269, %v1271
        %v1273 = vrot.slane %v246, %v1272
        %v1275 = vunpack.c.l.s4 1983009808
        %v1276 = vunpack.c.0.s8 %v1275
        %v1277 = vlaneseq
        %v1278 = vshrl.u32 %v1277, 7
        %v1279 = vsub.s32 %v1276, %v1278
        %v1280 = vrot.slane %v1266, %v1279
        %v1281 = vcombine.high %v1273, %v1273
        %v1282 = vcombine.high %v1280, %v1280
        %v1283 = vcombine.high %v247, %v247
        %v1285 = vunpack.c.l.s4 1983009808
        %v1286 = vunpack.c.0.s8 %v1285
        %v1287 = vlaneseq
        %v1288 = vshrl.u32 %v1287, 7
        %v1289 = vsub.s32 %v1286, %v1288
        %v1290 = vrot.slane %v247, %v1289
        %v1292 = vunpack.c.l.s4 1983009808
        %v1293 = vunpack.c.0.s8 %v1292
        %v1294 = vlaneseq
        %v1295 = vshrl.u32 %v1294, 7
        %v1296 = vsub.s32 %v1293, %v1295
        %v1297 = vrot.slane %v1283, %v1296
        %v1298 = vcombine.high %v1290, %v1290
        %v1299 = vcombine.high %v1297, %v1297
        %v1300 = vcombine.high %v248, %v248
        %v1302 = vunpack.c.l.s4 1983009808
        %v1303 = vunpack.c.0.s8 %v1302
        %v1304 = vlaneseq
        %v1305 = vshrl.u32 %v1304, 7
        %v1306 = vsub.s32 %v1303, %v1305
        %v1307 = vrot.slane %v248, %v1306
        %v1309 = vunpack.c.l.s4 1983009808
        %v1310 = vunpack.c.0.s8 %v1309
        %v1311 = vlaneseq
        %v1312 = vshrl.u32 %v1311, 7
        %v1313 = vsub.s32 %v1310, %v1312
        %v1314 = vrot.slane %v1300, %v1313
        %v1315 = vcombine.high %v1307, %v1307
        %v1316 = vcombine.high %v1314, %v1314
        %v1317 = vcombine.high %v249, %v249
        %v1319 = vunpack.c.l.s4 1983009808
        %v1320 = vunpack.c.0.s8 %v1319
        %v1321 = vlaneseq
        %v1322 = vshrl.u32 %v1321, 7
        %v1323 = vsub.s32 %v1320, %v1322
        %v1324 = vrot.slane %v249, %v1323
        %v1326 = vunpack.c.l.s4 1983009808
        %v1327 = vunpack.c.0.s8 %v1326
        %v1328 = vlaneseq
        %v1329 = vshrl.u32 %v1328, 7
        %v1330 = vsub.s32 %v1327, %v1329
        %v1331 = vrot.slane %v1317, %v1330
        %v1332 = vcombine.high %v1324, %v1324
        %v1333 = vcombine.high %v1331, %v1331
        %v1334 = vcombine.high %v250, %v250
        %v1336 = vunpack.c.l.s4 1983009808
        %v1337 = vunpack.c.0.s8 %v1336
        %v1338 = vlaneseq
        %v1339 = vshrl.u32 %v1338, 7
        %v1340 = vsub.s32 %v1337, %v1339
        %v1341 = vrot.slane %v250, %v1340
        %v1343 = vunpack.c.l.s4 1983009808
        %v1344 = vunpack.c.0.s8 %v1343
        %v1345 = vlaneseq
        %v1346 = vshrl.u32 %v1345, 7
        %v1347 = vsub.s32 %v1344, %v1346
        %v1348 = vrot.slane %v1334, %v1347
        %v1349 = vcombine.high %v1341, %v1341
        %v1350 = vcombine.high %v1348, %v1348
        %v1351 = vcombine.high %v251, %v251
        %v1353 = vunpack.c.l.s4 1983009808
        %v1354 = vunpack.c.0.s8 %v1353
        %v1355 = vlaneseq
        %v1356 = vshrl.u32 %v1355, 7
        %v1357 = vsub.s32 %v1354, %v1356
        %v1358 = vrot.slane %v251, %v1357
        %v1360 = vunpack.c.l.s4 1983009808
        %v1361 = vunpack.c.0.s8 %v1360
        %v1362 = vlaneseq
        %v1363 = vshrl.u32 %v1362, 7
        %v1364 = vsub.s32 %v1361, %v1363
        %v1365 = vrot.slane %v1351, %v1364
        %v1366 = vcombine.high %v1358, %v1358
        %v1367 = vcombine.high %v1365, %v1365
        %v1368 = vcombine.high %v252, %v252
        %v1370 = vunpack.c.l.s4 1983009808
        %v1371 = vunpack.c.0.s8 %v1370
        %v1372 = vlaneseq
        %v1373 = vshrl.u32 %v1372, 7
        %v1374 = vsub.s32 %v1371, %v1373
        %v1375 = vrot.slane %v252, %v1374
        %v1377 = vunpack.c.l.s4 1983009808
        %v1378 = vunpack.c.0.s8 %v1377
        %v1379 = vlaneseq
        %v1380 = vshrl.u32 %v1379, 7
        %v1381 = vsub.s32 %v1378, %v1380
        %v1382 = vrot.slane %v1368, %v1381
        %v1383 = vcombine.high %v1375, %v1375
        %v1384 = vcombine.high %v1382, %v1382
        %v1385 = vcombine.high %v253, %v253
        %v1387 = vunpack.c.l.s4 1983009808
        %v1388 = vunpack.c.0.s8 %v1387
        %v1389 = vlaneseq
        %v1390 = vshrl.u32 %v1389, 7
        %v1391 = vsub.s32 %v1388, %v1390
        %v1392 = vrot.slane %v253, %v1391
        %v1394 = vunpack.c.l.s4 1983009808
        %v1395 = vunpack.c.0.s8 %v1394
        %v1396 = vlaneseq
        %v1397 = vshrl.u32 %v1396, 7
        %v1398 = vsub.s32 %v1395, %v1397
        %v1399 = vrot.slane %v1385, %v1398
        %v1400 = vcombine.high %v1392, %v1392
        %v1401 = vcombine.high %v1399, %v1399
        %v1402 = vcombine.high %v254, %v254
        %v1404 = vunpack.c.l.s4 1983009808
        %v1405 = vunpack.c.0.s8 %v1404
        %v1406 = vlaneseq
        %v1407 = vshrl.u32 %v1406, 7
        %v1408 = vsub.s32 %v1405, %v1407
        %v1409 = vrot.slane %v254, %v1408
        %v1411 = vunpack.c.l.s4 1983009808
        %v1412 = vunpack.c.0.s8 %v1411
        %v1413 = vlaneseq
        %v1414 = vshrl.u32 %v1413, 7
        %v1415 = vsub.s32 %v1412, %v1414
        %v1416 = vrot.slane %v1402, %v1415
        %v1417 = vcombine.high %v1409, %v1409
        %v1418 = vcombine.high %v1416, %v1416
        %v1419 = vcombine.high %v255, %v255
        %v1421 = vunpack.c.l.s4 1983009808
        %v1422 = vunpack.c.0.s8 %v1421
        %v1423 = vlaneseq
        %v1424 = vshrl.u32 %v1423, 7
        %v1425 = vsub.s32 %v1422, %v1424
        %v1426 = vrot.slane %v255, %v1425
        %v1428 = vunpack.c.l.s4 1983009808
        %v1429 = vunpack.c.0.s8 %v1428
        %v1430 = vlaneseq
        %v1431 = vshrl.u32 %v1430, 7
        %v1432 = vsub.s32 %v1429, %v1431
        %v1433 = vrot.slane %v1419, %v1432
        %v1434 = vcombine.high %v1426, %v1426
        %v1435 = vcombine.high %v1433, %v1433
        %v1436 = vcombine.high %v256, %v256
        %v1438 = vunpack.c.l.s4 1983009808
        %v1439 = vunpack.c.0.s8 %v1438
        %v1440 = vlaneseq
        %v1441 = vshrl.u32 %v1440, 7
        %v1442 = vsub.s32 %v1439, %v1441
        %v1443 = vrot.slane %v256, %v1442
        %v1445 = vunpack.c.l.s4 1983009808
        %v1446 = vunpack.c.0.s8 %v1445
        %v1447 = vlaneseq
        %v1448 = vshrl.u32 %v1447, 7
        %v1449 = vsub.s32 %v1446, %v1448
        %v1450 = vrot.slane %v1436, %v1449
        %v1451 = vcombine.high %v1443, %v1443
        %v1452 = vcombine.high %v1450, %v1450
        %v1453 = vcombine.high %v257, %v257
        %v1455 = vunpack.c.l.s4 1983009808
        %v1456 = vunpack.c.0.s8 %v1455
        %v1457 = vlaneseq
        %v1458 = vshrl.u32 %v1457, 7
        %v1459 = vsub.s32 %v1456, %v1458
        %v1460 = vrot.slane %v257, %v1459
        %v1462 = vunpack.c.l.s4 1983009808
        %v1463 = vunpack.c.0.s8 %v1462
        %v1464 = vlaneseq
        %v1465 = vshrl.u32 %v1464, 7
        %v1466 = vsub.s32 %v1463, %v1465
        %v1467 = vrot.slane %v1453, %v1466
        %v1468 = vcombine.high %v1460, %v1460
        %v1469 = vcombine.high %v1467, %v1467
        %v1470 = vcombine.high %v258, %v258
        %v1472 = vunpack.c.l.s4 1983009808
        %v1473 = vunpack.c.0.s8 %v1472
        %v1474 = vlaneseq
        %v1475 = vshrl.u32 %v1474, 7
        %v1476 = vsub.s32 %v1473, %v1475
        %v1477 = vrot.slane %v258, %v1476
        %v1479 = vunpack.c.l.s4 1983009808
        %v1480 = vunpack.c.0.s8 %v1479
        %v1481 = vlaneseq
        %v1482 = vshrl.u32 %v1481, 7
        %v1483 = vsub.s32 %v1480, %v1482
        %v1484 = vrot.slane %v1470, %v1483
        %v1485 = vcombine.high %v1477, %v1477
        %v1486 = vcombine.high %v1484, %v1484
        %v1487 = vcombine.high %v259, %v259
        %v1489 = vunpack.c.l.s4 1983009808
        %v1490 = vunpack.c.0.s8 %v1489
        %v1491 = vlaneseq
        %v1492 = vshrl.u32 %v1491, 7
        %v1493 = vsub.s32 %v1490, %v1492
        %v1494 = vrot.slane %v259, %v1493
        %v1496 = vunpack.c.l.s4 1983009808
        %v1497 = vunpack.c.0.s8 %v1496
        %v1498 = vlaneseq
        %v1499 = vshrl.u32 %v1498, 7
        %v1500 = vsub.s32 %v1497, %v1499
        %v1501 = vrot.slane %v1487, %v1500
        %v1502 = vcombine.high %v1494, %v1494
        %v1503 = vcombine.high %v1501, %v1501
        %v1504 = vcombine.high %v260, %v260
        %v1506 = vunpack.c.l.s4 1983009808
        %v1507 = vunpack.c.0.s8 %v1506
        %v1508 = vlaneseq
        %v1509 = vshrl.u32 %v1508, 7
        %v1510 = vsub.s32 %v1507, %v1509
        %v1511 = vrot.slane %v260, %v1510
        %v1513 = vunpack.c.l.s4 1983009808
        %v1514 = vunpack.c.0.s8 %v1513
        %v1515 = vlaneseq
        %v1516 = vshrl.u32 %v1515, 7
        %v1517 = vsub.s32 %v1514, %v1516
        %v1518 = vrot.slane %v1504, %v1517
        %v1519 = vcombine.high %v1511, %v1511
        %v1520 = vcombine.high %v1518, %v1518
        %1593 = vmatprep.subr.mxu0 0.0
        %1594 = vmatpush1.xpose.msra.mxu0 0.0
        %1595 = vmatprep.subr.mxu0 0.0
        %1596 = vmatpush1.xpose.msra.mxu0 0.0
        %1597 = vmatprep.subr.mxu0 0.0
        %1598 = vmatpush1.xpose.msra.mxu0 0.0
        %1599 = vmatprep.subr.mxu0 %v1126
        %1600 = vmatpush1.xpose.msra.mxu0 %v1125
        %1601 = vmatprep.subr.mxu0 %v1054
        %1602 = vmatpush1.xpose.msra.mxu0 %v1053
        %1603 = vmatprep.subr.mxu0 %v982
        %1604 = vmatpush1.xpose.msra.mxu0 %v981
        %1605 = vmatprep.subr.mxu0 %v910
        %1606 = vmatpush1.xpose.msra.mxu0 %v909
        %1607 = vmatprep.subr.mxu0 %v838
        %1608 = vmatpush1.xpose.msra.mxu0 %v837
        %1609 = vmatprep.subr.mxu0 %v766
        %1610 = vmatpush1.xpose.msra.mxu0 %v765
        %1611 = vmatprep.subr.mxu0 %v694
        %1612 = vmatpush1.xpose.msra.mxu0 %v693
        %1613 = vmatprep.subr.mxu0 %v622
        %1614 = vmatpush1.xpose.msra.mxu0 %v621
        %1615 = vmatprep.subr.mxu0 %v550
        %1616 = vmatpush1.xpose.msra.mxu0 %v549
        %1617 = vmatprep.subr.mxu0 %v478
        %1618 = vmatpush1.xpose.msra.mxu0 %v477
        %1619 = vmatprep.subr.mxu0 %v406
        %1620 = vmatpush1.xpose.msra.mxu0 %v405
        %1621 = vmatprep.subr.mxu0 %v334
        %1622 = vmatpush1.xpose.msra.mxu0 %v333
        %1623 = vmatprep.subr.mxu0 %v262
        %1624 = vmatpush1.xpose.msra.mxu0 %v261
        %1625 = vmatprep.subr.mxu0 0.0
        %1626 = vmatpush2.xpose.msra.mxu0 0.0
        %1627 = vmatprep.subr.mxu0 0.0
        %1628 = vmatpush2.xpose.msra.mxu0 0.0
        %1629 = vmatprep.subr.mxu0 0.0
        %1630 = vmatpush2.xpose.msra.mxu0 0.0
        %1631 = vmatprep.subr.mxu0 0.0
        %1632 = vmatpush2.xpose.msra.mxu0 0.0
        %1633 = vmatprep.subr.mxu0 0.0
        %1634 = vmatpush2.xpose.msra.mxu0 0.0
        %1635 = vmatprep.subr.mxu0 0.0
        %1636 = vmatpush2.xpose.msra.mxu0 0.0
        %1637 = vmatprep.subr.mxu0 0.0
        %1638 = vmatpush2.xpose.msra.mxu0 0.0
        %1639 = vmatprep.subr.mxu0 0.0
        %1640 = vmatpush2.xpose.msra.mxu0 0.0
        %1641 = vmatprep.subr.mxu0 0.0
        %1642 = vmatpush2.xpose.msra.mxu0 0.0
        %1643 = vmatprep.subr.mxu0 0.0
        %1644 = vmatpush2.xpose.msra.mxu0 0.0
        %1645 = vmatprep.subr.mxu0 0.0
        %1646 = vmatpush2.xpose.msra.mxu0 0.0
        %1647 = vmatprep.subr.mxu0 0.0
        %1648 = vmatpush2.xpose.msra.mxu0 0.0
        %1649 = vmatprep.subr.mxu0 0.0
        %1650 = vmatpush2.xpose.msra.mxu0 0.0
        %1651 = vmatprep.subr.mxu0 0.0
        %1652 = vmatpush2.xpose.msra.mxu0 0.0
        %1653 = vmatprep.subr.mxu0 0.0
        %1654 = vmatpush2.xpose.msra.mxu0 0.0
        %1655 = vmatprep.subr.mxu0 0.0
        %1656 = vmatpush2.xpose.msra.mxu0 0.0
        %1657 = vmatprep.mubr.f32.mxu0 %v1230
        %1658 = vmatmul.mubr.f32.gmra.mxu0 %v1222
        %v1659 = vpop.f32.mrf.mxu0
        %v1660 = vadd.f32 0.0, %v1659
        %v1661 = vpop.f32.mrf.mxu0
        %1662 = vdwg.mxu0
        %1663 = vmatprep.subr.mxu0 0.0
        %1664 = vmatpush1.xpose.msra.mxu0 0.0
        %1665 = vmatprep.subr.mxu0 0.0
        %1666 = vmatpush1.xpose.msra.mxu0 0.0
        %1667 = vmatprep.subr.mxu0 0.0
        %1668 = vmatpush1.xpose.msra.mxu0 0.0
        %1669 = vmatprep.subr.mxu0 %v1128
        %1670 = vmatpush1.xpose.msra.mxu0 %v1127
        %1671 = vmatprep.subr.mxu0 %v1056
        %1672 = vmatpush1.xpose.msra.mxu0 %v1055
        %1673 = vmatprep.subr.mxu0 %v984
        %1674 = vmatpush1.xpose.msra.mxu0 %v983
        %1675 = vmatprep.subr.mxu0 %v912
        %1676 = vmatpush1.xpose.msra.mxu0 %v911
        %1677 = vmatprep.subr.mxu0 %v840
        %1678 = vmatpush1.xpose.msra.mxu0 %v839
        %1679 = vmatprep.subr.mxu0 %v768
        %1680 = vmatpush1.xpose.msra.mxu0 %v767
        %1681 = vmatprep.subr.mxu0 %v696
        %1682 = vmatpush1.xpose.msra.mxu0 %v695
        %1683 = vmatprep.subr.mxu0 %v624
        %1684 = vmatpush1.xpose.msra.mxu0 %v623
        %1685 = vmatprep.subr.mxu0 %v552
        %1686 = vmatpush1.xpose.msra.mxu0 %v551
        %1687 = vmatprep.subr.mxu0 %v480
        %1688 = vmatpush1.xpose.msra.mxu0 %v479
        %1689 = vmatprep.subr.mxu0 %v408
        %1690 = vmatpush1.xpose.msra.mxu0 %v407
        %1691 = vmatprep.subr.mxu0 %v336
        %1692 = vmatpush1.xpose.msra.mxu0 %v335
        %1693 = vmatprep.subr.mxu0 %v264
        %1694 = vmatpush1.xpose.msra.mxu0 %v263
        %1695 = vmatprep.subr.mxu0 0.0
        %1696 = vmatpush2.xpose.msra.mxu0 0.0
        %1697 = vmatprep.subr.mxu0 0.0
        %1698 = vmatpush2.xpose.msra.mxu0 0.0
        %1699 = vmatprep.subr.mxu0 0.0
        %1700 = vmatpush2.xpose.msra.mxu0 0.0
        %1701 = vmatprep.subr.mxu0 0.0
        %1702 = vmatpush2.xpose.msra.mxu0 0.0
        %1703 = vmatprep.subr.mxu0 0.0
        %1704 = vmatpush2.xpose.msra.mxu0 0.0
        %1705 = vmatprep.subr.mxu0 0.0
        %1706 = vmatpush2.xpose.msra.mxu0 0.0
        %1707 = vmatprep.subr.mxu0 0.0
        %1708 = vmatpush2.xpose.msra.mxu0 0.0
        %1709 = vmatprep.subr.mxu0 0.0
        %1710 = vmatpush2.xpose.msra.mxu0 0.0
        %1711 = vmatprep.subr.mxu0 0.0
        %1712 = vmatpush2.xpose.msra.mxu0 0.0
        %1713 = vmatprep.subr.mxu0 0.0
        %1714 = vmatpush2.xpose.msra.mxu0 0.0
        %1715 = vmatprep.subr.mxu0 0.0
        %1716 = vmatpush2.xpose.msra.mxu0 0.0
        %1717 = vmatprep.subr.mxu0 0.0
        %1718 = vmatpush2.xpose.msra.mxu0 0.0
        %1719 = vmatprep.subr.mxu0 0.0
        %1720 = vmatpush2.xpose.msra.mxu0 0.0
        %1721 = vmatprep.subr.mxu0 0.0
        %1722 = vmatpush2.xpose.msra.mxu0 0.0
        %1723 = vmatprep.subr.mxu0 0.0
        %1724 = vmatpush2.xpose.msra.mxu0 0.0
        %1725 = vmatprep.subr.mxu0 0.0
        %1726 = vmatpush2.xpose.msra.mxu0 0.0
        %1727 = vmatprep.mubr.f32.mxu0 %v1231
        %1728 = vmatmul.mubr.f32.gmra.mxu0 %v1229
        %v1729 = vpop.f32.mrf.mxu0
        %v1730 = vadd.f32 %v1660, %v1729
        %v1731 = vpop.f32.mrf.mxu0
        %1732 = vdwg.mxu0
        %1733 = vmatprep.subr.mxu0 0.0
        %1734 = vmatpush1.xpose.msra.mxu0 0.0
        %1735 = vmatprep.subr.mxu0 0.0
        %1736 = vmatpush1.xpose.msra.mxu0 0.0
        %1737 = vmatprep.subr.mxu0 0.0
        %1738 = vmatpush1.xpose.msra.mxu0 0.0
        %1739 = vmatprep.subr.mxu0 %v1130
        %1740 = vmatpush1.xpose.msra.mxu0 %v1129
        %1741 = vmatprep.subr.mxu0 %v1058
        %1742 = vmatpush1.xpose.msra.mxu0 %v1057
        %1743 = vmatprep.subr.mxu0 %v986
        %1744 = vmatpush1.xpose.msra.mxu0 %v985
        %1745 = vmatprep.subr.mxu0 %v914
        %1746 = vmatpush1.xpose.msra.mxu0 %v913
        %1747 = vmatprep.subr.mxu0 %v842
        %1748 = vmatpush1.xpose.msra.mxu0 %v841
        %1749 = vmatprep.subr.mxu0 %v770
        %1750 = vmatpush1.xpose.msra.mxu0 %v769
        %1751 = vmatprep.subr.mxu0 %v698
        %1752 = vmatpush1.xpose.msra.mxu0 %v697
        %1753 = vmatprep.subr.mxu0 %v626
        %1754 = vmatpush1.xpose.msra.mxu0 %v625
        %1755 = vmatprep.subr.mxu0 %v554
        %1756 = vmatpush1.xpose.msra.mxu0 %v553
        %1757 = vmatprep.subr.mxu0 %v482
        %1758 = vmatpush1.xpose.msra.mxu0 %v481
        %1759 = vmatprep.subr.mxu0 %v410
        %1760 = vmatpush1.xpose.msra.mxu0 %v409
        %1761 = vmatprep.subr.mxu0 %v338
        %1762 = vmatpush1.xpose.msra.mxu0 %v337
        %1763 = vmatprep.subr.mxu0 %v266
        %1764 = vmatpush1.xpose.msra.mxu0 %v265
        %1765 = vmatprep.subr.mxu0 0.0
        %1766 = vmatpush2.xpose.msra.mxu0 0.0
        %1767 = vmatprep.subr.mxu0 0.0
        %1768 = vmatpush2.xpose.msra.mxu0 0.0
        %1769 = vmatprep.subr.mxu0 0.0
        %1770 = vmatpush2.xpose.msra.mxu0 0.0
        %1771 = vmatprep.subr.mxu0 0.0
        %1772 = vmatpush2.xpose.msra.mxu0 0.0
        %1773 = vmatprep.subr.mxu0 0.0
        %1774 = vmatpush2.xpose.msra.mxu0 0.0
        %1775 = vmatprep.subr.mxu0 0.0
        %1776 = vmatpush2.xpose.msra.mxu0 0.0
        %1777 = vmatprep.subr.mxu0 0.0
        %1778 = vmatpush2.xpose.msra.mxu0 0.0
        %1779 = vmatprep.subr.mxu0 0.0
        %1780 = vmatpush2.xpose.msra.mxu0 0.0
        %1781 = vmatprep.subr.mxu0 0.0
        %1782 = vmatpush2.xpose.msra.mxu0 0.0
        %1783 = vmatprep.subr.mxu0 0.0
        %1784 = vmatpush2.xpose.msra.mxu0 0.0
        %1785 = vmatprep.subr.mxu0 0.0
        %1786 = vmatpush2.xpose.msra.mxu0 0.0
        %1787 = vmatprep.subr.mxu0 0.0
        %1788 = vmatpush2.xpose.msra.mxu0 0.0
        %1789 = vmatprep.subr.mxu0 0.0
        %1790 = vmatpush2.xpose.msra.mxu0 0.0
        %1791 = vmatprep.subr.mxu0 0.0
        %1792 = vmatpush2.xpose.msra.mxu0 0.0
        %1793 = vmatprep.subr.mxu0 0.0
        %1794 = vmatpush2.xpose.msra.mxu0 0.0
        %1795 = vmatprep.subr.mxu0 0.0
        %1796 = vmatpush2.xpose.msra.mxu0 0.0
        %1797 = vmatprep.mubr.f32.mxu0 %v1247
        %1798 = vmatmul.mubr.f32.gmra.mxu0 %v1239
        %v1799 = vpop.f32.mrf.mxu0
        %v1800 = vadd.f32 %v1730, %v1799
        %v1801 = vpop.f32.mrf.mxu0
        %1802 = vdwg.mxu0
        %1803 = vmatprep.subr.mxu0 0.0
        %1804 = vmatpush1.xpose.msra.mxu0 0.0
        %1805 = vmatprep.subr.mxu0 0.0
        %1806 = vmatpush1.xpose.msra.mxu0 0.0
        %1807 = vmatprep.subr.mxu0 0.0
        %1808 = vmatpush1.xpose.msra.mxu0 0.0
        %1809 = vmatprep.subr.mxu0 %v1132
        %1810 = vmatpush1.xpose.msra.mxu0 %v1131
        %1811 = vmatprep.subr.mxu0 %v1060
        %1812 = vmatpush1.xpose.msra.mxu0 %v1059
        %1813 = vmatprep.subr.mxu0 %v988
        %1814 = vmatpush1.xpose.msra.mxu0 %v987
        %1815 = vmatprep.subr.mxu0 %v916
        %1816 = vmatpush1.xpose.msra.mxu0 %v915
        %1817 = vmatprep.subr.mxu0 %v844
        %1818 = vmatpush1.xpose.msra.mxu0 %v843
        %1819 = vmatprep.subr.mxu0 %v772
        %1820 = vmatpush1.xpose.msra.mxu0 %v771
        %1821 = vmatprep.subr.mxu0 %v700
        %1822 = vmatpush1.xpose.msra.mxu0 %v699
        %1823 = vmatprep.subr.mxu0 %v628
        %1824 = vmatpush1.xpose.msra.mxu0 %v627
        %1825 = vmatprep.subr.mxu0 %v556
        %1826 = vmatpush1.xpose.msra.mxu0 %v555
        %1827 = vmatprep.subr.mxu0 %v484
        %1828 = vmatpush1.xpose.msra.mxu0 %v483
        %1829 = vmatprep.subr.mxu0 %v412
        %1830 = vmatpush1.xpose.msra.mxu0 %v411
        %1831 = vmatprep.subr.mxu0 %v340
        %1832 = vmatpush1.xpose.msra.mxu0 %v339
        %1833 = vmatprep.subr.mxu0 %v268
        %1834 = vmatpush1.xpose.msra.mxu0 %v267
        %1835 = vmatprep.subr.mxu0 0.0
        %1836 = vmatpush2.xpose.msra.mxu0 0.0
        %1837 = vmatprep.subr.mxu0 0.0
        %1838 = vmatpush2.xpose.msra.mxu0 0.0
        %1839 = vmatprep.subr.mxu0 0.0
        %1840 = vmatpush2.xpose.msra.mxu0 0.0
        %1841 = vmatprep.subr.mxu0 0.0
        %1842 = vmatpush2.xpose.msra.mxu0 0.0
        %1843 = vmatprep.subr.mxu0 0.0
        %1844 = vmatpush2.xpose.msra.mxu0 0.0
        %1845 = vmatprep.subr.mxu0 0.0
        %1846 = vmatpush2.xpose.msra.mxu0 0.0
        %1847 = vmatprep.subr.mxu0 0.0
        %1848 = vmatpush2.xpose.msra.mxu0 0.0
        %1849 = vmatprep.subr.mxu0 0.0
        %1850 = vmatpush2.xpose.msra.mxu0 0.0
        %1851 = vmatprep.subr.mxu0 0.0
        %1852 = vmatpush2.xpose.msra.mxu0 0.0
        %1853 = vmatprep.subr.mxu0 0.0
        %1854 = vmatpush2.xpose.msra.mxu0 0.0
        %1855 = vmatprep.subr.mxu0 0.0
        %1856 = vmatpush2.xpose.msra.mxu0 0.0
        %1857 = vmatprep.subr.mxu0 0.0
        %1858 = vmatpush2.xpose.msra.mxu0 0.0
        %1859 = vmatprep.subr.mxu0 0.0
        %1860 = vmatpush2.xpose.msra.mxu0 0.0
        %1861 = vmatprep.subr.mxu0 0.0
        %1862 = vmatpush2.xpose.msra.mxu0 0.0
        %1863 = vmatprep.subr.mxu0 0.0
        %1864 = vmatpush2.xpose.msra.mxu0 0.0
        %1865 = vmatprep.subr.mxu0 0.0
        %1866 = vmatpush2.xpose.msra.mxu0 0.0
        %1867 = vmatprep.mubr.f32.mxu0 %v1248
        %1868 = vmatmul.mubr.f32.gmra.mxu0 %v1246
        %v1869 = vpop.f32.mrf.mxu0
        %v1870 = vadd.f32 %v1800, %v1869
        %v1871 = vpop.f32.mrf.mxu0
        %1872 = vdwg.mxu0
        %1873 = vmatprep.subr.mxu0 0.0
        %1874 = vmatpush1.xpose.msra.mxu0 0.0
        %1875 = vmatprep.subr.mxu0 0.0
        %1876 = vmatpush1.xpose.msra.mxu0 0.0
        %1877 = vmatprep.subr.mxu0 0.0
        %1878 = vmatpush1.xpose.msra.mxu0 0.0
        %1879 = vmatprep.subr.mxu0 %v1134
        %1880 = vmatpush1.xpose.msra.mxu0 %v1133
        %1881 = vmatprep.subr.mxu0 %v1062
        %1882 = vmatpush1.xpose.msra.mxu0 %v1061
        %1883 = vmatprep.subr.mxu0 %v990
        %1884 = vmatpush1.xpose.msra.mxu0 %v989
        %1885 = vmatprep.subr.mxu0 %v918
        %1886 = vmatpush1.xpose.msra.mxu0 %v917
        %1887 = vmatprep.subr.mxu0 %v846
        %1888 = vmatpush1.xpose.msra.mxu0 %v845
        %1889 = vmatprep.subr.mxu0 %v774
        %1890 = vmatpush1.xpose.msra.mxu0 %v773
        %1891 = vmatprep.subr.mxu0 %v702
        %1892 = vmatpush1.xpose.msra.mxu0 %v701
        %1893 = vmatprep.subr.mxu0 %v630
        %1894 = vmatpush1.xpose.msra.mxu0 %v629
        %1895 = vmatprep.subr.mxu0 %v558
        %1896 = vmatpush1.xpose.msra.mxu0 %v557
        %1897 = vmatprep.subr.mxu0 %v486
        %1898 = vmatpush1.xpose.msra.mxu0 %v485
        %1899 = vmatprep.subr.mxu0 %v414
        %1900 = vmatpush1.xpose.msra.mxu0 %v413
        %1901 = vmatprep.subr.mxu0 %v342
        %1902 = vmatpush1.xpose.msra.mxu0 %v341
        %1903 = vmatprep.subr.mxu0 %v270
        %1904 = vmatpush1.xpose.msra.mxu0 %v269
        %1905 = vmatprep.subr.mxu0 0.0
        %1906 = vmatpush2.xpose.msra.mxu0 0.0
        %1907 = vmatprep.subr.mxu0 0.0
        %1908 = vmatpush2.xpose.msra.mxu0 0.0
        %1909 = vmatprep.subr.mxu0 0.0
        %1910 = vmatpush2.xpose.msra.mxu0 0.0
        %1911 = vmatprep.subr.mxu0 0.0
        %1912 = vmatpush2.xpose.msra.mxu0 0.0
        %1913 = vmatprep.subr.mxu0 0.0
        %1914 = vmatpush2.xpose.msra.mxu0 0.0
        %1915 = vmatprep.subr.mxu0 0.0
        %1916 = vmatpush2.xpose.msra.mxu0 0.0
        %1917 = vmatprep.subr.mxu0 0.0
        %1918 = vmatpush2.xpose.msra.mxu0 0.0
        %1919 = vmatprep.subr.mxu0 0.0
        %1920 = vmatpush2.xpose.msra.mxu0 0.0
        %1921 = vmatprep.subr.mxu0 0.0
        %1922 = vmatpush2.xpose.msra.mxu0 0.0
        %1923 = vmatprep.subr.mxu0 0.0
        %1924 = vmatpush2.xpose.msra.mxu0 0.0
        %1925 = vmatprep.subr.mxu0 0.0
        %1926 = vmatpush2.xpose.msra.mxu0 0.0
        %1927 = vmatprep.subr.mxu0 0.0
        %1928 = vmatpush2.xpose.msra.mxu0 0.0
        %1929 = vmatprep.subr.mxu0 0.0
        %1930 = vmatpush2.xpose.msra.mxu0 0.0
        %1931 = vmatprep.subr.mxu0 0.0
        %1932 = vmatpush2.xpose.msra.mxu0 0.0
        %1933 = vmatprep.subr.mxu0 0.0
        %1934 = vmatpush2.xpose.msra.mxu0 0.0
        %1935 = vmatprep.subr.mxu0 0.0
        %1936 = vmatpush2.xpose.msra.mxu0 0.0
        %1937 = vmatprep.mubr.f32.mxu0 %v1264
        %1938 = vmatmul.mubr.f32.gmra.mxu0 %v1256
        %v1939 = vpop.f32.mrf.mxu0
        %v1940 = vadd.f32 %v1870, %v1939
        %v1941 = vpop.f32.mrf.mxu0
        %1942 = vdwg.mxu0
        %1943 = vmatprep.subr.mxu0 0.0
        %1944 = vmatpush1.xpose.msra.mxu0 0.0
        %1945 = vmatprep.subr.mxu0 0.0
        %1946 = vmatpush1.xpose.msra.mxu0 0.0
        %1947 = vmatprep.subr.mxu0 0.0
        %1948 = vmatpush1.xpose.msra.mxu0 0.0
        %1949 = vmatprep.subr.mxu0 %v1136
        %1950 = vmatpush1.xpose.msra.mxu0 %v1135
        %1951 = vmatprep.subr.mxu0 %v1064
        %1952 = vmatpush1.xpose.msra.mxu0 %v1063
        %1953 = vmatprep.subr.mxu0 %v992
        %1954 = vmatpush1.xpose.msra.mxu0 %v991
        %1955 = vmatprep.subr.mxu0 %v920
        %1956 = vmatpush1.xpose.msra.mxu0 %v919
        %1957 = vmatprep.subr.mxu0 %v848
        %1958 = vmatpush1.xpose.msra.mxu0 %v847
        %1959 = vmatprep.subr.mxu0 %v776
        %1960 = vmatpush1.xpose.msra.mxu0 %v775
        %1961 = vmatprep.subr.mxu0 %v704
        %1962 = vmatpush1.xpose.msra.mxu0 %v703
        %1963 = vmatprep.subr.mxu0 %v632
        %1964 = vmatpush1.xpose.msra.mxu0 %v631
        %1965 = vmatprep.subr.mxu0 %v560
        %1966 = vmatpush1.xpose.msra.mxu0 %v559
        %1967 = vmatprep.subr.mxu0 %v488
        %1968 = vmatpush1.xpose.msra.mxu0 %v487
        %1969 = vmatprep.subr.mxu0 %v416
        %1970 = vmatpush1.xpose.msra.mxu0 %v415
        %1971 = vmatprep.subr.mxu0 %v344
        %1972 = vmatpush1.xpose.msra.mxu0 %v343
        %1973 = vmatprep.subr.mxu0 %v272
        %1974 = vmatpush1.xpose.msra.mxu0 %v271
        %1975 = vmatprep.subr.mxu0 0.0
        %1976 = vmatpush2.xpose.msra.mxu0 0.0
        %1977 = vmatprep.subr.mxu0 0.0
        %1978 = vmatpush2.xpose.msra.mxu0 0.0
        %1979 = vmatprep.subr.mxu0 0.0
        %1980 = vmatpush2.xpose.msra.mxu0 0.0
        %1981 = vmatprep.subr.mxu0 0.0
        %1982 = vmatpush2.xpose.msra.mxu0 0.0
        %1983 = vmatprep.subr.mxu0 0.0
        %1984 = vmatpush2.xpose.msra.mxu0 0.0
        %1985 = vmatprep.subr.mxu0 0.0
        %1986 = vmatpush2.xpose.msra.mxu0 0.0
        %1987 = vmatprep.subr.mxu0 0.0
        %1988 = vmatpush2.xpose.msra.mxu0 0.0
        %1989 = vmatprep.subr.mxu0 0.0
        %1990 = vmatpush2.xpose.msra.mxu0 0.0
        %1991 = vmatprep.subr.mxu0 0.0
        %1992 = vmatpush2.xpose.msra.mxu0 0.0
        %1993 = vmatprep.subr.mxu0 0.0
        %1994 = vmatpush2.xpose.msra.mxu0 0.0
        %1995 = vmatprep.subr.mxu0 0.0
        %1996 = vmatpush2.xpose.msra.mxu0 0.0
        %1997 = vmatprep.subr.mxu0 0.0
        %1998 = vmatpush2.xpose.msra.mxu0 0.0
        %1999 = vmatprep.subr.mxu0 0.0
        %2000 = vmatpush2.xpose.msra.mxu0 0.0
        %2001 = vmatprep.subr.mxu0 0.0
        %2002 = vmatpush2.xpose.msra.mxu0 0.0
        %2003 = vmatprep.subr.mxu0 0.0
        %2004 = vmatpush2.xpose.msra.mxu0 0.0
        %2005 = vmatprep.subr.mxu0 0.0
        %2006 = vmatpush2.xpose.msra.mxu0 0.0
        %2007 = vmatprep.mubr.f32.mxu0 %v1265
        %2008 = vmatmul.mubr.f32.gmra.mxu0 %v1263
        %v2009 = vpop.f32.mrf.mxu0
        %v2010 = vadd.f32 %v1940, %v2009
        %v2011 = vpop.f32.mrf.mxu0
        %2012 = vdwg.mxu0
        %2013 = vmatprep.subr.mxu0 0.0
        %2014 = vmatpush1.xpose.msra.mxu0 0.0
        %2015 = vmatprep.subr.mxu0 0.0
        %2016 = vmatpush1.xpose.msra.mxu0 0.0
        %2017 = vmatprep.subr.mxu0 0.0
        %2018 = vmatpush1.xpose.msra.mxu0 0.0
        %2019 = vmatprep.subr.mxu0 %v1138
        %2020 = vmatpush1.xpose.msra.mxu0 %v1137
        %2021 = vmatprep.subr.mxu0 %v1066
        %2022 = vmatpush1.xpose.msra.mxu0 %v1065
        %2023 = vmatprep.subr.mxu0 %v994
        %2024 = vmatpush1.xpose.msra.mxu0 %v993
        %2025 = vmatprep.subr.mxu0 %v922
        %2026 = vmatpush1.xpose.msra.mxu0 %v921
        %2027 = vmatprep.subr.mxu0 %v850
        %2028 = vmatpush1.xpose.msra.mxu0 %v849
        %2029 = vmatprep.subr.mxu0 %v778
        %2030 = vmatpush1.xpose.msra.mxu0 %v777
        %2031 = vmatprep.subr.mxu0 %v706
        %2032 = vmatpush1.xpose.msra.mxu0 %v705
        %2033 = vmatprep.subr.mxu0 %v634
        %2034 = vmatpush1.xpose.msra.mxu0 %v633
        %2035 = vmatprep.subr.mxu0 %v562
        %2036 = vmatpush1.xpose.msra.mxu0 %v561
        %2037 = vmatprep.subr.mxu0 %v490
        %2038 = vmatpush1.xpose.msra.mxu0 %v489
        %2039 = vmatprep.subr.mxu0 %v418
        %2040 = vmatpush1.xpose.msra.mxu0 %v417
        %2041 = vmatprep.subr.mxu0 %v346
        %2042 = vmatpush1.xpose.msra.mxu0 %v345
        %2043 = vmatprep.subr.mxu0 %v274
        %2044 = vmatpush1.xpose.msra.mxu0 %v273
        %2045 = vmatprep.subr.mxu0 0.0
        %2046 = vmatpush2.xpose.msra.mxu0 0.0
        %2047 = vmatprep.subr.mxu0 0.0
        %2048 = vmatpush2.xpose.msra.mxu0 0.0
        %2049 = vmatprep.subr.mxu0 0.0
        %2050 = vmatpush2.xpose.msra.mxu0 0.0
        %2051 = vmatprep.subr.mxu0 0.0
        %2052 = vmatpush2.xpose.msra.mxu0 0.0
        %2053 = vmatprep.subr.mxu0 0.0
        %2054 = vmatpush2.xpose.msra.mxu0 0.0
        %2055 = vmatprep.subr.mxu0 0.0
        %2056 = vmatpush2.xpose.msra.mxu0 0.0
        %2057 = vmatprep.subr.mxu0 0.0
        %2058 = vmatpush2.xpose.msra.mxu0 0.0
        %2059 = vmatprep.subr.mxu0 0.0
        %2060 = vmatpush2.xpose.msra.mxu0 0.0
        %2061 = vmatprep.subr.mxu0 0.0
        %2062 = vmatpush2.xpose.msra.mxu0 0.0
        %2063 = vmatprep.subr.mxu0 0.0
        %2064 = vmatpush2.xpose.msra.mxu0 0.0
        %2065 = vmatprep.subr.mxu0 0.0
        %2066 = vmatpush2.xpose.msra.mxu0 0.0
        %2067 = vmatprep.subr.mxu0 0.0
        %2068 = vmatpush2.xpose.msra.mxu0 0.0
        %2069 = vmatprep.subr.mxu0 0.0
        %2070 = vmatpush2.xpose.msra.mxu0 0.0
        %2071 = vmatprep.subr.mxu0 0.0
        %2072 = vmatpush2.xpose.msra.mxu0 0.0
        %2073 = vmatprep.subr.mxu0 0.0
        %2074 = vmatpush2.xpose.msra.mxu0 0.0
        %2075 = vmatprep.subr.mxu0 0.0
        %2076 = vmatpush2.xpose.msra.mxu0 0.0
        %2077 = vmatprep.mubr.f32.mxu0 %v1281
        %2078 = vmatmul.mubr.f32.gmra.mxu0 %v1273
        %v2079 = vpop.f32.mrf.mxu0
        %v2080 = vadd.f32 %v2010, %v2079
        %v2081 = vpop.f32.mrf.mxu0
        %2082 = vdwg.mxu0
        %2083 = vmatprep.subr.mxu0 0.0
        %2084 = vmatpush1.xpose.msra.mxu0 0.0
        %2085 = vmatprep.subr.mxu0 0.0
        %2086 = vmatpush1.xpose.msra.mxu0 0.0
        %2087 = vmatprep.subr.mxu0 0.0
        %2088 = vmatpush1.xpose.msra.mxu0 0.0
        %2089 = vmatprep.subr.mxu0 %v1140
        %2090 = vmatpush1.xpose.msra.mxu0 %v1139
        %2091 = vmatprep.subr.mxu0 %v1068
        %2092 = vmatpush1.xpose.msra.mxu0 %v1067
        %2093 = vmatprep.subr.mxu0 %v996
        %2094 = vmatpush1.xpose.msra.mxu0 %v995
        %2095 = vmatprep.subr.mxu0 %v924
        %2096 = vmatpush1.xpose.msra.mxu0 %v923
        %2097 = vmatprep.subr.mxu0 %v852
        %2098 = vmatpush1.xpose.msra.mxu0 %v851
        %2099 = vmatprep.subr.mxu0 %v780
        %2100 = vmatpush1.xpose.msra.mxu0 %v779
        %2101 = vmatprep.subr.mxu0 %v708
        %2102 = vmatpush1.xpose.msra.mxu0 %v707
        %2103 = vmatprep.subr.mxu0 %v636
        %2104 = vmatpush1.xpose.msra.mxu0 %v635
        %2105 = vmatprep.subr.mxu0 %v564
        %2106 = vmatpush1.xpose.msra.mxu0 %v563
        %2107 = vmatprep.subr.mxu0 %v492
        %2108 = vmatpush1.xpose.msra.mxu0 %v491
        %2109 = vmatprep.subr.mxu0 %v420
        %2110 = vmatpush1.xpose.msra.mxu0 %v419
        %2111 = vmatprep.subr.mxu0 %v348
        %2112 = vmatpush1.xpose.msra.mxu0 %v347
        %2113 = vmatprep.subr.mxu0 %v276
        %2114 = vmatpush1.xpose.msra.mxu0 %v275
        %2115 = vmatprep.subr.mxu0 0.0
        %2116 = vmatpush2.xpose.msra.mxu0 0.0
        %2117 = vmatprep.subr.mxu0 0.0
        %2118 = vmatpush2.xpose.msra.mxu0 0.0
        %2119 = vmatprep.subr.mxu0 0.0
        %2120 = vmatpush2.xpose.msra.mxu0 0.0
        %2121 = vmatprep.subr.mxu0 0.0
        %2122 = vmatpush2.xpose.msra.mxu0 0.0
        %2123 = vmatprep.subr.mxu0 0.0
        %2124 = vmatpush2.xpose.msra.mxu0 0.0
        %2125 = vmatprep.subr.mxu0 0.0
        %2126 = vmatpush2.xpose.msra.mxu0 0.0
        %2127 = vmatprep.subr.mxu0 0.0
        %2128 = vmatpush2.xpose.msra.mxu0 0.0
        %2129 = vmatprep.subr.mxu0 0.0
        %2130 = vmatpush2.xpose.msra.mxu0 0.0
        %2131 = vmatprep.subr.mxu0 0.0
        %2132 = vmatpush2.xpose.msra.mxu0 0.0
        %2133 = vmatprep.subr.mxu0 0.0
        %2134 = vmatpush2.xpose.msra.mxu0 0.0
        %2135 = vmatprep.subr.mxu0 0.0
        %2136 = vmatpush2.xpose.msra.mxu0 0.0
        %2137 = vmatprep.subr.mxu0 0.0
        %2138 = vmatpush2.xpose.msra.mxu0 0.0
        %2139 = vmatprep.subr.mxu0 0.0
        %2140 = vmatpush2.xpose.msra.mxu0 0.0
        %2141 = vmatprep.subr.mxu0 0.0
        %2142 = vmatpush2.xpose.msra.mxu0 0.0
        %2143 = vmatprep.subr.mxu0 0.0
        %2144 = vmatpush2.xpose.msra.mxu0 0.0
        %2145 = vmatprep.subr.mxu0 0.0
        %2146 = vmatpush2.xpose.msra.mxu0 0.0
        %2147 = vmatprep.mubr.f32.mxu0 %v1282
        %2148 = vmatmul.mubr.f32.gmra.mxu0 %v1280
        %v2149 = vpop.f32.mrf.mxu0
        %v2150 = vadd.f32 %v2080, %v2149
        %v2151 = vpop.f32.mrf.mxu0
        %2152 = vdwg.mxu0
        %2153 = vmatprep.subr.mxu0 0.0
        %2154 = vmatpush1.xpose.msra.mxu0 0.0
        %2155 = vmatprep.subr.mxu0 0.0
        %2156 = vmatpush1.xpose.msra.mxu0 0.0
        %2157 = vmatprep.subr.mxu0 0.0
        %2158 = vmatpush1.xpose.msra.mxu0 0.0
        %2159 = vmatprep.subr.mxu0 %v1142
        %2160 = vmatpush1.xpose.msra.mxu0 %v1141
        %2161 = vmatprep.subr.mxu0 %v1070
        %2162 = vmatpush1.xpose.msra.mxu0 %v1069
        %2163 = vmatprep.subr.mxu0 %v998
        %2164 = vmatpush1.xpose.msra.mxu0 %v997
        %2165 = vmatprep.subr.mxu0 %v926
        %2166 = vmatpush1.xpose.msra.mxu0 %v925
        %2167 = vmatprep.subr.mxu0 %v854
        %2168 = vmatpush1.xpose.msra.mxu0 %v853
        %2169 = vmatprep.subr.mxu0 %v782
        %2170 = vmatpush1.xpose.msra.mxu0 %v781
        %2171 = vmatprep.subr.mxu0 %v710
        %2172 = vmatpush1.xpose.msra.mxu0 %v709
        %2173 = vmatprep.subr.mxu0 %v638
        %2174 = vmatpush1.xpose.msra.mxu0 %v637
        %2175 = vmatprep.subr.mxu0 %v566
        %2176 = vmatpush1.xpose.msra.mxu0 %v565
        %2177 = vmatprep.subr.mxu0 %v494
        %2178 = vmatpush1.xpose.msra.mxu0 %v493
        %2179 = vmatprep.subr.mxu0 %v422
        %2180 = vmatpush1.xpose.msra.mxu0 %v421
        %2181 = vmatprep.subr.mxu0 %v350
        %2182 = vmatpush1.xpose.msra.mxu0 %v349
        %2183 = vmatprep.subr.mxu0 %v278
        %2184 = vmatpush1.xpose.msra.mxu0 %v277
        %2185 = vmatprep.subr.mxu0 0.0
        %2186 = vmatpush2.xpose.msra.mxu0 0.0
        %2187 = vmatprep.subr.mxu0 0.0
        %2188 = vmatpush2.xpose.msra.mxu0 0.0
        %2189 = vmatprep.subr.mxu0 0.0
        %2190 = vmatpush2.xpose.msra.mxu0 0.0
        %2191 = vmatprep.subr.mxu0 0.0
        %2192 = vmatpush2.xpose.msra.mxu0 0.0
        %2193 = vmatprep.subr.mxu0 0.0
        %2194 = vmatpush2.xpose.msra.mxu0 0.0
        %2195 = vmatprep.subr.mxu0 0.0
        %2196 = vmatpush2.xpose.msra.mxu0 0.0
        %2197 = vmatprep.subr.mxu0 0.0
        %2198 = vmatpush2.xpose.msra.mxu0 0.0
        %2199 = vmatprep.subr.mxu0 0.0
        %2200 = vmatpush2.xpose.msra.mxu0 0.0
        %2201 = vmatprep.subr.mxu0 0.0
        %2202 = vmatpush2.xpose.msra.mxu0 0.0
        %2203 = vmatprep.subr.mxu0 0.0
        %2204 = vmatpush2.xpose.msra.mxu0 0.0
        %2205 = vmatprep.subr.mxu0 0.0
        %2206 = vmatpush2.xpose.msra.mxu0 0.0
        %2207 = vmatprep.subr.mxu0 0.0
        %2208 = vmatpush2.xpose.msra.mxu0 0.0
        %2209 = vmatprep.subr.mxu0 0.0
        %2210 = vmatpush2.xpose.msra.mxu0 0.0
        %2211 = vmatprep.subr.mxu0 0.0
        %2212 = vmatpush2.xpose.msra.mxu0 0.0
        %2213 = vmatprep.subr.mxu0 0.0
        %2214 = vmatpush2.xpose.msra.mxu0 0.0
        %2215 = vmatprep.subr.mxu0 0.0
        %2216 = vmatpush2.xpose.msra.mxu0 0.0
        %2217 = vmatprep.mubr.f32.mxu0 %v1298
        %2218 = vmatmul.mubr.f32.gmra.mxu0 %v1290
        %v2219 = vpop.f32.mrf.mxu0
        %v2220 = vadd.f32 %v2150, %v2219
        %v2221 = vpop.f32.mrf.mxu0
        %2222 = vdwg.mxu0
        %2223 = vmatprep.subr.mxu0 0.0
        %2224 = vmatpush1.xpose.msra.mxu0 0.0
        %2225 = vmatprep.subr.mxu0 0.0
        %2226 = vmatpush1.xpose.msra.mxu0 0.0
        %2227 = vmatprep.subr.mxu0 0.0
        %2228 = vmatpush1.xpose.msra.mxu0 0.0
        %2229 = vmatprep.subr.mxu0 %v1144
        %2230 = vmatpush1.xpose.msra.mxu0 %v1143
        %2231 = vmatprep.subr.mxu0 %v1072
        %2232 = vmatpush1.xpose.msra.mxu0 %v1071
        %2233 = vmatprep.subr.mxu0 %v1000
        %2234 = vmatpush1.xpose.msra.mxu0 %v999
        %2235 = vmatprep.subr.mxu0 %v928
        %2236 = vmatpush1.xpose.msra.mxu0 %v927
        %2237 = vmatprep.subr.mxu0 %v856
        %2238 = vmatpush1.xpose.msra.mxu0 %v855
        %2239 = vmatprep.subr.mxu0 %v784
        %2240 = vmatpush1.xpose.msra.mxu0 %v783
        %2241 = vmatprep.subr.mxu0 %v712
        %2242 = vmatpush1.xpose.msra.mxu0 %v711
        %2243 = vmatprep.subr.mxu0 %v640
        %2244 = vmatpush1.xpose.msra.mxu0 %v639
        %2245 = vmatprep.subr.mxu0 %v568
        %2246 = vmatpush1.xpose.msra.mxu0 %v567
        %2247 = vmatprep.subr.mxu0 %v496
        %2248 = vmatpush1.xpose.msra.mxu0 %v495
        %2249 = vmatprep.subr.mxu0 %v424
        %2250 = vmatpush1.xpose.msra.mxu0 %v423
        %2251 = vmatprep.subr.mxu0 %v352
        %2252 = vmatpush1.xpose.msra.mxu0 %v351
        %2253 = vmatprep.subr.mxu0 %v280
        %2254 = vmatpush1.xpose.msra.mxu0 %v279
        %2255 = vmatprep.subr.mxu0 0.0
        %2256 = vmatpush2.xpose.msra.mxu0 0.0
        %2257 = vmatprep.subr.mxu0 0.0
        %2258 = vmatpush2.xpose.msra.mxu0 0.0
        %2259 = vmatprep.subr.mxu0 0.0
        %2260 = vmatpush2.xpose.msra.mxu0 0.0
        %2261 = vmatprep.subr.mxu0 0.0
        %2262 = vmatpush2.xpose.msra.mxu0 0.0
        %2263 = vmatprep.subr.mxu0 0.0
        %2264 = vmatpush2.xpose.msra.mxu0 0.0
        %2265 = vmatprep.subr.mxu0 0.0
        %2266 = vmatpush2.xpose.msra.mxu0 0.0
        %2267 = vmatprep.subr.mxu0 0.0
        %2268 = vmatpush2.xpose.msra.mxu0 0.0
        %2269 = vmatprep.subr.mxu0 0.0
        %2270 = vmatpush2.xpose.msra.mxu0 0.0
        %2271 = vmatprep.subr.mxu0 0.0
        %2272 = vmatpush2.xpose.msra.mxu0 0.0
        %2273 = vmatprep.subr.mxu0 0.0
        %2274 = vmatpush2.xpose.msra.mxu0 0.0
        %2275 = vmatprep.subr.mxu0 0.0
        %2276 = vmatpush2.xpose.msra.mxu0 0.0
        %2277 = vmatprep.subr.mxu0 0.0
        %2278 = vmatpush2.xpose.msra.mxu0 0.0
        %2279 = vmatprep.subr.mxu0 0.0
        %2280 = vmatpush2.xpose.msra.mxu0 0.0
        %2281 = vmatprep.subr.mxu0 0.0
        %2282 = vmatpush2.xpose.msra.mxu0 0.0
        %2283 = vmatprep.subr.mxu0 0.0
        %2284 = vmatpush2.xpose.msra.mxu0 0.0
        %2285 = vmatprep.subr.mxu0 0.0
        %2286 = vmatpush2.xpose.msra.mxu0 0.0
        %2287 = vmatprep.mubr.f32.mxu0 %v1299
        %2288 = vmatmul.mubr.f32.gmra.mxu0 %v1297
        %v2289 = vpop.f32.mrf.mxu0
        %v2290 = vadd.f32 %v2220, %v2289
        %v2291 = vpop.f32.mrf.mxu0
        %2292 = vdwg.mxu0
        %2293 = vmatprep.subr.mxu0 0.0
        %2294 = vmatpush1.xpose.msra.mxu0 0.0
        %2295 = vmatprep.subr.mxu0 0.0
        %2296 = vmatpush1.xpose.msra.mxu0 0.0
        %2297 = vmatprep.subr.mxu0 0.0
        %2298 = vmatpush1.xpose.msra.mxu0 0.0
        %2299 = vmatprep.subr.mxu0 %v1146
        %2300 = vmatpush1.xpose.msra.mxu0 %v1145
        %2301 = vmatprep.subr.mxu0 %v1074
        %2302 = vmatpush1.xpose.msra.mxu0 %v1073
        %2303 = vmatprep.subr.mxu0 %v1002
        %2304 = vmatpush1.xpose.msra.mxu0 %v1001
        %2305 = vmatprep.subr.mxu0 %v930
        %2306 = vmatpush1.xpose.msra.mxu0 %v929
        %2307 = vmatprep.subr.mxu0 %v858
        %2308 = vmatpush1.xpose.msra.mxu0 %v857
        %2309 = vmatprep.subr.mxu0 %v786
        %2310 = vmatpush1.xpose.msra.mxu0 %v785
        %2311 = vmatprep.subr.mxu0 %v714
        %2312 = vmatpush1.xpose.msra.mxu0 %v713
        %2313 = vmatprep.subr.mxu0 %v642
        %2314 = vmatpush1.xpose.msra.mxu0 %v641
        %2315 = vmatprep.subr.mxu0 %v570
        %2316 = vmatpush1.xpose.msra.mxu0 %v569
        %2317 = vmatprep.subr.mxu0 %v498
        %2318 = vmatpush1.xpose.msra.mxu0 %v497
        %2319 = vmatprep.subr.mxu0 %v426
        %2320 = vmatpush1.xpose.msra.mxu0 %v425
        %2321 = vmatprep.subr.mxu0 %v354
        %2322 = vmatpush1.xpose.msra.mxu0 %v353
        %2323 = vmatprep.subr.mxu0 %v282
        %2324 = vmatpush1.xpose.msra.mxu0 %v281
        %2325 = vmatprep.subr.mxu0 0.0
        %2326 = vmatpush2.xpose.msra.mxu0 0.0
        %2327 = vmatprep.subr.mxu0 0.0
        %2328 = vmatpush2.xpose.msra.mxu0 0.0
        %2329 = vmatprep.subr.mxu0 0.0
        %2330 = vmatpush2.xpose.msra.mxu0 0.0
        %2331 = vmatprep.subr.mxu0 0.0
        %2332 = vmatpush2.xpose.msra.mxu0 0.0
        %2333 = vmatprep.subr.mxu0 0.0
        %2334 = vmatpush2.xpose.msra.mxu0 0.0
        %2335 = vmatprep.subr.mxu0 0.0
        %2336 = vmatpush2.xpose.msra.mxu0 0.0
        %2337 = vmatprep.subr.mxu0 0.0
        %2338 = vmatpush2.xpose.msra.mxu0 0.0
        %2339 = vmatprep.subr.mxu0 0.0
        %2340 = vmatpush2.xpose.msra.mxu0 0.0
        %2341 = vmatprep.subr.mxu0 0.0
        %2342 = vmatpush2.xpose.msra.mxu0 0.0
        %2343 = vmatprep.subr.mxu0 0.0
        %2344 = vmatpush2.xpose.msra.mxu0 0.0
        %2345 = vmatprep.subr.mxu0 0.0
        %2346 = vmatpush2.xpose.msra.mxu0 0.0
        %2347 = vmatprep.subr.mxu0 0.0
        %2348 = vmatpush2.xpose.msra.mxu0 0.0
        %2349 = vmatprep.subr.mxu0 0.0
        %2350 = vmatpush2.xpose.msra.mxu0 0.0
        %2351 = vmatprep.subr.mxu0 0.0
        %2352 = vmatpush2.xpose.msra.mxu0 0.0
        %2353 = vmatprep.subr.mxu0 0.0
        %2354 = vmatpush2.xpose.msra.mxu0 0.0
        %2355 = vmatprep.subr.mxu0 0.0
        %2356 = vmatpush2.xpose.msra.mxu0 0.0
        %2357 = vmatprep.mubr.f32.mxu0 %v1315
        %2358 = vmatmul.mubr.f32.gmra.mxu0 %v1307
        %v2359 = vpop.f32.mrf.mxu0
        %v2360 = vadd.f32 %v2290, %v2359
        %v2361 = vpop.f32.mrf.mxu0
        %2362 = vdwg.mxu0
        %2363 = vmatprep.subr.mxu0 0.0
        %2364 = vmatpush1.xpose.msra.mxu0 0.0
        %2365 = vmatprep.subr.mxu0 0.0
        %2366 = vmatpush1.xpose.msra.mxu0 0.0
        %2367 = vmatprep.subr.mxu0 0.0
        %2368 = vmatpush1.xpose.msra.mxu0 0.0
        %2369 = vmatprep.subr.mxu0 %v1148
        %2370 = vmatpush1.xpose.msra.mxu0 %v1147
        %2371 = vmatprep.subr.mxu0 %v1076
        %2372 = vmatpush1.xpose.msra.mxu0 %v1075
        %2373 = vmatprep.subr.mxu0 %v1004
        %2374 = vmatpush1.xpose.msra.mxu0 %v1003
        %2375 = vmatprep.subr.mxu0 %v932
        %2376 = vmatpush1.xpose.msra.mxu0 %v931
        %2377 = vmatprep.subr.mxu0 %v860
        %2378 = vmatpush1.xpose.msra.mxu0 %v859
        %2379 = vmatprep.subr.mxu0 %v788
        %2380 = vmatpush1.xpose.msra.mxu0 %v787
        %2381 = vmatprep.subr.mxu0 %v716
        %2382 = vmatpush1.xpose.msra.mxu0 %v715
        %2383 = vmatprep.subr.mxu0 %v644
        %2384 = vmatpush1.xpose.msra.mxu0 %v643
        %2385 = vmatprep.subr.mxu0 %v572
        %2386 = vmatpush1.xpose.msra.mxu0 %v571
        %2387 = vmatprep.subr.mxu0 %v500
        %2388 = vmatpush1.xpose.msra.mxu0 %v499
        %2389 = vmatprep.subr.mxu0 %v428
        %2390 = vmatpush1.xpose.msra.mxu0 %v427
        %2391 = vmatprep.subr.mxu0 %v356
        %2392 = vmatpush1.xpose.msra.mxu0 %v355
        %2393 = vmatprep.subr.mxu0 %v284
        %2394 = vmatpush1.xpose.msra.mxu0 %v283
        %2395 = vmatprep.subr.mxu0 0.0
        %2396 = vmatpush2.xpose.msra.mxu0 0.0
        %2397 = vmatprep.subr.mxu0 0.0
        %2398 = vmatpush2.xpose.msra.mxu0 0.0
        %2399 = vmatprep.subr.mxu0 0.0
        %2400 = vmatpush2.xpose.msra.mxu0 0.0
        %2401 = vmatprep.subr.mxu0 0.0
        %2402 = vmatpush2.xpose.msra.mxu0 0.0
        %2403 = vmatprep.subr.mxu0 0.0
        %2404 = vmatpush2.xpose.msra.mxu0 0.0
        %2405 = vmatprep.subr.mxu0 0.0
        %2406 = vmatpush2.xpose.msra.mxu0 0.0
        %2407 = vmatprep.subr.mxu0 0.0
        %2408 = vmatpush2.xpose.msra.mxu0 0.0
        %2409 = vmatprep.subr.mxu0 0.0
        %2410 = vmatpush2.xpose.msra.mxu0 0.0
        %2411 = vmatprep.subr.mxu0 0.0
        %2412 = vmatpush2.xpose.msra.mxu0 0.0
        %2413 = vmatprep.subr.mxu0 0.0
        %2414 = vmatpush2.xpose.msra.mxu0 0.0
        %2415 = vmatprep.subr.mxu0 0.0
        %2416 = vmatpush2.xpose.msra.mxu0 0.0
        %2417 = vmatprep.subr.mxu0 0.0
        %2418 = vmatpush2.xpose.msra.mxu0 0.0
        %2419 = vmatprep.subr.mxu0 0.0
        %2420 = vmatpush2.xpose.msra.mxu0 0.0
        %2421 = vmatprep.subr.mxu0 0.0
        %2422 = vmatpush2.xpose.msra.mxu0 0.0
        %2423 = vmatprep.subr.mxu0 0.0
        %2424 = vmatpush2.xpose.msra.mxu0 0.0
        %2425 = vmatprep.subr.mxu0 0.0
        %2426 = vmatpush2.xpose.msra.mxu0 0.0
        %2427 = vmatprep.mubr.f32.mxu0 %v1316
        %2428 = vmatmul.mubr.f32.gmra.mxu0 %v1314
        %v2429 = vpop.f32.mrf.mxu0
        %v2430 = vadd.f32 %v2360, %v2429
        %v2431 = vpop.f32.mrf.mxu0
        %2432 = vdwg.mxu0
        %2433 = vmatprep.subr.mxu0 0.0
        %2434 = vmatpush1.xpose.msra.mxu0 0.0
        %2435 = vmatprep.subr.mxu0 0.0
        %2436 = vmatpush1.xpose.msra.mxu0 0.0
        %2437 = vmatprep.subr.mxu0 0.0
        %2438 = vmatpush1.xpose.msra.mxu0 0.0
        %2439 = vmatprep.subr.mxu0 %v1150
        %2440 = vmatpush1.xpose.msra.mxu0 %v1149
        %2441 = vmatprep.subr.mxu0 %v1078
        %2442 = vmatpush1.xpose.msra.mxu0 %v1077
        %2443 = vmatprep.subr.mxu0 %v1006
        %2444 = vmatpush1.xpose.msra.mxu0 %v1005
        %2445 = vmatprep.subr.mxu0 %v934
        %2446 = vmatpush1.xpose.msra.mxu0 %v933
        %2447 = vmatprep.subr.mxu0 %v862
        %2448 = vmatpush1.xpose.msra.mxu0 %v861
        %2449 = vmatprep.subr.mxu0 %v790
        %2450 = vmatpush1.xpose.msra.mxu0 %v789
        %2451 = vmatprep.subr.mxu0 %v718
        %2452 = vmatpush1.xpose.msra.mxu0 %v717
        %2453 = vmatprep.subr.mxu0 %v646
        %2454 = vmatpush1.xpose.msra.mxu0 %v645
        %2455 = vmatprep.subr.mxu0 %v574
        %2456 = vmatpush1.xpose.msra.mxu0 %v573
        %2457 = vmatprep.subr.mxu0 %v502
        %2458 = vmatpush1.xpose.msra.mxu0 %v501
        %2459 = vmatprep.subr.mxu0 %v430
        %2460 = vmatpush1.xpose.msra.mxu0 %v429
        %2461 = vmatprep.subr.mxu0 %v358
        %2462 = vmatpush1.xpose.msra.mxu0 %v357
        %2463 = vmatprep.subr.mxu0 %v286
        %2464 = vmatpush1.xpose.msra.mxu0 %v285
        %2465 = vmatprep.subr.mxu0 0.0
        %2466 = vmatpush2.xpose.msra.mxu0 0.0
        %2467 = vmatprep.subr.mxu0 0.0
        %2468 = vmatpush2.xpose.msra.mxu0 0.0
        %2469 = vmatprep.subr.mxu0 0.0
        %2470 = vmatpush2.xpose.msra.mxu0 0.0
        %2471 = vmatprep.subr.mxu0 0.0
        %2472 = vmatpush2.xpose.msra.mxu0 0.0
        %2473 = vmatprep.subr.mxu0 0.0
        %2474 = vmatpush2.xpose.msra.mxu0 0.0
        %2475 = vmatprep.subr.mxu0 0.0
        %2476 = vmatpush2.xpose.msra.mxu0 0.0
        %2477 = vmatprep.subr.mxu0 0.0
        %2478 = vmatpush2.xpose.msra.mxu0 0.0
        %2479 = vmatprep.subr.mxu0 0.0
        %2480 = vmatpush2.xpose.msra.mxu0 0.0
        %2481 = vmatprep.subr.mxu0 0.0
        %2482 = vmatpush2.xpose.msra.mxu0 0.0
        %2483 = vmatprep.subr.mxu0 0.0
        %2484 = vmatpush2.xpose.msra.mxu0 0.0
        %2485 = vmatprep.subr.mxu0 0.0
        %2486 = vmatpush2.xpose.msra.mxu0 0.0
        %2487 = vmatprep.subr.mxu0 0.0
        %2488 = vmatpush2.xpose.msra.mxu0 0.0
        %2489 = vmatprep.subr.mxu0 0.0
        %2490 = vmatpush2.xpose.msra.mxu0 0.0
        %2491 = vmatprep.subr.mxu0 0.0
        %2492 = vmatpush2.xpose.msra.mxu0 0.0
        %2493 = vmatprep.subr.mxu0 0.0
        %2494 = vmatpush2.xpose.msra.mxu0 0.0
        %2495 = vmatprep.subr.mxu0 0.0
        %2496 = vmatpush2.xpose.msra.mxu0 0.0
        %2497 = vmatprep.mubr.f32.mxu0 %v1332
        %2498 = vmatmul.mubr.f32.gmra.mxu0 %v1324
        %v2499 = vpop.f32.mrf.mxu0
        %v2500 = vadd.f32 %v2430, %v2499
        %v2501 = vpop.f32.mrf.mxu0
        %2502 = vdwg.mxu0
        %2503 = vmatprep.subr.mxu0 0.0
        %2504 = vmatpush1.xpose.msra.mxu0 0.0
        %2505 = vmatprep.subr.mxu0 0.0
        %2506 = vmatpush1.xpose.msra.mxu0 0.0
        %2507 = vmatprep.subr.mxu0 0.0
        %2508 = vmatpush1.xpose.msra.mxu0 0.0
        %2509 = vmatprep.subr.mxu0 %v1152
        %2510 = vmatpush1.xpose.msra.mxu0 %v1151
        %2511 = vmatprep.subr.mxu0 %v1080
        %2512 = vmatpush1.xpose.msra.mxu0 %v1079
        %2513 = vmatprep.subr.mxu0 %v1008
        %2514 = vmatpush1.xpose.msra.mxu0 %v1007
        %2515 = vmatprep.subr.mxu0 %v936
        %2516 = vmatpush1.xpose.msra.mxu0 %v935
        %2517 = vmatprep.subr.mxu0 %v864
        %2518 = vmatpush1.xpose.msra.mxu0 %v863
        %2519 = vmatprep.subr.mxu0 %v792
        %2520 = vmatpush1.xpose.msra.mxu0 %v791
        %2521 = vmatprep.subr.mxu0 %v720
        %2522 = vmatpush1.xpose.msra.mxu0 %v719
        %2523 = vmatprep.subr.mxu0 %v648
        %2524 = vmatpush1.xpose.msra.mxu0 %v647
        %2525 = vmatprep.subr.mxu0 %v576
        %2526 = vmatpush1.xpose.msra.mxu0 %v575
        %2527 = vmatprep.subr.mxu0 %v504
        %2528 = vmatpush1.xpose.msra.mxu0 %v503
        %2529 = vmatprep.subr.mxu0 %v432
        %2530 = vmatpush1.xpose.msra.mxu0 %v431
        %2531 = vmatprep.subr.mxu0 %v360
        %2532 = vmatpush1.xpose.msra.mxu0 %v359
        %2533 = vmatprep.subr.mxu0 %v288
        %2534 = vmatpush1.xpose.msra.mxu0 %v287
        %2535 = vmatprep.subr.mxu0 0.0
        %2536 = vmatpush2.xpose.msra.mxu0 0.0
        %2537 = vmatprep.subr.mxu0 0.0
        %2538 = vmatpush2.xpose.msra.mxu0 0.0
        %2539 = vmatprep.subr.mxu0 0.0
        %2540 = vmatpush2.xpose.msra.mxu0 0.0
        %2541 = vmatprep.subr.mxu0 0.0
        %2542 = vmatpush2.xpose.msra.mxu0 0.0
        %2543 = vmatprep.subr.mxu0 0.0
        %2544 = vmatpush2.xpose.msra.mxu0 0.0
        %2545 = vmatprep.subr.mxu0 0.0
        %2546 = vmatpush2.xpose.msra.mxu0 0.0
        %2547 = vmatprep.subr.mxu0 0.0
        %2548 = vmatpush2.xpose.msra.mxu0 0.0
        %2549 = vmatprep.subr.mxu0 0.0
        %2550 = vmatpush2.xpose.msra.mxu0 0.0
        %2551 = vmatprep.subr.mxu0 0.0
        %2552 = vmatpush2.xpose.msra.mxu0 0.0
        %2553 = vmatprep.subr.mxu0 0.0
        %2554 = vmatpush2.xpose.msra.mxu0 0.0
        %2555 = vmatprep.subr.mxu0 0.0
        %2556 = vmatpush2.xpose.msra.mxu0 0.0
        %2557 = vmatprep.subr.mxu0 0.0
        %2558 = vmatpush2.xpose.msra.mxu0 0.0
        %2559 = vmatprep.subr.mxu0 0.0
        %2560 = vmatpush2.xpose.msra.mxu0 0.0
        %2561 = vmatprep.subr.mxu0 0.0
        %2562 = vmatpush2.xpose.msra.mxu0 0.0
        %2563 = vmatprep.subr.mxu0 0.0
        %2564 = vmatpush2.xpose.msra.mxu0 0.0
        %2565 = vmatprep.subr.mxu0 0.0
        %2566 = vmatpush2.xpose.msra.mxu0 0.0
        %2567 = vmatprep.mubr.f32.mxu0 %v1333
        %2568 = vmatmul.mubr.f32.gmra.mxu0 %v1331
        %v2569 = vpop.f32.mrf.mxu0
        %v2570 = vadd.f32 %v2500, %v2569
        %v2571 = vpop.f32.mrf.mxu0
        %2572 = vdwg.mxu0
        %2573 = vmatprep.subr.mxu0 0.0
        %2574 = vmatpush1.xpose.msra.mxu0 0.0
        %2575 = vmatprep.subr.mxu0 0.0
        %2576 = vmatpush1.xpose.msra.mxu0 0.0
        %2577 = vmatprep.subr.mxu0 0.0
        %2578 = vmatpush1.xpose.msra.mxu0 0.0
        %2579 = vmatprep.subr.mxu0 %v1154
        %2580 = vmatpush1.xpose.msra.mxu0 %v1153
        %2581 = vmatprep.subr.mxu0 %v1082
        %2582 = vmatpush1.xpose.msra.mxu0 %v1081
        %2583 = vmatprep.subr.mxu0 %v1010
        %2584 = vmatpush1.xpose.msra.mxu0 %v1009
        %2585 = vmatprep.subr.mxu0 %v938
        %2586 = vmatpush1.xpose.msra.mxu0 %v937
        %2587 = vmatprep.subr.mxu0 %v866
        %2588 = vmatpush1.xpose.msra.mxu0 %v865
        %2589 = vmatprep.subr.mxu0 %v794
        %2590 = vmatpush1.xpose.msra.mxu0 %v793
        %2591 = vmatprep.subr.mxu0 %v722
        %2592 = vmatpush1.xpose.msra.mxu0 %v721
        %2593 = vmatprep.subr.mxu0 %v650
        %2594 = vmatpush1.xpose.msra.mxu0 %v649
        %2595 = vmatprep.subr.mxu0 %v578
        %2596 = vmatpush1.xpose.msra.mxu0 %v577
        %2597 = vmatprep.subr.mxu0 %v506
        %2598 = vmatpush1.xpose.msra.mxu0 %v505
        %2599 = vmatprep.subr.mxu0 %v434
        %2600 = vmatpush1.xpose.msra.mxu0 %v433
        %2601 = vmatprep.subr.mxu0 %v362
        %2602 = vmatpush1.xpose.msra.mxu0 %v361
        %2603 = vmatprep.subr.mxu0 %v290
        %2604 = vmatpush1.xpose.msra.mxu0 %v289
        %2605 = vmatprep.subr.mxu0 0.0
        %2606 = vmatpush2.xpose.msra.mxu0 0.0
        %2607 = vmatprep.subr.mxu0 0.0
        %2608 = vmatpush2.xpose.msra.mxu0 0.0
        %2609 = vmatprep.subr.mxu0 0.0
        %2610 = vmatpush2.xpose.msra.mxu0 0.0
        %2611 = vmatprep.subr.mxu0 0.0
        %2612 = vmatpush2.xpose.msra.mxu0 0.0
        %2613 = vmatprep.subr.mxu0 0.0
        %2614 = vmatpush2.xpose.msra.mxu0 0.0
        %2615 = vmatprep.subr.mxu0 0.0
        %2616 = vmatpush2.xpose.msra.mxu0 0.0
        %2617 = vmatprep.subr.mxu0 0.0
        %2618 = vmatpush2.xpose.msra.mxu0 0.0
        %2619 = vmatprep.subr.mxu0 0.0
        %2620 = vmatpush2.xpose.msra.mxu0 0.0
        %2621 = vmatprep.subr.mxu0 0.0
        %2622 = vmatpush2.xpose.msra.mxu0 0.0
        %2623 = vmatprep.subr.mxu0 0.0
        %2624 = vmatpush2.xpose.msra.mxu0 0.0
        %2625 = vmatprep.subr.mxu0 0.0
        %2626 = vmatpush2.xpose.msra.mxu0 0.0
        %2627 = vmatprep.subr.mxu0 0.0
        %2628 = vmatpush2.xpose.msra.mxu0 0.0
        %2629 = vmatprep.subr.mxu0 0.0
        %2630 = vmatpush2.xpose.msra.mxu0 0.0
        %2631 = vmatprep.subr.mxu0 0.0
        %2632 = vmatpush2.xpose.msra.mxu0 0.0
        %2633 = vmatprep.subr.mxu0 0.0
        %2634 = vmatpush2.xpose.msra.mxu0 0.0
        %2635 = vmatprep.subr.mxu0 0.0
        %2636 = vmatpush2.xpose.msra.mxu0 0.0
        %2637 = vmatprep.mubr.f32.mxu0 %v1349
        %2638 = vmatmul.mubr.f32.gmra.mxu0 %v1341
        %v2639 = vpop.f32.mrf.mxu0
        %v2640 = vadd.f32 %v2570, %v2639
        %v2641 = vpop.f32.mrf.mxu0
        %2642 = vdwg.mxu0
        %2643 = vmatprep.subr.mxu0 0.0
        %2644 = vmatpush1.xpose.msra.mxu0 0.0
        %2645 = vmatprep.subr.mxu0 0.0
        %2646 = vmatpush1.xpose.msra.mxu0 0.0
        %2647 = vmatprep.subr.mxu0 0.0
        %2648 = vmatpush1.xpose.msra.mxu0 0.0
        %2649 = vmatprep.subr.mxu0 %v1156
        %2650 = vmatpush1.xpose.msra.mxu0 %v1155
        %2651 = vmatprep.subr.mxu0 %v1084
        %2652 = vmatpush1.xpose.msra.mxu0 %v1083
        %2653 = vmatprep.subr.mxu0 %v1012
        %2654 = vmatpush1.xpose.msra.mxu0 %v1011
        %2655 = vmatprep.subr.mxu0 %v940
        %2656 = vmatpush1.xpose.msra.mxu0 %v939
        %2657 = vmatprep.subr.mxu0 %v868
        %2658 = vmatpush1.xpose.msra.mxu0 %v867
        %2659 = vmatprep.subr.mxu0 %v796
        %2660 = vmatpush1.xpose.msra.mxu0 %v795
        %2661 = vmatprep.subr.mxu0 %v724
        %2662 = vmatpush1.xpose.msra.mxu0 %v723
        %2663 = vmatprep.subr.mxu0 %v652
        %2664 = vmatpush1.xpose.msra.mxu0 %v651
        %2665 = vmatprep.subr.mxu0 %v580
        %2666 = vmatpush1.xpose.msra.mxu0 %v579
        %2667 = vmatprep.subr.mxu0 %v508
        %2668 = vmatpush1.xpose.msra.mxu0 %v507
        %2669 = vmatprep.subr.mxu0 %v436
        %2670 = vmatpush1.xpose.msra.mxu0 %v435
        %2671 = vmatprep.subr.mxu0 %v364
        %2672 = vmatpush1.xpose.msra.mxu0 %v363
        %2673 = vmatprep.subr.mxu0 %v292
        %2674 = vmatpush1.xpose.msra.mxu0 %v291
        %2675 = vmatprep.subr.mxu0 0.0
        %2676 = vmatpush2.xpose.msra.mxu0 0.0
        %2677 = vmatprep.subr.mxu0 0.0
        %2678 = vmatpush2.xpose.msra.mxu0 0.0
        %2679 = vmatprep.subr.mxu0 0.0
        %2680 = vmatpush2.xpose.msra.mxu0 0.0
        %2681 = vmatprep.subr.mxu0 0.0
        %2682 = vmatpush2.xpose.msra.mxu0 0.0
        %2683 = vmatprep.subr.mxu0 0.0
        %2684 = vmatpush2.xpose.msra.mxu0 0.0
        %2685 = vmatprep.subr.mxu0 0.0
        %2686 = vmatpush2.xpose.msra.mxu0 0.0
        %2687 = vmatprep.subr.mxu0 0.0
        %2688 = vmatpush2.xpose.msra.mxu0 0.0
        %2689 = vmatprep.subr.mxu0 0.0
        %2690 = vmatpush2.xpose.msra.mxu0 0.0
        %2691 = vmatprep.subr.mxu0 0.0
        %2692 = vmatpush2.xpose.msra.mxu0 0.0
        %2693 = vmatprep.subr.mxu0 0.0
        %2694 = vmatpush2.xpose.msra.mxu0 0.0
        %2695 = vmatprep.subr.mxu0 0.0
        %2696 = vmatpush2.xpose.msra.mxu0 0.0
        %2697 = vmatprep.subr.mxu0 0.0
        %2698 = vmatpush2.xpose.msra.mxu0 0.0
        %2699 = vmatprep.subr.mxu0 0.0
        %2700 = vmatpush2.xpose.msra.mxu0 0.0
        %2701 = vmatprep.subr.mxu0 0.0
        %2702 = vmatpush2.xpose.msra.mxu0 0.0
        %2703 = vmatprep.subr.mxu0 0.0
        %2704 = vmatpush2.xpose.msra.mxu0 0.0
        %2705 = vmatprep.subr.mxu0 0.0
        %2706 = vmatpush2.xpose.msra.mxu0 0.0
        %2707 = vmatprep.mubr.f32.mxu0 %v1350
        %2708 = vmatmul.mubr.f32.gmra.mxu0 %v1348
        %v2709 = vpop.f32.mrf.mxu0
        %v2710 = vadd.f32 %v2640, %v2709
        %v2711 = vpop.f32.mrf.mxu0
        %2712 = vdwg.mxu0
        %2713 = vmatprep.subr.mxu0 0.0
        %2714 = vmatpush1.xpose.msra.mxu0 0.0
        %2715 = vmatprep.subr.mxu0 0.0
        %2716 = vmatpush1.xpose.msra.mxu0 0.0
        %2717 = vmatprep.subr.mxu0 0.0
        %2718 = vmatpush1.xpose.msra.mxu0 0.0
        %2719 = vmatprep.subr.mxu0 %v1158
        %2720 = vmatpush1.xpose.msra.mxu0 %v1157
        %2721 = vmatprep.subr.mxu0 %v1086
        %2722 = vmatpush1.xpose.msra.mxu0 %v1085
        %2723 = vmatprep.subr.mxu0 %v1014
        %2724 = vmatpush1.xpose.msra.mxu0 %v1013
        %2725 = vmatprep.subr.mxu0 %v942
        %2726 = vmatpush1.xpose.msra.mxu0 %v941
        %2727 = vmatprep.subr.mxu0 %v870
        %2728 = vmatpush1.xpose.msra.mxu0 %v869
        %2729 = vmatprep.subr.mxu0 %v798
        %2730 = vmatpush1.xpose.msra.mxu0 %v797
        %2731 = vmatprep.subr.mxu0 %v726
        %2732 = vmatpush1.xpose.msra.mxu0 %v725
        %2733 = vmatprep.subr.mxu0 %v654
        %2734 = vmatpush1.xpose.msra.mxu0 %v653
        %2735 = vmatprep.subr.mxu0 %v582
        %2736 = vmatpush1.xpose.msra.mxu0 %v581
        %2737 = vmatprep.subr.mxu0 %v510
        %2738 = vmatpush1.xpose.msra.mxu0 %v509
        %2739 = vmatprep.subr.mxu0 %v438
        %2740 = vmatpush1.xpose.msra.mxu0 %v437
        %2741 = vmatprep.subr.mxu0 %v366
        %2742 = vmatpush1.xpose.msra.mxu0 %v365
        %2743 = vmatprep.subr.mxu0 %v294
        %2744 = vmatpush1.xpose.msra.mxu0 %v293
        %2745 = vmatprep.subr.mxu0 0.0
        %2746 = vmatpush2.xpose.msra.mxu0 0.0
        %2747 = vmatprep.subr.mxu0 0.0
        %2748 = vmatpush2.xpose.msra.mxu0 0.0
        %2749 = vmatprep.subr.mxu0 0.0
        %2750 = vmatpush2.xpose.msra.mxu0 0.0
        %2751 = vmatprep.subr.mxu0 0.0
        %2752 = vmatpush2.xpose.msra.mxu0 0.0
        %2753 = vmatprep.subr.mxu0 0.0
        %2754 = vmatpush2.xpose.msra.mxu0 0.0
        %2755 = vmatprep.subr.mxu0 0.0
        %2756 = vmatpush2.xpose.msra.mxu0 0.0
        %2757 = vmatprep.subr.mxu0 0.0
        %2758 = vmatpush2.xpose.msra.mxu0 0.0
        %2759 = vmatprep.subr.mxu0 0.0
        %2760 = vmatpush2.xpose.msra.mxu0 0.0
        %2761 = vmatprep.subr.mxu0 0.0
        %2762 = vmatpush2.xpose.msra.mxu0 0.0
        %2763 = vmatprep.subr.mxu0 0.0
        %2764 = vmatpush2.xpose.msra.mxu0 0.0
        %2765 = vmatprep.subr.mxu0 0.0
        %2766 = vmatpush2.xpose.msra.mxu0 0.0
        %2767 = vmatprep.subr.mxu0 0.0
        %2768 = vmatpush2.xpose.msra.mxu0 0.0
        %2769 = vmatprep.subr.mxu0 0.0
        %2770 = vmatpush2.xpose.msra.mxu0 0.0
        %2771 = vmatprep.subr.mxu0 0.0
        %2772 = vmatpush2.xpose.msra.mxu0 0.0
        %2773 = vmatprep.subr.mxu0 0.0
        %2774 = vmatpush2.xpose.msra.mxu0 0.0
        %2775 = vmatprep.subr.mxu0 0.0
        %2776 = vmatpush2.xpose.msra.mxu0 0.0
        %2777 = vmatprep.mubr.f32.mxu0 %v1366
        %2778 = vmatmul.mubr.f32.gmra.mxu0 %v1358
        %v2779 = vpop.f32.mrf.mxu0
        %v2780 = vadd.f32 %v2710, %v2779
        %v2781 = vpop.f32.mrf.mxu0
        %2782 = vdwg.mxu0
        %2783 = vmatprep.subr.mxu0 0.0
        %2784 = vmatpush1.xpose.msra.mxu0 0.0
        %2785 = vmatprep.subr.mxu0 0.0
        %2786 = vmatpush1.xpose.msra.mxu0 0.0
        %2787 = vmatprep.subr.mxu0 0.0
        %2788 = vmatpush1.xpose.msra.mxu0 0.0
        %2789 = vmatprep.subr.mxu0 %v1160
        %2790 = vmatpush1.xpose.msra.mxu0 %v1159
        %2791 = vmatprep.subr.mxu0 %v1088
        %2792 = vmatpush1.xpose.msra.mxu0 %v1087
        %2793 = vmatprep.subr.mxu0 %v1016
        %2794 = vmatpush1.xpose.msra.mxu0 %v1015
        %2795 = vmatprep.subr.mxu0 %v944
        %2796 = vmatpush1.xpose.msra.mxu0 %v943
        %2797 = vmatprep.subr.mxu0 %v872
        %2798 = vmatpush1.xpose.msra.mxu0 %v871
        %2799 = vmatprep.subr.mxu0 %v800
        %2800 = vmatpush1.xpose.msra.mxu0 %v799
        %2801 = vmatprep.subr.mxu0 %v728
        %2802 = vmatpush1.xpose.msra.mxu0 %v727
        %2803 = vmatprep.subr.mxu0 %v656
        %2804 = vmatpush1.xpose.msra.mxu0 %v655
        %2805 = vmatprep.subr.mxu0 %v584
        %2806 = vmatpush1.xpose.msra.mxu0 %v583
        %2807 = vmatprep.subr.mxu0 %v512
        %2808 = vmatpush1.xpose.msra.mxu0 %v511
        %2809 = vmatprep.subr.mxu0 %v440
        %2810 = vmatpush1.xpose.msra.mxu0 %v439
        %2811 = vmatprep.subr.mxu0 %v368
        %2812 = vmatpush1.xpose.msra.mxu0 %v367
        %2813 = vmatprep.subr.mxu0 %v296
        %2814 = vmatpush1.xpose.msra.mxu0 %v295
        %2815 = vmatprep.subr.mxu0 0.0
        %2816 = vmatpush2.xpose.msra.mxu0 0.0
        %2817 = vmatprep.subr.mxu0 0.0
        %2818 = vmatpush2.xpose.msra.mxu0 0.0
        %2819 = vmatprep.subr.mxu0 0.0
        %2820 = vmatpush2.xpose.msra.mxu0 0.0
        %2821 = vmatprep.subr.mxu0 0.0
        %2822 = vmatpush2.xpose.msra.mxu0 0.0
        %2823 = vmatprep.subr.mxu0 0.0
        %2824 = vmatpush2.xpose.msra.mxu0 0.0
        %2825 = vmatprep.subr.mxu0 0.0
        %2826 = vmatpush2.xpose.msra.mxu0 0.0
        %2827 = vmatprep.subr.mxu0 0.0
        %2828 = vmatpush2.xpose.msra.mxu0 0.0
        %2829 = vmatprep.subr.mxu0 0.0
        %2830 = vmatpush2.xpose.msra.mxu0 0.0
        %2831 = vmatprep.subr.mxu0 0.0
        %2832 = vmatpush2.xpose.msra.mxu0 0.0
        %2833 = vmatprep.subr.mxu0 0.0
        %2834 = vmatpush2.xpose.msra.mxu0 0.0
        %2835 = vmatprep.subr.mxu0 0.0
        %2836 = vmatpush2.xpose.msra.mxu0 0.0
        %2837 = vmatprep.subr.mxu0 0.0
        %2838 = vmatpush2.xpose.msra.mxu0 0.0
        %2839 = vmatprep.subr.mxu0 0.0
        %2840 = vmatpush2.xpose.msra.mxu0 0.0
        %2841 = vmatprep.subr.mxu0 0.0
        %2842 = vmatpush2.xpose.msra.mxu0 0.0
        %2843 = vmatprep.subr.mxu0 0.0
        %2844 = vmatpush2.xpose.msra.mxu0 0.0
        %2845 = vmatprep.subr.mxu0 0.0
        %2846 = vmatpush2.xpose.msra.mxu0 0.0
        %2847 = vmatprep.mubr.f32.mxu0 %v1367
        %2848 = vmatmul.mubr.f32.gmra.mxu0 %v1365
        %v2849 = vpop.f32.mrf.mxu0
        %v2850 = vadd.f32 %v2780, %v2849
        %v2851 = vpop.f32.mrf.mxu0
        %2852 = vdwg.mxu0
        %2853 = vmatprep.subr.mxu0 0.0
        %2854 = vmatpush1.xpose.msra.mxu0 0.0
        %2855 = vmatprep.subr.mxu0 0.0
        %2856 = vmatpush1.xpose.msra.mxu0 0.0
        %2857 = vmatprep.subr.mxu0 0.0
        %2858 = vmatpush1.xpose.msra.mxu0 0.0
        %2859 = vmatprep.subr.mxu0 %v1162
        %2860 = vmatpush1.xpose.msra.mxu0 %v1161
        %2861 = vmatprep.subr.mxu0 %v1090
        %2862 = vmatpush1.xpose.msra.mxu0 %v1089
        %2863 = vmatprep.subr.mxu0 %v1018
        %2864 = vmatpush1.xpose.msra.mxu0 %v1017
        %2865 = vmatprep.subr.mxu0 %v946
        %2866 = vmatpush1.xpose.msra.mxu0 %v945
        %2867 = vmatprep.subr.mxu0 %v874
        %2868 = vmatpush1.xpose.msra.mxu0 %v873
        %2869 = vmatprep.subr.mxu0 %v802
        %2870 = vmatpush1.xpose.msra.mxu0 %v801
        %2871 = vmatprep.subr.mxu0 %v730
        %2872 = vmatpush1.xpose.msra.mxu0 %v729
        %2873 = vmatprep.subr.mxu0 %v658
        %2874 = vmatpush1.xpose.msra.mxu0 %v657
        %2875 = vmatprep.subr.mxu0 %v586
        %2876 = vmatpush1.xpose.msra.mxu0 %v585
        %2877 = vmatprep.subr.mxu0 %v514
        %2878 = vmatpush1.xpose.msra.mxu0 %v513
        %2879 = vmatprep.subr.mxu0 %v442
        %2880 = vmatpush1.xpose.msra.mxu0 %v441
        %2881 = vmatprep.subr.mxu0 %v370
        %2882 = vmatpush1.xpose.msra.mxu0 %v369
        %2883 = vmatprep.subr.mxu0 %v298
        %2884 = vmatpush1.xpose.msra.mxu0 %v297
        %2885 = vmatprep.subr.mxu0 0.0
        %2886 = vmatpush2.xpose.msra.mxu0 0.0
        %2887 = vmatprep.subr.mxu0 0.0
        %2888 = vmatpush2.xpose.msra.mxu0 0.0
        %2889 = vmatprep.subr.mxu0 0.0
        %2890 = vmatpush2.xpose.msra.mxu0 0.0
        %2891 = vmatprep.subr.mxu0 0.0
        %2892 = vmatpush2.xpose.msra.mxu0 0.0
        %2893 = vmatprep.subr.mxu0 0.0
        %2894 = vmatpush2.xpose.msra.mxu0 0.0
        %2895 = vmatprep.subr.mxu0 0.0
        %2896 = vmatpush2.xpose.msra.mxu0 0.0
        %2897 = vmatprep.subr.mxu0 0.0
        %2898 = vmatpush2.xpose.msra.mxu0 0.0
        %2899 = vmatprep.subr.mxu0 0.0
        %2900 = vmatpush2.xpose.msra.mxu0 0.0
        %2901 = vmatprep.subr.mxu0 0.0
        %2902 = vmatpush2.xpose.msra.mxu0 0.0
        %2903 = vmatprep.subr.mxu0 0.0
        %2904 = vmatpush2.xpose.msra.mxu0 0.0
        %2905 = vmatprep.subr.mxu0 0.0
        %2906 = vmatpush2.xpose.msra.mxu0 0.0
        %2907 = vmatprep.subr.mxu0 0.0
        %2908 = vmatpush2.xpose.msra.mxu0 0.0
        %2909 = vmatprep.subr.mxu0 0.0
        %2910 = vmatpush2.xpose.msra.mxu0 0.0
        %2911 = vmatprep.subr.mxu0 0.0
        %2912 = vmatpush2.xpose.msra.mxu0 0.0
        %2913 = vmatprep.subr.mxu0 0.0
        %2914 = vmatpush2.xpose.msra.mxu0 0.0
        %2915 = vmatprep.subr.mxu0 0.0
        %2916 = vmatpush2.xpose.msra.mxu0 0.0
        %2917 = vmatprep.mubr.f32.mxu0 %v1383
        %2918 = vmatmul.mubr.f32.gmra.mxu0 %v1375
        %v2919 = vpop.f32.mrf.mxu0
        %v2920 = vadd.f32 %v2850, %v2919
        %v2921 = vpop.f32.mrf.mxu0
        %2922 = vdwg.mxu0
        %2923 = vmatprep.subr.mxu0 0.0
        %2924 = vmatpush1.xpose.msra.mxu0 0.0
        %2925 = vmatprep.subr.mxu0 0.0
        %2926 = vmatpush1.xpose.msra.mxu0 0.0
        %2927 = vmatprep.subr.mxu0 0.0
        %2928 = vmatpush1.xpose.msra.mxu0 0.0
        %2929 = vmatprep.subr.mxu0 %v1164
        %2930 = vmatpush1.xpose.msra.mxu0 %v1163
        %2931 = vmatprep.subr.mxu0 %v1092
        %2932 = vmatpush1.xpose.msra.mxu0 %v1091
        %2933 = vmatprep.subr.mxu0 %v1020
        %2934 = vmatpush1.xpose.msra.mxu0 %v1019
        %2935 = vmatprep.subr.mxu0 %v948
        %2936 = vmatpush1.xpose.msra.mxu0 %v947
        %2937 = vmatprep.subr.mxu0 %v876
        %2938 = vmatpush1.xpose.msra.mxu0 %v875
        %2939 = vmatprep.subr.mxu0 %v804
        %2940 = vmatpush1.xpose.msra.mxu0 %v803
        %2941 = vmatprep.subr.mxu0 %v732
        %2942 = vmatpush1.xpose.msra.mxu0 %v731
        %2943 = vmatprep.subr.mxu0 %v660
        %2944 = vmatpush1.xpose.msra.mxu0 %v659
        %2945 = vmatprep.subr.mxu0 %v588
        %2946 = vmatpush1.xpose.msra.mxu0 %v587
        %2947 = vmatprep.subr.mxu0 %v516
        %2948 = vmatpush1.xpose.msra.mxu0 %v515
        %2949 = vmatprep.subr.mxu0 %v444
        %2950 = vmatpush1.xpose.msra.mxu0 %v443
        %2951 = vmatprep.subr.mxu0 %v372
        %2952 = vmatpush1.xpose.msra.mxu0 %v371
        %2953 = vmatprep.subr.mxu0 %v300
        %2954 = vmatpush1.xpose.msra.mxu0 %v299
        %2955 = vmatprep.subr.mxu0 0.0
        %2956 = vmatpush2.xpose.msra.mxu0 0.0
        %2957 = vmatprep.subr.mxu0 0.0
        %2958 = vmatpush2.xpose.msra.mxu0 0.0
        %2959 = vmatprep.subr.mxu0 0.0
        %2960 = vmatpush2.xpose.msra.mxu0 0.0
        %2961 = vmatprep.subr.mxu0 0.0
        %2962 = vmatpush2.xpose.msra.mxu0 0.0
        %2963 = vmatprep.subr.mxu0 0.0
        %2964 = vmatpush2.xpose.msra.mxu0 0.0
        %2965 = vmatprep.subr.mxu0 0.0
        %2966 = vmatpush2.xpose.msra.mxu0 0.0
        %2967 = vmatprep.subr.mxu0 0.0
        %2968 = vmatpush2.xpose.msra.mxu0 0.0
        %2969 = vmatprep.subr.mxu0 0.0
        %2970 = vmatpush2.xpose.msra.mxu0 0.0
        %2971 = vmatprep.subr.mxu0 0.0
        %2972 = vmatpush2.xpose.msra.mxu0 0.0
        %2973 = vmatprep.subr.mxu0 0.0
        %2974 = vmatpush2.xpose.msra.mxu0 0.0
        %2975 = vmatprep.subr.mxu0 0.0
        %2976 = vmatpush2.xpose.msra.mxu0 0.0
        %2977 = vmatprep.subr.mxu0 0.0
        %2978 = vmatpush2.xpose.msra.mxu0 0.0
        %2979 = vmatprep.subr.mxu0 0.0
        %2980 = vmatpush2.xpose.msra.mxu0 0.0
        %2981 = vmatprep.subr.mxu0 0.0
        %2982 = vmatpush2.xpose.msra.mxu0 0.0
        %2983 = vmatprep.subr.mxu0 0.0
        %2984 = vmatpush2.xpose.msra.mxu0 0.0
        %2985 = vmatprep.subr.mxu0 0.0
        %2986 = vmatpush2.xpose.msra.mxu0 0.0
        %2987 = vmatprep.mubr.f32.mxu0 %v1384
        %2988 = vmatmul.mubr.f32.gmra.mxu0 %v1382
        %v2989 = vpop.f32.mrf.mxu0
        %v2990 = vadd.f32 %v2920, %v2989
        %v2991 = vpop.f32.mrf.mxu0
        %2992 = vdwg.mxu0
        %2993 = vmatprep.subr.mxu0 0.0
        %2994 = vmatpush1.xpose.msra.mxu0 0.0
        %2995 = vmatprep.subr.mxu0 0.0
        %2996 = vmatpush1.xpose.msra.mxu0 0.0
        %2997 = vmatprep.subr.mxu0 0.0
        %2998 = vmatpush1.xpose.msra.mxu0 0.0
        %2999 = vmatprep.subr.mxu0 %v1166
        %3000 = vmatpush1.xpose.msra.mxu0 %v1165
        %3001 = vmatprep.subr.mxu0 %v1094
        %3002 = vmatpush1.xpose.msra.mxu0 %v1093
        %3003 = vmatprep.subr.mxu0 %v1022
        %3004 = vmatpush1.xpose.msra.mxu0 %v1021
        %3005 = vmatprep.subr.mxu0 %v950
        %3006 = vmatpush1.xpose.msra.mxu0 %v949
        %3007 = vmatprep.subr.mxu0 %v878
        %3008 = vmatpush1.xpose.msra.mxu0 %v877
        %3009 = vmatprep.subr.mxu0 %v806
        %3010 = vmatpush1.xpose.msra.mxu0 %v805
        %3011 = vmatprep.subr.mxu0 %v734
        %3012 = vmatpush1.xpose.msra.mxu0 %v733
        %3013 = vmatprep.subr.mxu0 %v662
        %3014 = vmatpush1.xpose.msra.mxu0 %v661
        %3015 = vmatprep.subr.mxu0 %v590
        %3016 = vmatpush1.xpose.msra.mxu0 %v589
        %3017 = vmatprep.subr.mxu0 %v518
        %3018 = vmatpush1.xpose.msra.mxu0 %v517
        %3019 = vmatprep.subr.mxu0 %v446
        %3020 = vmatpush1.xpose.msra.mxu0 %v445
        %3021 = vmatprep.subr.mxu0 %v374
        %3022 = vmatpush1.xpose.msra.mxu0 %v373
        %3023 = vmatprep.subr.mxu0 %v302
        %3024 = vmatpush1.xpose.msra.mxu0 %v301
        %3025 = vmatprep.subr.mxu0 0.0
        %3026 = vmatpush2.xpose.msra.mxu0 0.0
        %3027 = vmatprep.subr.mxu0 0.0
        %3028 = vmatpush2.xpose.msra.mxu0 0.0
        %3029 = vmatprep.subr.mxu0 0.0
        %3030 = vmatpush2.xpose.msra.mxu0 0.0
        %3031 = vmatprep.subr.mxu0 0.0
        %3032 = vmatpush2.xpose.msra.mxu0 0.0
        %3033 = vmatprep.subr.mxu0 0.0
        %3034 = vmatpush2.xpose.msra.mxu0 0.0
        %3035 = vmatprep.subr.mxu0 0.0
        %3036 = vmatpush2.xpose.msra.mxu0 0.0
        %3037 = vmatprep.subr.mxu0 0.0
        %3038 = vmatpush2.xpose.msra.mxu0 0.0
        %3039 = vmatprep.subr.mxu0 0.0
        %3040 = vmatpush2.xpose.msra.mxu0 0.0
        %3041 = vmatprep.subr.mxu0 0.0
        %3042 = vmatpush2.xpose.msra.mxu0 0.0
        %3043 = vmatprep.subr.mxu0 0.0
        %3044 = vmatpush2.xpose.msra.mxu0 0.0
        %3045 = vmatprep.subr.mxu0 0.0
        %3046 = vmatpush2.xpose.msra.mxu0 0.0
        %3047 = vmatprep.subr.mxu0 0.0
        %3048 = vmatpush2.xpose.msra.mxu0 0.0
        %3049 = vmatprep.subr.mxu0 0.0
        %3050 = vmatpush2.xpose.msra.mxu0 0.0
        %3051 = vmatprep.subr.mxu0 0.0
        %3052 = vmatpush2.xpose.msra.mxu0 0.0
        %3053 = vmatprep.subr.mxu0 0.0
        %3054 = vmatpush2.xpose.msra.mxu0 0.0
        %3055 = vmatprep.subr.mxu0 0.0
        %3056 = vmatpush2.xpose.msra.mxu0 0.0
        %3057 = vmatprep.mubr.f32.mxu0 %v1400
        %3058 = vmatmul.mubr.f32.gmra.mxu0 %v1392
        %v3059 = vpop.f32.mrf.mxu0
        %v3060 = vadd.f32 %v2990, %v3059
        %v3061 = vpop.f32.mrf.mxu0
        %3062 = vdwg.mxu0
        %3063 = vmatprep.subr.mxu0 0.0
        %3064 = vmatpush1.xpose.msra.mxu0 0.0
        %3065 = vmatprep.subr.mxu0 0.0
        %3066 = vmatpush1.xpose.msra.mxu0 0.0
        %3067 = vmatprep.subr.mxu0 0.0
        %3068 = vmatpush1.xpose.msra.mxu0 0.0
        %3069 = vmatprep.subr.mxu0 %v1168
        %3070 = vmatpush1.xpose.msra.mxu0 %v1167
        %3071 = vmatprep.subr.mxu0 %v1096
        %3072 = vmatpush1.xpose.msra.mxu0 %v1095
        %3073 = vmatprep.subr.mxu0 %v1024
        %3074 = vmatpush1.xpose.msra.mxu0 %v1023
        %3075 = vmatprep.subr.mxu0 %v952
        %3076 = vmatpush1.xpose.msra.mxu0 %v951
        %3077 = vmatprep.subr.mxu0 %v880
        %3078 = vmatpush1.xpose.msra.mxu0 %v879
        %3079 = vmatprep.subr.mxu0 %v808
        %3080 = vmatpush1.xpose.msra.mxu0 %v807
        %3081 = vmatprep.subr.mxu0 %v736
        %3082 = vmatpush1.xpose.msra.mxu0 %v735
        %3083 = vmatprep.subr.mxu0 %v664
        %3084 = vmatpush1.xpose.msra.mxu0 %v663
        %3085 = vmatprep.subr.mxu0 %v592
        %3086 = vmatpush1.xpose.msra.mxu0 %v591
        %3087 = vmatprep.subr.mxu0 %v520
        %3088 = vmatpush1.xpose.msra.mxu0 %v519
        %3089 = vmatprep.subr.mxu0 %v448
        %3090 = vmatpush1.xpose.msra.mxu0 %v447
        %3091 = vmatprep.subr.mxu0 %v376
        %3092 = vmatpush1.xpose.msra.mxu0 %v375
        %3093 = vmatprep.subr.mxu0 %v304
        %3094 = vmatpush1.xpose.msra.mxu0 %v303
        %3095 = vmatprep.subr.mxu0 0.0
        %3096 = vmatpush2.xpose.msra.mxu0 0.0
        %3097 = vmatprep.subr.mxu0 0.0
        %3098 = vmatpush2.xpose.msra.mxu0 0.0
        %3099 = vmatprep.subr.mxu0 0.0
        %3100 = vmatpush2.xpose.msra.mxu0 0.0
        %3101 = vmatprep.subr.mxu0 0.0
        %3102 = vmatpush2.xpose.msra.mxu0 0.0
        %3103 = vmatprep.subr.mxu0 0.0
        %3104 = vmatpush2.xpose.msra.mxu0 0.0
        %3105 = vmatprep.subr.mxu0 0.0
        %3106 = vmatpush2.xpose.msra.mxu0 0.0
        %3107 = vmatprep.subr.mxu0 0.0
        %3108 = vmatpush2.xpose.msra.mxu0 0.0
        %3109 = vmatprep.subr.mxu0 0.0
        %3110 = vmatpush2.xpose.msra.mxu0 0.0
        %3111 = vmatprep.subr.mxu0 0.0
        %3112 = vmatpush2.xpose.msra.mxu0 0.0
        %3113 = vmatprep.subr.mxu0 0.0
        %3114 = vmatpush2.xpose.msra.mxu0 0.0
        %3115 = vmatprep.subr.mxu0 0.0
        %3116 = vmatpush2.xpose.msra.mxu0 0.0
        %3117 = vmatprep.subr.mxu0 0.0
        %3118 = vmatpush2.xpose.msra.mxu0 0.0
        %3119 = vmatprep.subr.mxu0 0.0
        %3120 = vmatpush2.xpose.msra.mxu0 0.0
        %3121 = vmatprep.subr.mxu0 0.0
        %3122 = vmatpush2.xpose.msra.mxu0 0.0
        %3123 = vmatprep.subr.mxu0 0.0
        %3124 = vmatpush2.xpose.msra.mxu0 0.0
        %3125 = vmatprep.subr.mxu0 0.0
        %3126 = vmatpush2.xpose.msra.mxu0 0.0
        %3127 = vmatprep.mubr.f32.mxu0 %v1401
        %3128 = vmatmul.mubr.f32.gmra.mxu0 %v1399
        %v3129 = vpop.f32.mrf.mxu0
        %v3130 = vadd.f32 %v3060, %v3129
        %v3131 = vpop.f32.mrf.mxu0
        %3132 = vdwg.mxu0
        %3133 = vmatprep.subr.mxu0 0.0
        %3134 = vmatpush1.xpose.msra.mxu0 0.0
        %3135 = vmatprep.subr.mxu0 0.0
        %3136 = vmatpush1.xpose.msra.mxu0 0.0
        %3137 = vmatprep.subr.mxu0 0.0
        %3138 = vmatpush1.xpose.msra.mxu0 0.0
        %3139 = vmatprep.subr.mxu0 %v1170
        %3140 = vmatpush1.xpose.msra.mxu0 %v1169
        %3141 = vmatprep.subr.mxu0 %v1098
        %3142 = vmatpush1.xpose.msra.mxu0 %v1097
        %3143 = vmatprep.subr.mxu0 %v1026
        %3144 = vmatpush1.xpose.msra.mxu0 %v1025
        %3145 = vmatprep.subr.mxu0 %v954
        %3146 = vmatpush1.xpose.msra.mxu0 %v953
        %3147 = vmatprep.subr.mxu0 %v882
        %3148 = vmatpush1.xpose.msra.mxu0 %v881
        %3149 = vmatprep.subr.mxu0 %v810
        %3150 = vmatpush1.xpose.msra.mxu0 %v809
        %3151 = vmatprep.subr.mxu0 %v738
        %3152 = vmatpush1.xpose.msra.mxu0 %v737
        %3153 = vmatprep.subr.mxu0 %v666
        %3154 = vmatpush1.xpose.msra.mxu0 %v665
        %3155 = vmatprep.subr.mxu0 %v594
        %3156 = vmatpush1.xpose.msra.mxu0 %v593
        %3157 = vmatprep.subr.mxu0 %v522
        %3158 = vmatpush1.xpose.msra.mxu0 %v521
        %3159 = vmatprep.subr.mxu0 %v450
        %3160 = vmatpush1.xpose.msra.mxu0 %v449
        %3161 = vmatprep.subr.mxu0 %v378
        %3162 = vmatpush1.xpose.msra.mxu0 %v377
        %3163 = vmatprep.subr.mxu0 %v306
        %3164 = vmatpush1.xpose.msra.mxu0 %v305
        %3165 = vmatprep.subr.mxu0 0.0
        %3166 = vmatpush2.xpose.msra.mxu0 0.0
        %3167 = vmatprep.subr.mxu0 0.0
        %3168 = vmatpush2.xpose.msra.mxu0 0.0
        %3169 = vmatprep.subr.mxu0 0.0
        %3170 = vmatpush2.xpose.msra.mxu0 0.0
        %3171 = vmatprep.subr.mxu0 0.0
        %3172 = vmatpush2.xpose.msra.mxu0 0.0
        %3173 = vmatprep.subr.mxu0 0.0
        %3174 = vmatpush2.xpose.msra.mxu0 0.0
        %3175 = vmatprep.subr.mxu0 0.0
        %3176 = vmatpush2.xpose.msra.mxu0 0.0
        %3177 = vmatprep.subr.mxu0 0.0
        %3178 = vmatpush2.xpose.msra.mxu0 0.0
        %3179 = vmatprep.subr.mxu0 0.0
        %3180 = vmatpush2.xpose.msra.mxu0 0.0
        %3181 = vmatprep.subr.mxu0 0.0
        %3182 = vmatpush2.xpose.msra.mxu0 0.0
        %3183 = vmatprep.subr.mxu0 0.0
        %3184 = vmatpush2.xpose.msra.mxu0 0.0
        %3185 = vmatprep.subr.mxu0 0.0
        %3186 = vmatpush2.xpose.msra.mxu0 0.0
        %3187 = vmatprep.subr.mxu0 0.0
        %3188 = vmatpush2.xpose.msra.mxu0 0.0
        %3189 = vmatprep.subr.mxu0 0.0
        %3190 = vmatpush2.xpose.msra.mxu0 0.0
        %3191 = vmatprep.subr.mxu0 0.0
        %3192 = vmatpush2.xpose.msra.mxu0 0.0
        %3193 = vmatprep.subr.mxu0 0.0
        %3194 = vmatpush2.xpose.msra.mxu0 0.0
        %3195 = vmatprep.subr.mxu0 0.0
        %3196 = vmatpush2.xpose.msra.mxu0 0.0
        %3197 = vmatprep.mubr.f32.mxu0 %v1417
        %3198 = vmatmul.mubr.f32.gmra.mxu0 %v1409
        %v3199 = vpop.f32.mrf.mxu0
        %v3200 = vadd.f32 %v3130, %v3199
        %v3201 = vpop.f32.mrf.mxu0
        %3202 = vdwg.mxu0
        %3203 = vmatprep.subr.mxu0 0.0
        %3204 = vmatpush1.xpose.msra.mxu0 0.0
        %3205 = vmatprep.subr.mxu0 0.0
        %3206 = vmatpush1.xpose.msra.mxu0 0.0
        %3207 = vmatprep.subr.mxu0 0.0
        %3208 = vmatpush1.xpose.msra.mxu0 0.0
        %3209 = vmatprep.subr.mxu0 %v1172
        %3210 = vmatpush1.xpose.msra.mxu0 %v1171
        %3211 = vmatprep.subr.mxu0 %v1100
        %3212 = vmatpush1.xpose.msra.mxu0 %v1099
        %3213 = vmatprep.subr.mxu0 %v1028
        %3214 = vmatpush1.xpose.msra.mxu0 %v1027
        %3215 = vmatprep.subr.mxu0 %v956
        %3216 = vmatpush1.xpose.msra.mxu0 %v955
        %3217 = vmatprep.subr.mxu0 %v884
        %3218 = vmatpush1.xpose.msra.mxu0 %v883
        %3219 = vmatprep.subr.mxu0 %v812
        %3220 = vmatpush1.xpose.msra.mxu0 %v811
        %3221 = vmatprep.subr.mxu0 %v740
        %3222 = vmatpush1.xpose.msra.mxu0 %v739
        %3223 = vmatprep.subr.mxu0 %v668
        %3224 = vmatpush1.xpose.msra.mxu0 %v667
        %3225 = vmatprep.subr.mxu0 %v596
        %3226 = vmatpush1.xpose.msra.mxu0 %v595
        %3227 = vmatprep.subr.mxu0 %v524
        %3228 = vmatpush1.xpose.msra.mxu0 %v523
        %3229 = vmatprep.subr.mxu0 %v452
        %3230 = vmatpush1.xpose.msra.mxu0 %v451
        %3231 = vmatprep.subr.mxu0 %v380
        %3232 = vmatpush1.xpose.msra.mxu0 %v379
        %3233 = vmatprep.subr.mxu0 %v308
        %3234 = vmatpush1.xpose.msra.mxu0 %v307
        %3235 = vmatprep.subr.mxu0 0.0
        %3236 = vmatpush2.xpose.msra.mxu0 0.0
        %3237 = vmatprep.subr.mxu0 0.0
        %3238 = vmatpush2.xpose.msra.mxu0 0.0
        %3239 = vmatprep.subr.mxu0 0.0
        %3240 = vmatpush2.xpose.msra.mxu0 0.0
        %3241 = vmatprep.subr.mxu0 0.0
        %3242 = vmatpush2.xpose.msra.mxu0 0.0
        %3243 = vmatprep.subr.mxu0 0.0
        %3244 = vmatpush2.xpose.msra.mxu0 0.0
        %3245 = vmatprep.subr.mxu0 0.0
        %3246 = vmatpush2.xpose.msra.mxu0 0.0
        %3247 = vmatprep.subr.mxu0 0.0
        %3248 = vmatpush2.xpose.msra.mxu0 0.0
        %3249 = vmatprep.subr.mxu0 0.0
        %3250 = vmatpush2.xpose.msra.mxu0 0.0
        %3251 = vmatprep.subr.mxu0 0.0
        %3252 = vmatpush2.xpose.msra.mxu0 0.0
        %3253 = vmatprep.subr.mxu0 0.0
        %3254 = vmatpush2.xpose.msra.mxu0 0.0
        %3255 = vmatprep.subr.mxu0 0.0
        %3256 = vmatpush2.xpose.msra.mxu0 0.0
        %3257 = vmatprep.subr.mxu0 0.0
        %3258 = vmatpush2.xpose.msra.mxu0 0.0
        %3259 = vmatprep.subr.mxu0 0.0
        %3260 = vmatpush2.xpose.msra.mxu0 0.0
        %3261 = vmatprep.subr.mxu0 0.0
        %3262 = vmatpush2.xpose.msra.mxu0 0.0
        %3263 = vmatprep.subr.mxu0 0.0
        %3264 = vmatpush2.xpose.msra.mxu0 0.0
        %3265 = vmatprep.subr.mxu0 0.0
        %3266 = vmatpush2.xpose.msra.mxu0 0.0
        %3267 = vmatprep.mubr.f32.mxu0 %v1418
        %3268 = vmatmul.mubr.f32.gmra.mxu0 %v1416
        %v3269 = vpop.f32.mrf.mxu0
        %v3270 = vadd.f32 %v3200, %v3269
        %v3271 = vpop.f32.mrf.mxu0
        %3272 = vdwg.mxu0
        %3273 = vmatprep.subr.mxu0 0.0
        %3274 = vmatpush1.xpose.msra.mxu0 0.0
        %3275 = vmatprep.subr.mxu0 0.0
        %3276 = vmatpush1.xpose.msra.mxu0 0.0
        %3277 = vmatprep.subr.mxu0 0.0
        %3278 = vmatpush1.xpose.msra.mxu0 0.0
        %3279 = vmatprep.subr.mxu0 %v1174
        %3280 = vmatpush1.xpose.msra.mxu0 %v1173
        %3281 = vmatprep.subr.mxu0 %v1102
        %3282 = vmatpush1.xpose.msra.mxu0 %v1101
        %3283 = vmatprep.subr.mxu0 %v1030
        %3284 = vmatpush1.xpose.msra.mxu0 %v1029
        %3285 = vmatprep.subr.mxu0 %v958
        %3286 = vmatpush1.xpose.msra.mxu0 %v957
        %3287 = vmatprep.subr.mxu0 %v886
        %3288 = vmatpush1.xpose.msra.mxu0 %v885
        %3289 = vmatprep.subr.mxu0 %v814
        %3290 = vmatpush1.xpose.msra.mxu0 %v813
        %3291 = vmatprep.subr.mxu0 %v742
        %3292 = vmatpush1.xpose.msra.mxu0 %v741
        %3293 = vmatprep.subr.mxu0 %v670
        %3294 = vmatpush1.xpose.msra.mxu0 %v669
        %3295 = vmatprep.subr.mxu0 %v598
        %3296 = vmatpush1.xpose.msra.mxu0 %v597
        %3297 = vmatprep.subr.mxu0 %v526
        %3298 = vmatpush1.xpose.msra.mxu0 %v525
        %3299 = vmatprep.subr.mxu0 %v454
        %3300 = vmatpush1.xpose.msra.mxu0 %v453
        %3301 = vmatprep.subr.mxu0 %v382
        %3302 = vmatpush1.xpose.msra.mxu0 %v381
        %3303 = vmatprep.subr.mxu0 %v310
        %3304 = vmatpush1.xpose.msra.mxu0 %v309
        %3305 = vmatprep.subr.mxu0 0.0
        %3306 = vmatpush2.xpose.msra.mxu0 0.0
        %3307 = vmatprep.subr.mxu0 0.0
        %3308 = vmatpush2.xpose.msra.mxu0 0.0
        %3309 = vmatprep.subr.mxu0 0.0
        %3310 = vmatpush2.xpose.msra.mxu0 0.0
        %3311 = vmatprep.subr.mxu0 0.0
        %3312 = vmatpush2.xpose.msra.mxu0 0.0
        %3313 = vmatprep.subr.mxu0 0.0
        %3314 = vmatpush2.xpose.msra.mxu0 0.0
        %3315 = vmatprep.subr.mxu0 0.0
        %3316 = vmatpush2.xpose.msra.mxu0 0.0
        %3317 = vmatprep.subr.mxu0 0.0
        %3318 = vmatpush2.xpose.msra.mxu0 0.0
        %3319 = vmatprep.subr.mxu0 0.0
        %3320 = vmatpush2.xpose.msra.mxu0 0.0
        %3321 = vmatprep.subr.mxu0 0.0
        %3322 = vmatpush2.xpose.msra.mxu0 0.0
        %3323 = vmatprep.subr.mxu0 0.0
        %3324 = vmatpush2.xpose.msra.mxu0 0.0
        %3325 = vmatprep.subr.mxu0 0.0
        %3326 = vmatpush2.xpose.msra.mxu0 0.0
        %3327 = vmatprep.subr.mxu0 0.0
        %3328 = vmatpush2.xpose.msra.mxu0 0.0
        %3329 = vmatprep.subr.mxu0 0.0
        %3330 = vmatpush2.xpose.msra.mxu0 0.0
        %3331 = vmatprep.subr.mxu0 0.0
        %3332 = vmatpush2.xpose.msra.mxu0 0.0
        %3333 = vmatprep.subr.mxu0 0.0
        %3334 = vmatpush2.xpose.msra.mxu0 0.0
        %3335 = vmatprep.subr.mxu0 0.0
        %3336 = vmatpush2.xpose.msra.mxu0 0.0
        %3337 = vmatprep.mubr.f32.mxu0 %v1434
        %3338 = vmatmul.mubr.f32.gmra.mxu0 %v1426
        %v3339 = vpop.f32.mrf.mxu0
        %v3340 = vadd.f32 %v3270, %v3339
        %v3341 = vpop.f32.mrf.mxu0
        %3342 = vdwg.mxu0
        %3343 = vmatprep.subr.mxu0 0.0
        %3344 = vmatpush1.xpose.msra.mxu0 0.0
        %3345 = vmatprep.subr.mxu0 0.0
        %3346 = vmatpush1.xpose.msra.mxu0 0.0
        %3347 = vmatprep.subr.mxu0 0.0
        %3348 = vmatpush1.xpose.msra.mxu0 0.0
        %3349 = vmatprep.subr.mxu0 %v1176
        %3350 = vmatpush1.xpose.msra.mxu0 %v1175
        %3351 = vmatprep.subr.mxu0 %v1104
        %3352 = vmatpush1.xpose.msra.mxu0 %v1103
        %3353 = vmatprep.subr.mxu0 %v1032
        %3354 = vmatpush1.xpose.msra.mxu0 %v1031
        %3355 = vmatprep.subr.mxu0 %v960
        %3356 = vmatpush1.xpose.msra.mxu0 %v959
        %3357 = vmatprep.subr.mxu0 %v888
        %3358 = vmatpush1.xpose.msra.mxu0 %v887
        %3359 = vmatprep.subr.mxu0 %v816
        %3360 = vmatpush1.xpose.msra.mxu0 %v815
        %3361 = vmatprep.subr.mxu0 %v744
        %3362 = vmatpush1.xpose.msra.mxu0 %v743
        %3363 = vmatprep.subr.mxu0 %v672
        %3364 = vmatpush1.xpose.msra.mxu0 %v671
        %3365 = vmatprep.subr.mxu0 %v600
        %3366 = vmatpush1.xpose.msra.mxu0 %v599
        %3367 = vmatprep.subr.mxu0 %v528
        %3368 = vmatpush1.xpose.msra.mxu0 %v527
        %3369 = vmatprep.subr.mxu0 %v456
        %3370 = vmatpush1.xpose.msra.mxu0 %v455
        %3371 = vmatprep.subr.mxu0 %v384
        %3372 = vmatpush1.xpose.msra.mxu0 %v383
        %3373 = vmatprep.subr.mxu0 %v312
        %3374 = vmatpush1.xpose.msra.mxu0 %v311
        %3375 = vmatprep.subr.mxu0 0.0
        %3376 = vmatpush2.xpose.msra.mxu0 0.0
        %3377 = vmatprep.subr.mxu0 0.0
        %3378 = vmatpush2.xpose.msra.mxu0 0.0
        %3379 = vmatprep.subr.mxu0 0.0
        %3380 = vmatpush2.xpose.msra.mxu0 0.0
        %3381 = vmatprep.subr.mxu0 0.0
        %3382 = vmatpush2.xpose.msra.mxu0 0.0
        %3383 = vmatprep.subr.mxu0 0.0
        %3384 = vmatpush2.xpose.msra.mxu0 0.0
        %3385 = vmatprep.subr.mxu0 0.0
        %3386 = vmatpush2.xpose.msra.mxu0 0.0
        %3387 = vmatprep.subr.mxu0 0.0
        %3388 = vmatpush2.xpose.msra.mxu0 0.0
        %3389 = vmatprep.subr.mxu0 0.0
        %3390 = vmatpush2.xpose.msra.mxu0 0.0
        %3391 = vmatprep.subr.mxu0 0.0
        %3392 = vmatpush2.xpose.msra.mxu0 0.0
        %3393 = vmatprep.subr.mxu0 0.0
        %3394 = vmatpush2.xpose.msra.mxu0 0.0
        %3395 = vmatprep.subr.mxu0 0.0
        %3396 = vmatpush2.xpose.msra.mxu0 0.0
        %3397 = vmatprep.subr.mxu0 0.0
        %3398 = vmatpush2.xpose.msra.mxu0 0.0
        %3399 = vmatprep.subr.mxu0 0.0
        %3400 = vmatpush2.xpose.msra.mxu0 0.0
        %3401 = vmatprep.subr.mxu0 0.0
        %3402 = vmatpush2.xpose.msra.mxu0 0.0
        %3403 = vmatprep.subr.mxu0 0.0
        %3404 = vmatpush2.xpose.msra.mxu0 0.0
        %3405 = vmatprep.subr.mxu0 0.0
        %3406 = vmatpush2.xpose.msra.mxu0 0.0
        %3407 = vmatprep.mubr.f32.mxu0 %v1435
        %3408 = vmatmul.mubr.f32.gmra.mxu0 %v1433
        %v3409 = vpop.f32.mrf.mxu0
        %v3410 = vadd.f32 %v3340, %v3409
        %v3411 = vpop.f32.mrf.mxu0
        %3412 = vdwg.mxu0
        %3413 = vmatprep.subr.mxu0 0.0
        %3414 = vmatpush1.xpose.msra.mxu0 0.0
        %3415 = vmatprep.subr.mxu0 0.0
        %3416 = vmatpush1.xpose.msra.mxu0 0.0
        %3417 = vmatprep.subr.mxu0 0.0
        %3418 = vmatpush1.xpose.msra.mxu0 0.0
        %3419 = vmatprep.subr.mxu0 %v1178
        %3420 = vmatpush1.xpose.msra.mxu0 %v1177
        %3421 = vmatprep.subr.mxu0 %v1106
        %3422 = vmatpush1.xpose.msra.mxu0 %v1105
        %3423 = vmatprep.subr.mxu0 %v1034
        %3424 = vmatpush1.xpose.msra.mxu0 %v1033
        %3425 = vmatprep.subr.mxu0 %v962
        %3426 = vmatpush1.xpose.msra.mxu0 %v961
        %3427 = vmatprep.subr.mxu0 %v890
        %3428 = vmatpush1.xpose.msra.mxu0 %v889
        %3429 = vmatprep.subr.mxu0 %v818
        %3430 = vmatpush1.xpose.msra.mxu0 %v817
        %3431 = vmatprep.subr.mxu0 %v746
        %3432 = vmatpush1.xpose.msra.mxu0 %v745
        %3433 = vmatprep.subr.mxu0 %v674
        %3434 = vmatpush1.xpose.msra.mxu0 %v673
        %3435 = vmatprep.subr.mxu0 %v602
        %3436 = vmatpush1.xpose.msra.mxu0 %v601
        %3437 = vmatprep.subr.mxu0 %v530
        %3438 = vmatpush1.xpose.msra.mxu0 %v529
        %3439 = vmatprep.subr.mxu0 %v458
        %3440 = vmatpush1.xpose.msra.mxu0 %v457
        %3441 = vmatprep.subr.mxu0 %v386
        %3442 = vmatpush1.xpose.msra.mxu0 %v385
        %3443 = vmatprep.subr.mxu0 %v314
        %3444 = vmatpush1.xpose.msra.mxu0 %v313
        %3445 = vmatprep.subr.mxu0 0.0
        %3446 = vmatpush2.xpose.msra.mxu0 0.0
        %3447 = vmatprep.subr.mxu0 0.0
        %3448 = vmatpush2.xpose.msra.mxu0 0.0
        %3449 = vmatprep.subr.mxu0 0.0
        %3450 = vmatpush2.xpose.msra.mxu0 0.0
        %3451 = vmatprep.subr.mxu0 0.0
        %3452 = vmatpush2.xpose.msra.mxu0 0.0
        %3453 = vmatprep.subr.mxu0 0.0
        %3454 = vmatpush2.xpose.msra.mxu0 0.0
        %3455 = vmatprep.subr.mxu0 0.0
        %3456 = vmatpush2.xpose.msra.mxu0 0.0
        %3457 = vmatprep.subr.mxu0 0.0
        %3458 = vmatpush2.xpose.msra.mxu0 0.0
        %3459 = vmatprep.subr.mxu0 0.0
        %3460 = vmatpush2.xpose.msra.mxu0 0.0
        %3461 = vmatprep.subr.mxu0 0.0
        %3462 = vmatpush2.xpose.msra.mxu0 0.0
        %3463 = vmatprep.subr.mxu0 0.0
        %3464 = vmatpush2.xpose.msra.mxu0 0.0
        %3465 = vmatprep.subr.mxu0 0.0
        %3466 = vmatpush2.xpose.msra.mxu0 0.0
        %3467 = vmatprep.subr.mxu0 0.0
        %3468 = vmatpush2.xpose.msra.mxu0 0.0
        %3469 = vmatprep.subr.mxu0 0.0
        %3470 = vmatpush2.xpose.msra.mxu0 0.0
        %3471 = vmatprep.subr.mxu0 0.0
        %3472 = vmatpush2.xpose.msra.mxu0 0.0
        %3473 = vmatprep.subr.mxu0 0.0
        %3474 = vmatpush2.xpose.msra.mxu0 0.0
        %3475 = vmatprep.subr.mxu0 0.0
        %3476 = vmatpush2.xpose.msra.mxu0 0.0
        %3477 = vmatprep.mubr.f32.mxu0 %v1451
        %3478 = vmatmul.mubr.f32.gmra.mxu0 %v1443
        %v3479 = vpop.f32.mrf.mxu0
        %v3480 = vadd.f32 %v3410, %v3479
        %v3481 = vpop.f32.mrf.mxu0
        %3482 = vdwg.mxu0
        %3483 = vmatprep.subr.mxu0 0.0
        %3484 = vmatpush1.xpose.msra.mxu0 0.0
        %3485 = vmatprep.subr.mxu0 0.0
        %3486 = vmatpush1.xpose.msra.mxu0 0.0
        %3487 = vmatprep.subr.mxu0 0.0
        %3488 = vmatpush1.xpose.msra.mxu0 0.0
        %3489 = vmatprep.subr.mxu0 %v1180
        %3490 = vmatpush1.xpose.msra.mxu0 %v1179
        %3491 = vmatprep.subr.mxu0 %v1108
        %3492 = vmatpush1.xpose.msra.mxu0 %v1107
        %3493 = vmatprep.subr.mxu0 %v1036
        %3494 = vmatpush1.xpose.msra.mxu0 %v1035
        %3495 = vmatprep.subr.mxu0 %v964
        %3496 = vmatpush1.xpose.msra.mxu0 %v963
        %3497 = vmatprep.subr.mxu0 %v892
        %3498 = vmatpush1.xpose.msra.mxu0 %v891
        %3499 = vmatprep.subr.mxu0 %v820
        %3500 = vmatpush1.xpose.msra.mxu0 %v819
        %3501 = vmatprep.subr.mxu0 %v748
        %3502 = vmatpush1.xpose.msra.mxu0 %v747
        %3503 = vmatprep.subr.mxu0 %v676
        %3504 = vmatpush1.xpose.msra.mxu0 %v675
        %3505 = vmatprep.subr.mxu0 %v604
        %3506 = vmatpush1.xpose.msra.mxu0 %v603
        %3507 = vmatprep.subr.mxu0 %v532
        %3508 = vmatpush1.xpose.msra.mxu0 %v531
        %3509 = vmatprep.subr.mxu0 %v460
        %3510 = vmatpush1.xpose.msra.mxu0 %v459
        %3511 = vmatprep.subr.mxu0 %v388
        %3512 = vmatpush1.xpose.msra.mxu0 %v387
        %3513 = vmatprep.subr.mxu0 %v316
        %3514 = vmatpush1.xpose.msra.mxu0 %v315
        %3515 = vmatprep.subr.mxu0 0.0
        %3516 = vmatpush2.xpose.msra.mxu0 0.0
        %3517 = vmatprep.subr.mxu0 0.0
        %3518 = vmatpush2.xpose.msra.mxu0 0.0
        %3519 = vmatprep.subr.mxu0 0.0
        %3520 = vmatpush2.xpose.msra.mxu0 0.0
        %3521 = vmatprep.subr.mxu0 0.0
        %3522 = vmatpush2.xpose.msra.mxu0 0.0
        %3523 = vmatprep.subr.mxu0 0.0
        %3524 = vmatpush2.xpose.msra.mxu0 0.0
        %3525 = vmatprep.subr.mxu0 0.0
        %3526 = vmatpush2.xpose.msra.mxu0 0.0
        %3527 = vmatprep.subr.mxu0 0.0
        %3528 = vmatpush2.xpose.msra.mxu0 0.0
        %3529 = vmatprep.subr.mxu0 0.0
        %3530 = vmatpush2.xpose.msra.mxu0 0.0
        %3531 = vmatprep.subr.mxu0 0.0
        %3532 = vmatpush2.xpose.msra.mxu0 0.0
        %3533 = vmatprep.subr.mxu0 0.0
        %3534 = vmatpush2.xpose.msra.mxu0 0.0
        %3535 = vmatprep.subr.mxu0 0.0
        %3536 = vmatpush2.xpose.msra.mxu0 0.0
        %3537 = vmatprep.subr.mxu0 0.0
        %3538 = vmatpush2.xpose.msra.mxu0 0.0
        %3539 = vmatprep.subr.mxu0 0.0
        %3540 = vmatpush2.xpose.msra.mxu0 0.0
        %3541 = vmatprep.subr.mxu0 0.0
        %3542 = vmatpush2.xpose.msra.mxu0 0.0
        %3543 = vmatprep.subr.mxu0 0.0
        %3544 = vmatpush2.xpose.msra.mxu0 0.0
        %3545 = vmatprep.subr.mxu0 0.0
        %3546 = vmatpush2.xpose.msra.mxu0 0.0
        %3547 = vmatprep.mubr.f32.mxu0 %v1452
        %3548 = vmatmul.mubr.f32.gmra.mxu0 %v1450
        %v3549 = vpop.f32.mrf.mxu0
        %v3550 = vadd.f32 %v3480, %v3549
        %v3551 = vpop.f32.mrf.mxu0
        %3552 = vdwg.mxu0
        %3553 = vmatprep.subr.mxu0 0.0
        %3554 = vmatpush1.xpose.msra.mxu0 0.0
        %3555 = vmatprep.subr.mxu0 0.0
        %3556 = vmatpush1.xpose.msra.mxu0 0.0
        %3557 = vmatprep.subr.mxu0 0.0
        %3558 = vmatpush1.xpose.msra.mxu0 0.0
        %3559 = vmatprep.subr.mxu0 %v1182
        %3560 = vmatpush1.xpose.msra.mxu0 %v1181
        %3561 = vmatprep.subr.mxu0 %v1110
        %3562 = vmatpush1.xpose.msra.mxu0 %v1109
        %3563 = vmatprep.subr.mxu0 %v1038
        %3564 = vmatpush1.xpose.msra.mxu0 %v1037
        %3565 = vmatprep.subr.mxu0 %v966
        %3566 = vmatpush1.xpose.msra.mxu0 %v965
        %3567 = vmatprep.subr.mxu0 %v894
        %3568 = vmatpush1.xpose.msra.mxu0 %v893
        %3569 = vmatprep.subr.mxu0 %v822
        %3570 = vmatpush1.xpose.msra.mxu0 %v821
        %3571 = vmatprep.subr.mxu0 %v750
        %3572 = vmatpush1.xpose.msra.mxu0 %v749
        %3573 = vmatprep.subr.mxu0 %v678
        %3574 = vmatpush1.xpose.msra.mxu0 %v677
        %3575 = vmatprep.subr.mxu0 %v606
        %3576 = vmatpush1.xpose.msra.mxu0 %v605
        %3577 = vmatprep.subr.mxu0 %v534
        %3578 = vmatpush1.xpose.msra.mxu0 %v533
        %3579 = vmatprep.subr.mxu0 %v462
        %3580 = vmatpush1.xpose.msra.mxu0 %v461
        %3581 = vmatprep.subr.mxu0 %v390
        %3582 = vmatpush1.xpose.msra.mxu0 %v389
        %3583 = vmatprep.subr.mxu0 %v318
        %3584 = vmatpush1.xpose.msra.mxu0 %v317
        %3585 = vmatprep.subr.mxu0 0.0
        %3586 = vmatpush2.xpose.msra.mxu0 0.0
        %3587 = vmatprep.subr.mxu0 0.0
        %3588 = vmatpush2.xpose.msra.mxu0 0.0
        %3589 = vmatprep.subr.mxu0 0.0
        %3590 = vmatpush2.xpose.msra.mxu0 0.0
        %3591 = vmatprep.subr.mxu0 0.0
        %3592 = vmatpush2.xpose.msra.mxu0 0.0
        %3593 = vmatprep.subr.mxu0 0.0
        %3594 = vmatpush2.xpose.msra.mxu0 0.0
        %3595 = vmatprep.subr.mxu0 0.0
        %3596 = vmatpush2.xpose.msra.mxu0 0.0
        %3597 = vmatprep.subr.mxu0 0.0
        %3598 = vmatpush2.xpose.msra.mxu0 0.0
        %3599 = vmatprep.subr.mxu0 0.0
        %3600 = vmatpush2.xpose.msra.mxu0 0.0
        %3601 = vmatprep.subr.mxu0 0.0
        %3602 = vmatpush2.xpose.msra.mxu0 0.0
        %3603 = vmatprep.subr.mxu0 0.0
        %3604 = vmatpush2.xpose.msra.mxu0 0.0
        %3605 = vmatprep.subr.mxu0 0.0
        %3606 = vmatpush2.xpose.msra.mxu0 0.0
        %3607 = vmatprep.subr.mxu0 0.0
        %3608 = vmatpush2.xpose.msra.mxu0 0.0
        %3609 = vmatprep.subr.mxu0 0.0
        %3610 = vmatpush2.xpose.msra.mxu0 0.0
        %3611 = vmatprep.subr.mxu0 0.0
        %3612 = vmatpush2.xpose.msra.mxu0 0.0
        %3613 = vmatprep.subr.mxu0 0.0
        %3614 = vmatpush2.xpose.msra.mxu0 0.0
        %3615 = vmatprep.subr.mxu0 0.0
        %3616 = vmatpush2.xpose.msra.mxu0 0.0
        %3617 = vmatprep.mubr.f32.mxu0 %v1468
        %3618 = vmatmul.mubr.f32.gmra.mxu0 %v1460
        %v3619 = vpop.f32.mrf.mxu0
        %v3620 = vadd.f32 %v3550, %v3619
        %v3621 = vpop.f32.mrf.mxu0
        %3622 = vdwg.mxu0
        %3623 = vmatprep.subr.mxu0 0.0
        %3624 = vmatpush1.xpose.msra.mxu0 0.0
        %3625 = vmatprep.subr.mxu0 0.0
        %3626 = vmatpush1.xpose.msra.mxu0 0.0
        %3627 = vmatprep.subr.mxu0 0.0
        %3628 = vmatpush1.xpose.msra.mxu0 0.0
        %3629 = vmatprep.subr.mxu0 %v1184
        %3630 = vmatpush1.xpose.msra.mxu0 %v1183
        %3631 = vmatprep.subr.mxu0 %v1112
        %3632 = vmatpush1.xpose.msra.mxu0 %v1111
        %3633 = vmatprep.subr.mxu0 %v1040
        %3634 = vmatpush1.xpose.msra.mxu0 %v1039
        %3635 = vmatprep.subr.mxu0 %v968
        %3636 = vmatpush1.xpose.msra.mxu0 %v967
        %3637 = vmatprep.subr.mxu0 %v896
        %3638 = vmatpush1.xpose.msra.mxu0 %v895
        %3639 = vmatprep.subr.mxu0 %v824
        %3640 = vmatpush1.xpose.msra.mxu0 %v823
        %3641 = vmatprep.subr.mxu0 %v752
        %3642 = vmatpush1.xpose.msra.mxu0 %v751
        %3643 = vmatprep.subr.mxu0 %v680
        %3644 = vmatpush1.xpose.msra.mxu0 %v679
        %3645 = vmatprep.subr.mxu0 %v608
        %3646 = vmatpush1.xpose.msra.mxu0 %v607
        %3647 = vmatprep.subr.mxu0 %v536
        %3648 = vmatpush1.xpose.msra.mxu0 %v535
        %3649 = vmatprep.subr.mxu0 %v464
        %3650 = vmatpush1.xpose.msra.mxu0 %v463
        %3651 = vmatprep.subr.mxu0 %v392
        %3652 = vmatpush1.xpose.msra.mxu0 %v391
        %3653 = vmatprep.subr.mxu0 %v320
        %3654 = vmatpush1.xpose.msra.mxu0 %v319
        %3655 = vmatprep.subr.mxu0 0.0
        %3656 = vmatpush2.xpose.msra.mxu0 0.0
        %3657 = vmatprep.subr.mxu0 0.0
        %3658 = vmatpush2.xpose.msra.mxu0 0.0
        %3659 = vmatprep.subr.mxu0 0.0
        %3660 = vmatpush2.xpose.msra.mxu0 0.0
        %3661 = vmatprep.subr.mxu0 0.0
        %3662 = vmatpush2.xpose.msra.mxu0 0.0
        %3663 = vmatprep.subr.mxu0 0.0
        %3664 = vmatpush2.xpose.msra.mxu0 0.0
        %3665 = vmatprep.subr.mxu0 0.0
        %3666 = vmatpush2.xpose.msra.mxu0 0.0
        %3667 = vmatprep.subr.mxu0 0.0
        %3668 = vmatpush2.xpose.msra.mxu0 0.0
        %3669 = vmatprep.subr.mxu0 0.0
        %3670 = vmatpush2.xpose.msra.mxu0 0.0
        %3671 = vmatprep.subr.mxu0 0.0
        %3672 = vmatpush2.xpose.msra.mxu0 0.0
        %3673 = vmatprep.subr.mxu0 0.0
        %3674 = vmatpush2.xpose.msra.mxu0 0.0
        %3675 = vmatprep.subr.mxu0 0.0
        %3676 = vmatpush2.xpose.msra.mxu0 0.0
        %3677 = vmatprep.subr.mxu0 0.0
        %3678 = vmatpush2.xpose.msra.mxu0 0.0
        %3679 = vmatprep.subr.mxu0 0.0
        %3680 = vmatpush2.xpose.msra.mxu0 0.0
        %3681 = vmatprep.subr.mxu0 0.0
        %3682 = vmatpush2.xpose.msra.mxu0 0.0
        %3683 = vmatprep.subr.mxu0 0.0
        %3684 = vmatpush2.xpose.msra.mxu0 0.0
        %3685 = vmatprep.subr.mxu0 0.0
        %3686 = vmatpush2.xpose.msra.mxu0 0.0
        %3687 = vmatprep.mubr.f32.mxu0 %v1469
        %3688 = vmatmul.mubr.f32.gmra.mxu0 %v1467
        %v3689 = vpop.f32.mrf.mxu0
        %v3690 = vadd.f32 %v3620, %v3689
        %v3691 = vpop.f32.mrf.mxu0
        %3692 = vdwg.mxu0
        %3693 = vmatprep.subr.mxu0 0.0
        %3694 = vmatpush1.xpose.msra.mxu0 0.0
        %3695 = vmatprep.subr.mxu0 0.0
        %3696 = vmatpush1.xpose.msra.mxu0 0.0
        %3697 = vmatprep.subr.mxu0 0.0
        %3698 = vmatpush1.xpose.msra.mxu0 0.0
        %3699 = vmatprep.subr.mxu0 %v1186
        %3700 = vmatpush1.xpose.msra.mxu0 %v1185
        %3701 = vmatprep.subr.mxu0 %v1114
        %3702 = vmatpush1.xpose.msra.mxu0 %v1113
        %3703 = vmatprep.subr.mxu0 %v1042
        %3704 = vmatpush1.xpose.msra.mxu0 %v1041
        %3705 = vmatprep.subr.mxu0 %v970
        %3706 = vmatpush1.xpose.msra.mxu0 %v969
        %3707 = vmatprep.subr.mxu0 %v898
        %3708 = vmatpush1.xpose.msra.mxu0 %v897
        %3709 = vmatprep.subr.mxu0 %v826
        %3710 = vmatpush1.xpose.msra.mxu0 %v825
        %3711 = vmatprep.subr.mxu0 %v754
        %3712 = vmatpush1.xpose.msra.mxu0 %v753
        %3713 = vmatprep.subr.mxu0 %v682
        %3714 = vmatpush1.xpose.msra.mxu0 %v681
        %3715 = vmatprep.subr.mxu0 %v610
        %3716 = vmatpush1.xpose.msra.mxu0 %v609
        %3717 = vmatprep.subr.mxu0 %v538
        %3718 = vmatpush1.xpose.msra.mxu0 %v537
        %3719 = vmatprep.subr.mxu0 %v466
        %3720 = vmatpush1.xpose.msra.mxu0 %v465
        %3721 = vmatprep.subr.mxu0 %v394
        %3722 = vmatpush1.xpose.msra.mxu0 %v393
        %3723 = vmatprep.subr.mxu0 %v322
        %3724 = vmatpush1.xpose.msra.mxu0 %v321
        %3725 = vmatprep.subr.mxu0 0.0
        %3726 = vmatpush2.xpose.msra.mxu0 0.0
        %3727 = vmatprep.subr.mxu0 0.0
        %3728 = vmatpush2.xpose.msra.mxu0 0.0
        %3729 = vmatprep.subr.mxu0 0.0
        %3730 = vmatpush2.xpose.msra.mxu0 0.0
        %3731 = vmatprep.subr.mxu0 0.0
        %3732 = vmatpush2.xpose.msra.mxu0 0.0
        %3733 = vmatprep.subr.mxu0 0.0
        %3734 = vmatpush2.xpose.msra.mxu0 0.0
        %3735 = vmatprep.subr.mxu0 0.0
        %3736 = vmatpush2.xpose.msra.mxu0 0.0
        %3737 = vmatprep.subr.mxu0 0.0
        %3738 = vmatpush2.xpose.msra.mxu0 0.0
        %3739 = vmatprep.subr.mxu0 0.0
        %3740 = vmatpush2.xpose.msra.mxu0 0.0
        %3741 = vmatprep.subr.mxu0 0.0
        %3742 = vmatpush2.xpose.msra.mxu0 0.0
        %3743 = vmatprep.subr.mxu0 0.0
        %3744 = vmatpush2.xpose.msra.mxu0 0.0
        %3745 = vmatprep.subr.mxu0 0.0
        %3746 = vmatpush2.xpose.msra.mxu0 0.0
        %3747 = vmatprep.subr.mxu0 0.0
        %3748 = vmatpush2.xpose.msra.mxu0 0.0
        %3749 = vmatprep.subr.mxu0 0.0
        %3750 = vmatpush2.xpose.msra.mxu0 0.0
        %3751 = vmatprep.subr.mxu0 0.0
        %3752 = vmatpush2.xpose.msra.mxu0 0.0
        %3753 = vmatprep.subr.mxu0 0.0
        %3754 = vmatpush2.xpose.msra.mxu0 0.0
        %3755 = vmatprep.subr.mxu0 0.0
        %3756 = vmatpush2.xpose.msra.mxu0 0.0
        %3757 = vmatprep.mubr.f32.mxu0 %v1485
        %3758 = vmatmul.mubr.f32.gmra.mxu0 %v1477
        %v3759 = vpop.f32.mrf.mxu0
        %v3760 = vadd.f32 %v3690, %v3759
        %v3761 = vpop.f32.mrf.mxu0
        %3762 = vdwg.mxu0
        %3763 = vmatprep.subr.mxu0 0.0
        %3764 = vmatpush1.xpose.msra.mxu0 0.0
        %3765 = vmatprep.subr.mxu0 0.0
        %3766 = vmatpush1.xpose.msra.mxu0 0.0
        %3767 = vmatprep.subr.mxu0 0.0
        %3768 = vmatpush1.xpose.msra.mxu0 0.0
        %3769 = vmatprep.subr.mxu0 %v1188
        %3770 = vmatpush1.xpose.msra.mxu0 %v1187
        %3771 = vmatprep.subr.mxu0 %v1116
        %3772 = vmatpush1.xpose.msra.mxu0 %v1115
        %3773 = vmatprep.subr.mxu0 %v1044
        %3774 = vmatpush1.xpose.msra.mxu0 %v1043
        %3775 = vmatprep.subr.mxu0 %v972
        %3776 = vmatpush1.xpose.msra.mxu0 %v971
        %3777 = vmatprep.subr.mxu0 %v900
        %3778 = vmatpush1.xpose.msra.mxu0 %v899
        %3779 = vmatprep.subr.mxu0 %v828
        %3780 = vmatpush1.xpose.msra.mxu0 %v827
        %3781 = vmatprep.subr.mxu0 %v756
        %3782 = vmatpush1.xpose.msra.mxu0 %v755
        %3783 = vmatprep.subr.mxu0 %v684
        %3784 = vmatpush1.xpose.msra.mxu0 %v683
        %3785 = vmatprep.subr.mxu0 %v612
        %3786 = vmatpush1.xpose.msra.mxu0 %v611
        %3787 = vmatprep.subr.mxu0 %v540
        %3788 = vmatpush1.xpose.msra.mxu0 %v539
        %3789 = vmatprep.subr.mxu0 %v468
        %3790 = vmatpush1.xpose.msra.mxu0 %v467
        %3791 = vmatprep.subr.mxu0 %v396
        %3792 = vmatpush1.xpose.msra.mxu0 %v395
        %3793 = vmatprep.subr.mxu0 %v324
        %3794 = vmatpush1.xpose.msra.mxu0 %v323
        %3795 = vmatprep.subr.mxu0 0.0
        %3796 = vmatpush2.xpose.msra.mxu0 0.0
        %3797 = vmatprep.subr.mxu0 0.0
        %3798 = vmatpush2.xpose.msra.mxu0 0.0
        %3799 = vmatprep.subr.mxu0 0.0
        %3800 = vmatpush2.xpose.msra.mxu0 0.0
        %3801 = vmatprep.subr.mxu0 0.0
        %3802 = vmatpush2.xpose.msra.mxu0 0.0
        %3803 = vmatprep.subr.mxu0 0.0
        %3804 = vmatpush2.xpose.msra.mxu0 0.0
        %3805 = vmatprep.subr.mxu0 0.0
        %3806 = vmatpush2.xpose.msra.mxu0 0.0
        %3807 = vmatprep.subr.mxu0 0.0
        %3808 = vmatpush2.xpose.msra.mxu0 0.0
        %3809 = vmatprep.subr.mxu0 0.0
        %3810 = vmatpush2.xpose.msra.mxu0 0.0
        %3811 = vmatprep.subr.mxu0 0.0
        %3812 = vmatpush2.xpose.msra.mxu0 0.0
        %3813 = vmatprep.subr.mxu0 0.0
        %3814 = vmatpush2.xpose.msra.mxu0 0.0
        %3815 = vmatprep.subr.mxu0 0.0
        %3816 = vmatpush2.xpose.msra.mxu0 0.0
        %3817 = vmatprep.subr.mxu0 0.0
        %3818 = vmatpush2.xpose.msra.mxu0 0.0
        %3819 = vmatprep.subr.mxu0 0.0
        %3820 = vmatpush2.xpose.msra.mxu0 0.0
        %3821 = vmatprep.subr.mxu0 0.0
        %3822 = vmatpush2.xpose.msra.mxu0 0.0
        %3823 = vmatprep.subr.mxu0 0.0
        %3824 = vmatpush2.xpose.msra.mxu0 0.0
        %3825 = vmatprep.subr.mxu0 0.0
        %3826 = vmatpush2.xpose.msra.mxu0 0.0
        %3827 = vmatprep.mubr.f32.mxu0 %v1486
        %3828 = vmatmul.mubr.f32.gmra.mxu0 %v1484
        %v3829 = vpop.f32.mrf.mxu0
        %v3830 = vadd.f32 %v3760, %v3829
        %v3831 = vpop.f32.mrf.mxu0
        %3832 = vdwg.mxu0
        %3833 = vmatprep.subr.mxu0 0.0
        %3834 = vmatpush1.xpose.msra.mxu0 0.0
        %3835 = vmatprep.subr.mxu0 0.0
        %3836 = vmatpush1.xpose.msra.mxu0 0.0
        %3837 = vmatprep.subr.mxu0 0.0
        %3838 = vmatpush1.xpose.msra.mxu0 0.0
        %3839 = vmatprep.subr.mxu0 %v1190
        %3840 = vmatpush1.xpose.msra.mxu0 %v1189
        %3841 = vmatprep.subr.mxu0 %v1118
        %3842 = vmatpush1.xpose.msra.mxu0 %v1117
        %3843 = vmatprep.subr.mxu0 %v1046
        %3844 = vmatpush1.xpose.msra.mxu0 %v1045
        %3845 = vmatprep.subr.mxu0 %v974
        %3846 = vmatpush1.xpose.msra.mxu0 %v973
        %3847 = vmatprep.subr.mxu0 %v902
        %3848 = vmatpush1.xpose.msra.mxu0 %v901
        %3849 = vmatprep.subr.mxu0 %v830
        %3850 = vmatpush1.xpose.msra.mxu0 %v829
        %3851 = vmatprep.subr.mxu0 %v758
        %3852 = vmatpush1.xpose.msra.mxu0 %v757
        %3853 = vmatprep.subr.mxu0 %v686
        %3854 = vmatpush1.xpose.msra.mxu0 %v685
        %3855 = vmatprep.subr.mxu0 %v614
        %3856 = vmatpush1.xpose.msra.mxu0 %v613
        %3857 = vmatprep.subr.mxu0 %v542
        %3858 = vmatpush1.xpose.msra.mxu0 %v541
        %3859 = vmatprep.subr.mxu0 %v470
        %3860 = vmatpush1.xpose.msra.mxu0 %v469
        %3861 = vmatprep.subr.mxu0 %v398
        %3862 = vmatpush1.xpose.msra.mxu0 %v397
        %3863 = vmatprep.subr.mxu0 %v326
        %3864 = vmatpush1.xpose.msra.mxu0 %v325
        %3865 = vmatprep.subr.mxu0 0.0
        %3866 = vmatpush2.xpose.msra.mxu0 0.0
        %3867 = vmatprep.subr.mxu0 0.0
        %3868 = vmatpush2.xpose.msra.mxu0 0.0
        %3869 = vmatprep.subr.mxu0 0.0
        %3870 = vmatpush2.xpose.msra.mxu0 0.0
        %3871 = vmatprep.subr.mxu0 0.0
        %3872 = vmatpush2.xpose.msra.mxu0 0.0
        %3873 = vmatprep.subr.mxu0 0.0
        %3874 = vmatpush2.xpose.msra.mxu0 0.0
        %3875 = vmatprep.subr.mxu0 0.0
        %3876 = vmatpush2.xpose.msra.mxu0 0.0
        %3877 = vmatprep.subr.mxu0 0.0
        %3878 = vmatpush2.xpose.msra.mxu0 0.0
        %3879 = vmatprep.subr.mxu0 0.0
        %3880 = vmatpush2.xpose.msra.mxu0 0.0
        %3881 = vmatprep.subr.mxu0 0.0
        %3882 = vmatpush2.xpose.msra.mxu0 0.0
        %3883 = vmatprep.subr.mxu0 0.0
        %3884 = vmatpush2.xpose.msra.mxu0 0.0
        %3885 = vmatprep.subr.mxu0 0.0
        %3886 = vmatpush2.xpose.msra.mxu0 0.0
        %3887 = vmatprep.subr.mxu0 0.0
        %3888 = vmatpush2.xpose.msra.mxu0 0.0
        %3889 = vmatprep.subr.mxu0 0.0
        %3890 = vmatpush2.xpose.msra.mxu0 0.0
        %3891 = vmatprep.subr.mxu0 0.0
        %3892 = vmatpush2.xpose.msra.mxu0 0.0
        %3893 = vmatprep.subr.mxu0 0.0
        %3894 = vmatpush2.xpose.msra.mxu0 0.0
        %3895 = vmatprep.subr.mxu0 0.0
        %3896 = vmatpush2.xpose.msra.mxu0 0.0
        %3897 = vmatprep.mubr.f32.mxu0 %v1502
        %3898 = vmatmul.mubr.f32.gmra.mxu0 %v1494
        %v3899 = vpop.f32.mrf.mxu0
        %v3900 = vadd.f32 %v3830, %v3899
        %v3901 = vpop.f32.mrf.mxu0
        %3902 = vdwg.mxu0
        %3903 = vmatprep.subr.mxu0 0.0
        %3904 = vmatpush1.xpose.msra.mxu0 0.0
        %3905 = vmatprep.subr.mxu0 0.0
        %3906 = vmatpush1.xpose.msra.mxu0 0.0
        %3907 = vmatprep.subr.mxu0 0.0
        %3908 = vmatpush1.xpose.msra.mxu0 0.0
        %3909 = vmatprep.subr.mxu0 %v1192
        %3910 = vmatpush1.xpose.msra.mxu0 %v1191
        %3911 = vmatprep.subr.mxu0 %v1120
        %3912 = vmatpush1.xpose.msra.mxu0 %v1119
        %3913 = vmatprep.subr.mxu0 %v1048
        %3914 = vmatpush1.xpose.msra.mxu0 %v1047
        %3915 = vmatprep.subr.mxu0 %v976
        %3916 = vmatpush1.xpose.msra.mxu0 %v975
        %3917 = vmatprep.subr.mxu0 %v904
        %3918 = vmatpush1.xpose.msra.mxu0 %v903
        %3919 = vmatprep.subr.mxu0 %v832
        %3920 = vmatpush1.xpose.msra.mxu0 %v831
        %3921 = vmatprep.subr.mxu0 %v760
        %3922 = vmatpush1.xpose.msra.mxu0 %v759
        %3923 = vmatprep.subr.mxu0 %v688
        %3924 = vmatpush1.xpose.msra.mxu0 %v687
        %3925 = vmatprep.subr.mxu0 %v616
        %3926 = vmatpush1.xpose.msra.mxu0 %v615
        %3927 = vmatprep.subr.mxu0 %v544
        %3928 = vmatpush1.xpose.msra.mxu0 %v543
        %3929 = vmatprep.subr.mxu0 %v472
        %3930 = vmatpush1.xpose.msra.mxu0 %v471
        %3931 = vmatprep.subr.mxu0 %v400
        %3932 = vmatpush1.xpose.msra.mxu0 %v399
        %3933 = vmatprep.subr.mxu0 %v328
        %3934 = vmatpush1.xpose.msra.mxu0 %v327
        %3935 = vmatprep.subr.mxu0 0.0
        %3936 = vmatpush2.xpose.msra.mxu0 0.0
        %3937 = vmatprep.subr.mxu0 0.0
        %3938 = vmatpush2.xpose.msra.mxu0 0.0
        %3939 = vmatprep.subr.mxu0 0.0
        %3940 = vmatpush2.xpose.msra.mxu0 0.0
        %3941 = vmatprep.subr.mxu0 0.0
        %3942 = vmatpush2.xpose.msra.mxu0 0.0
        %3943 = vmatprep.subr.mxu0 0.0
        %3944 = vmatpush2.xpose.msra.mxu0 0.0
        %3945 = vmatprep.subr.mxu0 0.0
        %3946 = vmatpush2.xpose.msra.mxu0 0.0
        %3947 = vmatprep.subr.mxu0 0.0
        %3948 = vmatpush2.xpose.msra.mxu0 0.0
        %3949 = vmatprep.subr.mxu0 0.0
        %3950 = vmatpush2.xpose.msra.mxu0 0.0
        %3951 = vmatprep.subr.mxu0 0.0
        %3952 = vmatpush2.xpose.msra.mxu0 0.0
        %3953 = vmatprep.subr.mxu0 0.0
        %3954 = vmatpush2.xpose.msra.mxu0 0.0
        %3955 = vmatprep.subr.mxu0 0.0
        %3956 = vmatpush2.xpose.msra.mxu0 0.0
        %3957 = vmatprep.subr.mxu0 0.0
        %3958 = vmatpush2.xpose.msra.mxu0 0.0
        %3959 = vmatprep.subr.mxu0 0.0
        %3960 = vmatpush2.xpose.msra.mxu0 0.0
        %3961 = vmatprep.subr.mxu0 0.0
        %3962 = vmatpush2.xpose.msra.mxu0 0.0
        %3963 = vmatprep.subr.mxu0 0.0
        %3964 = vmatpush2.xpose.msra.mxu0 0.0
        %3965 = vmatprep.subr.mxu0 0.0
        %3966 = vmatpush2.xpose.msra.mxu0 0.0
        %3967 = vmatprep.mubr.f32.mxu0 %v1503
        %3968 = vmatmul.mubr.f32.gmra.mxu0 %v1501
        %v3969 = vpop.f32.mrf.mxu0
        %v3970 = vadd.f32 %v3900, %v3969
        %v3971 = vpop.f32.mrf.mxu0
        %3972 = vdwg.mxu0
        %3973 = vmatprep.subr.mxu0 0.0
        %3974 = vmatpush1.xpose.msra.mxu0 0.0
        %3975 = vmatprep.subr.mxu0 0.0
        %3976 = vmatpush1.xpose.msra.mxu0 0.0
        %3977 = vmatprep.subr.mxu0 0.0
        %3978 = vmatpush1.xpose.msra.mxu0 0.0
        %3979 = vmatprep.subr.mxu0 %v1194
        %3980 = vmatpush1.xpose.msra.mxu0 %v1193
        %3981 = vmatprep.subr.mxu0 %v1122
        %3982 = vmatpush1.xpose.msra.mxu0 %v1121
        %3983 = vmatprep.subr.mxu0 %v1050
        %3984 = vmatpush1.xpose.msra.mxu0 %v1049
        %3985 = vmatprep.subr.mxu0 %v978
        %3986 = vmatpush1.xpose.msra.mxu0 %v977
        %3987 = vmatprep.subr.mxu0 %v906
        %3988 = vmatpush1.xpose.msra.mxu0 %v905
        %3989 = vmatprep.subr.mxu0 %v834
        %3990 = vmatpush1.xpose.msra.mxu0 %v833
        %3991 = vmatprep.subr.mxu0 %v762
        %3992 = vmatpush1.xpose.msra.mxu0 %v761
        %3993 = vmatprep.subr.mxu0 %v690
        %3994 = vmatpush1.xpose.msra.mxu0 %v689
        %3995 = vmatprep.subr.mxu0 %v618
        %3996 = vmatpush1.xpose.msra.mxu0 %v617
        %3997 = vmatprep.subr.mxu0 %v546
        %3998 = vmatpush1.xpose.msra.mxu0 %v545
        %3999 = vmatprep.subr.mxu0 %v474
        %4000 = vmatpush1.xpose.msra.mxu0 %v473
        %4001 = vmatprep.subr.mxu0 %v402
        %4002 = vmatpush1.xpose.msra.mxu0 %v401
        %4003 = vmatprep.subr.mxu0 %v330
        %4004 = vmatpush1.xpose.msra.mxu0 %v329
        %4005 = vmatprep.subr.mxu0 0.0
        %4006 = vmatpush2.xpose.msra.mxu0 0.0
        %4007 = vmatprep.subr.mxu0 0.0
        %4008 = vmatpush2.xpose.msra.mxu0 0.0
        %4009 = vmatprep.subr.mxu0 0.0
        %4010 = vmatpush2.xpose.msra.mxu0 0.0
        %4011 = vmatprep.subr.mxu0 0.0
        %4012 = vmatpush2.xpose.msra.mxu0 0.0
        %4013 = vmatprep.subr.mxu0 0.0
        %4014 = vmatpush2.xpose.msra.mxu0 0.0
        %4015 = vmatprep.subr.mxu0 0.0
        %4016 = vmatpush2.xpose.msra.mxu0 0.0
        %4017 = vmatprep.subr.mxu0 0.0
        %4018 = vmatpush2.xpose.msra.mxu0 0.0
        %4019 = vmatprep.subr.mxu0 0.0
        %4020 = vmatpush2.xpose.msra.mxu0 0.0
        %4021 = vmatprep.subr.mxu0 0.0
        %4022 = vmatpush2.xpose.msra.mxu0 0.0
        %4023 = vmatprep.subr.mxu0 0.0
        %4024 = vmatpush2.xpose.msra.mxu0 0.0
        %4025 = vmatprep.subr.mxu0 0.0
        %4026 = vmatpush2.xpose.msra.mxu0 0.0
        %4027 = vmatprep.subr.mxu0 0.0
        %4028 = vmatpush2.xpose.msra.mxu0 0.0
        %4029 = vmatprep.subr.mxu0 0.0
        %4030 = vmatpush2.xpose.msra.mxu0 0.0
        %4031 = vmatprep.subr.mxu0 0.0
        %4032 = vmatpush2.xpose.msra.mxu0 0.0
        %4033 = vmatprep.subr.mxu0 0.0
        %4034 = vmatpush2.xpose.msra.mxu0 0.0
        %4035 = vmatprep.subr.mxu0 0.0
        %4036 = vmatpush2.xpose.msra.mxu0 0.0
        %4037 = vmatprep.mubr.f32.mxu0 %v1519
        %4038 = vmatmul.mubr.f32.gmra.mxu0 %v1511
        %v4039 = vpop.f32.mrf.mxu0
        %v4040 = vadd.f32 %v3970, %v4039
        %v4041 = vpop.f32.mrf.mxu0
        %4042 = vdwg.mxu0
        %4043 = vmatprep.subr.mxu0 0.0
        %4044 = vmatpush1.xpose.msra.mxu0 0.0
        %4045 = vmatprep.subr.mxu0 0.0
        %4046 = vmatpush1.xpose.msra.mxu0 0.0
        %4047 = vmatprep.subr.mxu0 0.0
        %4048 = vmatpush1.xpose.msra.mxu0 0.0
        %4049 = vmatprep.subr.mxu0 %v1196
        %4050 = vmatpush1.xpose.msra.mxu0 %v1195
        %4051 = vmatprep.subr.mxu0 %v1124
        %4052 = vmatpush1.xpose.msra.mxu0 %v1123
        %4053 = vmatprep.subr.mxu0 %v1052
        %4054 = vmatpush1.xpose.msra.mxu0 %v1051
        %4055 = vmatprep.subr.mxu0 %v980
        %4056 = vmatpush1.xpose.msra.mxu0 %v979
        %4057 = vmatprep.subr.mxu0 %v908
        %4058 = vmatpush1.xpose.msra.mxu0 %v907
        %4059 = vmatprep.subr.mxu0 %v836
        %4060 = vmatpush1.xpose.msra.mxu0 %v835
        %4061 = vmatprep.subr.mxu0 %v764
        %4062 = vmatpush1.xpose.msra.mxu0 %v763
        %4063 = vmatprep.subr.mxu0 %v692
        %4064 = vmatpush1.xpose.msra.mxu0 %v691
        %4065 = vmatprep.subr.mxu0 %v620
        %4066 = vmatpush1.xpose.msra.mxu0 %v619
        %4067 = vmatprep.subr.mxu0 %v548
        %4068 = vmatpush1.xpose.msra.mxu0 %v547
        %4069 = vmatprep.subr.mxu0 %v476
        %4070 = vmatpush1.xpose.msra.mxu0 %v475
        %4071 = vmatprep.subr.mxu0 %v404
        %4072 = vmatpush1.xpose.msra.mxu0 %v403
        %4073 = vmatprep.subr.mxu0 %v332
        %4074 = vmatpush1.xpose.msra.mxu0 %v331
        %4075 = vmatprep.subr.mxu0 0.0
        %4076 = vmatpush2.xpose.msra.mxu0 0.0
        %4077 = vmatprep.subr.mxu0 0.0
        %4078 = vmatpush2.xpose.msra.mxu0 0.0
        %4079 = vmatprep.subr.mxu0 0.0
        %4080 = vmatpush2.xpose.msra.mxu0 0.0
        %4081 = vmatprep.subr.mxu0 0.0
        %4082 = vmatpush2.xpose.msra.mxu0 0.0
        %4083 = vmatprep.subr.mxu0 0.0
        %4084 = vmatpush2.xpose.msra.mxu0 0.0
        %4085 = vmatprep.subr.mxu0 0.0
        %4086 = vmatpush2.xpose.msra.mxu0 0.0
        %4087 = vmatprep.subr.mxu0 0.0
        %4088 = vmatpush2.xpose.msra.mxu0 0.0
        %4089 = vmatprep.subr.mxu0 0.0
        %4090 = vmatpush2.xpose.msra.mxu0 0.0
        %4091 = vmatprep.subr.mxu0 0.0
        %4092 = vmatpush2.xpose.msra.mxu0 0.0
        %4093 = vmatprep.subr.mxu0 0.0
        %4094 = vmatpush2.xpose.msra.mxu0 0.0
        %4095 = vmatprep.subr.mxu0 0.0
        %4096 = vmatpush2.xpose.msra.mxu0 0.0
        %4097 = vmatprep.subr.mxu0 0.0
        %4098 = vmatpush2.xpose.msra.mxu0 0.0
        %4099 = vmatprep.subr.mxu0 0.0
        %4100 = vmatpush2.xpose.msra.mxu0 0.0
        %4101 = vmatprep.subr.mxu0 0.0
        %4102 = vmatpush2.xpose.msra.mxu0 0.0
        %4103 = vmatprep.subr.mxu0 0.0
        %4104 = vmatpush2.xpose.msra.mxu0 0.0
        %4105 = vmatprep.subr.mxu0 0.0
        %4106 = vmatpush2.xpose.msra.mxu0 0.0
        %4107 = vmatprep.mubr.f32.mxu0 %v1520
        %4108 = vmatmul.mubr.f32.gmra.mxu0 %v1518
        %v4109 = vpop.f32.mrf.mxu0
        %v4110 = vadd.f32 %v4040, %v4109
        %v4111 = vpop.f32.mrf.mxu0
        %4112 = vdwg.mxu0
        %v4113 = vadd.f32 %v242, %v4110
        %vm4114 = vcmask 812032
        %4115 = vst.msk [vmem:[#allocation8] sm:$0x3] %vm4114, %v4113
        // Predicated region
        $region49: #{tpu_custom_call.1} parent=31 // pred_check
          %p4116 = pneg %p107
        $region50: #{tpu_custom_call.1} parent=31 // pred_check_branch
          %4118 = sbr.rel (%p4116) target = $region52
        $region51: #{tpu_custom_call.1} parent=31 // pred_region
          %s4120 = ssub.s32 32, 32
          %4121 = vsyncadd [#allocation4], %s4120
          %s4123 = sshll.u32 [#allocation8], 4
          %s4124 = int_to_ptr.vmem [resolvable:$true] %s4123
          %4126 = dma.vmem_to_hbm [thread:$0]  %s4124, 32, %s3, [#allocation4]
        $region52: #{tpu_custom_call.1} parent=31 // pred_fallthru
          _
        // Predicated region
        $region53: #{tpu_custom_call.1} parent=31 // pred_check
          %p4127 = pneg %p107
        $region54: #{tpu_custom_call.1} parent=31 // pred_check_branch
          %4129 = sbr.rel (%p4127) target = $region56
        $region55: #{tpu_custom_call.1} parent=31 // pred_region
          %4130 = dma.done [#allocation4], 32
        $region56: #{tpu_custom_call.1} parent=31 // pred_fallthru
          _
      $region32: #{tpu_custom_call.1} parent=5 // pred_fallthru
        _
      %p4131 = scmp.le.s32.totalorder 2, %s16
      // Predicated region
      $region57: #{tpu_custom_call.1} parent=5 // pred_check
        %p4132 = pneg %p4131
      $region58: #{tpu_custom_call.1} parent=5 // pred_check_branch
        %4134 = sbr.rel (%p4132) target = $region60
      $region59: #{tpu_custom_call.1} parent=5 // pred_region
        %s4135 = ssub.s32 %s16, 2
      $region60: #{tpu_custom_call.1} parent=5 // pred_fallthru
        _
    $region6: #{tpu_custom_call.1} parent=1 // loop_footer
      %s20 = sadd.s32 1, %s16
    $region7: #{tpu_custom_call.1} parent=1 // loop_footer_branch
      %15 = sbr.rel target = $region3
    $region8: #{tpu_custom_call.1} parent=1 // loop_exit
      _
    %4136 = vsyncpa [#allocation3], 1
    %s4137 = scalar_lea.sflag [#allocation3], 1
    %4138 = vsyncpa %s4137, 1
    %4139 = vsyncpa [#allocation6], 1
    %s4140 = scalar_lea.sflag [#allocation6], 1
    %4141 = vsyncpa %s4140, 1
    %4142 = vsyncpa [#allocation4], 1
    %s4143 = scalar_lea.sflag [#allocation4], 1
    %4144 = vsyncpa %s4143, 1

</llo_original>
